<compile_context>
chip_gen: v7x
topology: tpu7x:2x2x1
jax: 0.10.0
libtpu: 0.0.40
codegen_flags: <defaults>
</compile_context>

<pallas_src>
import functools

import jax
import jax.numpy as jnp
from jax.experimental import pallas as pl
from jax.experimental.pallas import tpu as pltpu


# ----------------------------- Pallas kernel --------------------------------

def _make_kernel(TB, F, B, D, num_tiles):
    """Build the fused AAE step kernel (closes over static tile / size constants)."""
    inv_bd = 1.0 / float(B * D)   # MSE denominator (valid elements only)
    inv_b = 1.0 / float(B)        # BCE denominator (valid rows only)

    def kernel(x_ref, noise_ref, w_ref, b_ref,        # inputs
               xrec_ref, z_ref, loss_ref,             # outputs
               acc_ref):                              # SMEM scratch (4,) f32
        f32 = jnp.float32
        i = pl.program_id(0)

        @pl.when(i == 0)
        def _init():
            acc_ref[0] = jnp.float32(0.0)
            acc_ref[1] = jnp.float32(0.0)
            acc_ref[2] = jnp.float32(0.0)
            acc_ref[3] = jnp.float32(0.0)

        x = x_ref[...]          # (TB, F), first D lanes valid, rest zero
        noise = noise_ref[...]  # (TB, F), first `latent` lanes valid, rest zero

        # Packed, zero-padded weights (all (F, F)); padding keeps padded lanes exactly 0.
        Ww, We1, We2 = w_ref[0], w_ref[1], w_ref[2]
        Wd1, Wd2, Wu, Wq1 = w_ref[3], w_ref[4], w_ref[5], w_ref[6]
        be1 = b_ref[0:1, :]
        be2 = b_ref[1:2, :]
        bd1 = b_ref[2:3, :]
        bd2 = b_ref[3:4, :]
        bq1 = b_ref[4:5, :]
        wq2 = b_ref[5:6, :]      # final disc weight as a lane row-vector
        bq2 = b_ref[6:7, 0:1]    # final disc bias scalar

        # --- PCA whitening + generator (encoder / decoder) + un-whitening ---
        xw = jnp.dot(x, Ww, preferred_element_type=f32)
        h1 = jnp.tanh(jnp.dot(xw, We1, preferred_element_type=f32) + be1)
        z = jnp.dot(h1, We2, preferred_element_type=f32) + be2
        h2 = jnp.tanh(jnp.dot(z, Wd1, preferred_element_type=f32) + bd1)
        xhat = jnp.dot(h2, Wd2, preferred_element_type=f32) + bd2
        xrec = jnp.dot(xhat, Wu, preferred_element_type=f32)

        xrec_ref[...] = xrec     # lane-dense (TB, 128) store
        z_ref[...] = z

        # --- reconstruction loss (un-whitened, whitened_loss=False path) ---
        # padded lanes of x and xrec are both zero -> contribute 0 to the sum
        sse = jnp.sum((x - xrec) ** 2)

        # --- fused discriminator: one pass over [noise; z] along the batch axis ---
        dv = jnp.concatenate([noise, z], axis=0)                        # (2*TB, F)
        hq = jnp.tanh(jnp.dot(dv, Wq1, preferred_element_type=f32) + bq1)
        # degenerate (dh, 1) matmul replaced by VPU multiply + lane reduce
        logits = jnp.sum(hq * wq2, axis=-1, keepdims=True) + bq2        # (2*TB, 1)
        logits_real = logits[:TB]    # discriminator(noise)
        logits_fake = logits[TB:]    # discriminator(z)

        # BCE(sigmoid(l), 1) = softplus(-l);  BCE(sigmoid(l), 0) = softplus(l)
        sp_real_1 = jnp.sum(jax.nn.softplus(-logits_real))
        sp_fake_0 = jnp.sum(jax.nn.softplus(logits_fake))
        sp_fake_1 = jnp.sum(jax.nn.softplus(-logits_fake))

        acc_ref[0] = acc_ref[0] + sse
        acc_ref[1] = acc_ref[1] + sp_real_1
        acc_ref[2] = acc_ref[2] + sp_fake_0
        acc_ref[3] = acc_ref[3] + sp_fake_1

        @pl.when(i == num_tiles - 1)
        def _finalize():
            recon = acc_ref[0] * inv_bd
            bce_real_1 = acc_ref[1] * inv_b
            bce_fake_0 = acc_ref[2] * inv_b
            bce_fake_1 = acc_ref[3] * inv_b
            loss_g = 0.99 * recon + 0.01 * bce_fake_1
            loss_d = 0.5 * (bce_real_1 + bce_fake_0)
            lane = jax.lax.broadcasted_iota(jnp.int32, (1, F), 1)
            loss_ref[...] = jnp.where(lane == 0, loss_g,
                                      jnp.where(lane == 1, loss_d, 0.0))

    return kernel


# ------------------------------ wrapper --------------------------------------

def _pad2d(a, rows, cols):
    out = jnp.zeros((rows, cols), jnp.float32)
    return out.at[: a.shape[0], : a.shape[1]].set(a.astype(jnp.float32))


def _pad_row(v, cols):
    v = jnp.asarray(v, jnp.float32).reshape(-1)
    out = jnp.zeros((cols,), jnp.float32)
    return out.at[: v.shape[0]].set(v)


@functools.partial(jax.jit, static_argnames=("tile_rows",))
def aae_step(x, noise, params, tile_rows=128):
    """Fused AAE forward/loss step. Returns (x_rec, z, loss_g, loss_d)."""
    B, D = x.shape
    Dw = params["W_white"].shape[1]
    hidden = params["We1"].shape[1]
    latent = params["We2"].shape[1]
    dh = params["Wq1"].shape[1]

    # pad every feature dim to a multiple of 128 -> lane-dense layout everywhere
    F = 128 * pl.cdiv(max(D, Dw, hidden, latent, dh), 128)

    if B % tile_rows == 0:
        TB = tile_rows
    else:
        assert B % 8 == 0, "batch size must be a multiple of 8"
        TB = B
    num_tiles = B // TB

    # pack weights into one (7, F, F) stack and biases (+ final disc vector) into (8, F)
    w_stack = jnp.stack([
        _pad2d(params["W_white"], F, F), _pad2d(params["We1"], F, F),
        _pad2d(params["We2"], F, F), _pad2d(params["Wd1"], F, F),
        _pad2d(params["Wd2"], F, F), _pad2d(params["W_unwhite"], F, F),
        _pad2d(params["Wq1"], F, F),
    ])
    b_stack = jnp.stack([
        _pad_row(params["be1"], F), _pad_row(params["be2"], F),
        _pad_row(params["bd1"], F), _pad_row(params["bd2"], F),
        _pad_row(params["bq1"], F), _pad_row(params["Wq2"], F),
        _pad_row(params["bq2"], F), jnp.zeros((F,), jnp.float32),
    ])

    x_pad = _pad2d(x, B, F)
    noise_pad = _pad2d(noise, B, F)

    kernel = _make_kernel(TB, F, B, D, num_tiles)

    out_shapes = (
        jax.ShapeDtypeStruct((B, F), jnp.float32),   # x_rec (padded)
        jax.ShapeDtypeStruct((B, F), jnp.float32),   # z (padded)
        jax.ShapeDtypeStruct((1, F), jnp.float32),   # [loss_g, loss_d, 0 ...]
    )

    x_rec_pad, z_pad, losses = pl.pallas_call(
        kernel,
        out_shape=out_shapes,
        grid=(num_tiles,),
        in_specs=[
            pl.BlockSpec((TB, F), lambda i: (i, 0)),       # x row tile (streamed)
            pl.BlockSpec((TB, F), lambda i: (i, 0)),       # noise row tile (streamed)
            pl.BlockSpec((7, F, F), lambda i: (0, 0, 0)),  # weight stack (resident)
            pl.BlockSpec((8, F), lambda i: (0, 0)),        # bias stack (resident)
        ],
        out_specs=(
            pl.BlockSpec((TB, F), lambda i: (i, 0)),       # x_rec tile
            pl.BlockSpec((TB, F), lambda i: (i, 0)),       # z tile
            pl.BlockSpec((1, F), lambda i: (0, 0)),        # losses (written on last step)
        ),
        scratch_shapes=[pltpu.SMEM((4,), jnp.float32)],    # loss partial sums
        compiler_params=pltpu.CompilerParams(
            dimension_semantics=("arbitrary",),            # row axis carries loss reduction
        ),
    )(x_pad, noise_pad, w_stack, b_stack)

    return (x_rec_pad[:, :D], z_pad[:, :latent], losses[0, 0], losses[0, 1])


# --------------------------- parameter setup ---------------------------------

def init_params(key, D, dof, hidden, latent, disc_hidden):
    Dw = D - dof
    ks = jax.random.split(key, 8)

    def w(k, shape, scale=0.1):
        return (scale * jax.random.normal(k, shape)).astype(jnp.float32)

    return {
        # PCA whitening / un-whitening as fixed linear maps
        "W_white":   w(ks[0], (D, Dw)),
        "W_unwhite": w(ks[1], (Dw, D)),
        # encoder
        "We1": w(ks[2], (Dw, hidden)), "be1": jnp.zeros((1, hidden), jnp.float32),
        "We2": w(ks[3], (hidden, latent)), "be2": jnp.zeros((1, latent), jnp.float32),
        # decoder
        "Wd1": w(ks[4], (latent, hidden)), "bd1": jnp.zeros((1, hidden), jnp.float32),
        "Wd2": w(ks[5], (hidden, Dw)), "bd2": jnp.zeros((1, Dw), jnp.float32),
        # discriminator
        "Wq1": w(ks[6], (latent, disc_hidden)), "bq1": jnp.zeros((1, disc_hidden), jnp.float32),
        "Wq2": w(ks[7], (disc_hidden, 1)), "bq2": jnp.zeros((1, 1), jnp.float32),
    }


# --------------------------- pure-JAX reference -------------------------------

def aae_step_ref(x, noise, params):
    xw = x @ params["W_white"]
    h1 = jnp.tanh(xw @ params["We1"] + params["be1"])
    z = h1 @ params["We2"] + params["be2"]
    h2 = jnp.tanh(z @ params["Wd1"] + params["bd1"])
    xhat = h2 @ params["Wd2"] + params["bd2"]
    xrec = xhat @ params["W_unwhite"]
    recon = jnp.mean((x - xrec) ** 2)

    def disc_logits(v):
        hq = jnp.tanh(v @ params["Wq1"] + params["bq1"])
        return hq @ params["Wq2"] + params["bq2"]

    lr = disc_logits(noise)
    lf = disc_logits(z)
    bce_real_1 = jnp.mean(jax.nn.softplus(-lr))
    bce_fake_0 = jnp.mean(jax.nn.softplus(lf))
    bce_fake_1 = jnp.mean(jax.nn.softplus(-lf))
    loss_g = 0.99 * recon + 0.01 * bce_fake_1
    loss_d = 0.5 * (bce_real_1 + bce_fake_0)
    return xrec, z, loss_g, loss_d


if __name__ == "__main__":
    # Module hyper-params: data dim 32, dof 4, latent 8, hidden 32, disc hidden 16.
    # B=256 rows = 32 PyTorch minibatches of batchsize=8 streamed through ONE pallas_call
    # (macro-batching per the perf review); grid = 2 row-tiles of 128.
    B, D, dof, hidden, latent, disc_hidden = 256, 32, 4, 32, 8, 16

    key = jax.random.PRNGKey(0)
    k_x, k_noise, k_p = jax.random.split(key, 3)

    x = jax.random.normal(k_x, (B, D), dtype=jnp.float32)
    noise = jax.random.normal(k_noise, (B, latent), dtype=jnp.float32)  # true_prior sample
    params = init_params(k_p, D, dof, hidden, latent, disc_hidden)

    x_rec, z, loss_g, loss_d = aae_step(x, noise, params)
    jax.block_until_ready((x_rec, z, loss_g, loss_d))

    # light correctness check vs. pure-JAX reference (loose tol covers MXU precision modes)
    xr_ref, z_ref, lg_ref, ld_ref = aae_step_ref(x, noise, params)
    assert x_rec.shape == (B, D) and z.shape == (B, latent)
    assert bool(jnp.allclose(x_rec, xr_ref, atol=2e-2, rtol=2e-2))
    assert bool(jnp.allclose(z, z_ref, atol=2e-2, rtol=2e-2))
    assert bool(jnp.allclose(loss_g, lg_ref, atol=2e-2, rtol=2e-2))
    assert bool(jnp.allclose(loss_d, ld_ref, atol=2e-2, rtol=2e-2))
    assert bool(jnp.isfinite(loss_g)) and bool(jnp.isfinite(loss_d))

    print("KERNEL_OK")
</pallas_src>

<mosaic_0001>
module attributes {stable_mosaic.version = 11 : i64} {
  func.func @kernel(%arg0: i32, %arg1: memref<128x128xf32, #tpu.memory_space<vmem>>, %arg2: memref<128x128xf32, #tpu.memory_space<vmem>>, %arg3: memref<7x128x128xf32, #tpu.memory_space<vmem>>, %arg4: memref<8x128xf32, #tpu.memory_space<vmem>>, %arg5: memref<128x128xf32, #tpu.memory_space<vmem>>, %arg6: memref<128x128xf32, #tpu.memory_space<vmem>>, %arg7: memref<1x128xf32, #tpu.memory_space<vmem>>, %arg8: memref<4xf32, #tpu.memory_space<smem>>) attributes {dimension_semantics = [#tpu.dimension_semantics<arbitrary>], iteration_bounds = array<i64: 2>, scalar_prefetch = 0 : i64, scratch_operands = 1 : i64, tpu.core_type = #tpu.core_type<tc>, window_params = [{transform_indices = @transform_0, window_bounds = array<i64: 128, 128>}, {transform_indices = @transform_1, window_bounds = array<i64: 128, 128>}, {pipeline_mode = #tpu.pipeline_mode<synchronous>, transform_indices = @transform_2, window_bounds = array<i64: 7, 128, 128>}, {pipeline_mode = #tpu.pipeline_mode<synchronous>, transform_indices = @transform_3, window_bounds = array<i64: 8, 128>}, {transform_indices = @transform_4, window_bounds = array<i64: 128, 128>}, {transform_indices = @transform_5, window_bounds = array<i64: 128, 128>}, {pipeline_mode = #tpu.pipeline_mode<synchronous>, transform_indices = @transform_6, window_bounds = array<i64: 1, 128>}]} {
    %c0_i32 = arith.constant 0 : i32
    %0 = arith.cmpi eq, %arg0, %c0_i32 : i32
    %1 = arith.extui %0 : i1 to i32
    %c0_i32_0 = arith.constant 0 : i32
    %2 = arith.cmpi ne, %1, %c0_i32_0 : i32
    scf.if %2 {
      %cst_65 = arith.constant 0.000000e+00 : f32
      %c0_66 = arith.constant 0 : index
      %136 = memref.load %arg8[%c0_66] : memref<4xf32, #tpu.memory_space<smem>>
      memref.store %cst_65, %arg8[%c0_66] : memref<4xf32, #tpu.memory_space<smem>>
      %cst_67 = arith.constant 0.000000e+00 : f32
      %c1_68 = arith.constant 1 : index
      %137 = memref.load %arg8[%c1_68] : memref<4xf32, #tpu.memory_space<smem>>
      memref.store %cst_67, %arg8[%c1_68] : memref<4xf32, #tpu.memory_space<smem>>
      %cst_69 = arith.constant 0.000000e+00 : f32
      %c2_70 = arith.constant 2 : index
      %138 = memref.load %arg8[%c2_70] : memref<4xf32, #tpu.memory_space<smem>>
      memref.store %cst_69, %arg8[%c2_70] : memref<4xf32, #tpu.memory_space<smem>>
      %cst_71 = arith.constant 0.000000e+00 : f32
      %c3_72 = arith.constant 3 : index
      %139 = memref.load %arg8[%c3_72] : memref<4xf32, #tpu.memory_space<smem>>
      memref.store %cst_71, %arg8[%c3_72] : memref<4xf32, #tpu.memory_space<smem>>
    } else {
    }
    %c0 = arith.constant 0 : index
    %c0_1 = arith.constant 0 : index
    %3 = vector.load %arg1[%c0, %c0_1] : memref<128x128xf32, #tpu.memory_space<vmem>>, vector<128x128xf32>
    %c0_2 = arith.constant 0 : index
    %c0_3 = arith.constant 0 : index
    %4 = vector.load %arg2[%c0_2, %c0_3] : memref<128x128xf32, #tpu.memory_space<vmem>>, vector<128x128xf32>
    %c0_4 = arith.constant 0 : index
    %c0_5 = arith.constant 0 : index
    %c0_6 = arith.constant 0 : index
    %5 = vector.load %arg3[%c0_4, %c0_5, %c0_6] : memref<7x128x128xf32, #tpu.memory_space<vmem>>, vector<1x128x128xf32>
    %6 = vector.shape_cast %5 : vector<1x128x128xf32> to vector<128x128xf32>
    %c1 = arith.constant 1 : index
    %c0_7 = arith.constant 0 : index
    %c0_8 = arith.constant 0 : index
    %7 = vector.load %arg3[%c1, %c0_7, %c0_8] : memref<7x128x128xf32, #tpu.memory_space<vmem>>, vector<1x128x128xf32>
    %8 = vector.shape_cast %7 : vector<1x128x128xf32> to vector<128x128xf32>
    %c2 = arith.constant 2 : index
    %c0_9 = arith.constant 0 : index
    %c0_10 = arith.constant 0 : index
    %9 = vector.load %arg3[%c2, %c0_9, %c0_10] : memref<7x128x128xf32, #tpu.memory_space<vmem>>, vector<1x128x128xf32>
    %10 = vector.shape_cast %9 : vector<1x128x128xf32> to vector<128x128xf32>
    %c3 = arith.constant 3 : index
    %c0_11 = arith.constant 0 : index
    %c0_12 = arith.constant 0 : index
    %11 = vector.load %arg3[%c3, %c0_11, %c0_12] : memref<7x128x128xf32, #tpu.memory_space<vmem>>, vector<1x128x128xf32>
    %12 = vector.shape_cast %11 : vector<1x128x128xf32> to vector<128x128xf32>
    %c4 = arith.constant 4 : index
    %c0_13 = arith.constant 0 : index
    %c0_14 = arith.constant 0 : index
    %13 = vector.load %arg3[%c4, %c0_13, %c0_14] : memref<7x128x128xf32, #tpu.memory_space<vmem>>, vector<1x128x128xf32>
    %14 = vector.shape_cast %13 : vector<1x128x128xf32> to vector<128x128xf32>
    %c5 = arith.constant 5 : index
    %c0_15 = arith.constant 0 : index
    %c0_16 = arith.constant 0 : index
    %15 = vector.load %arg3[%c5, %c0_15, %c0_16] : memref<7x128x128xf32, #tpu.memory_space<vmem>>, vector<1x128x128xf32>
    %16 = vector.shape_cast %15 : vector<1x128x128xf32> to vector<128x128xf32>
    %c6 = arith.constant 6 : index
    %c0_17 = arith.constant 0 : index
    %c0_18 = arith.constant 0 : index
    %17 = vector.load %arg3[%c6, %c0_17, %c0_18] : memref<7x128x128xf32, #tpu.memory_space<vmem>>, vector<1x128x128xf32>
    %18 = vector.shape_cast %17 : vector<1x128x128xf32> to vector<128x128xf32>
    %c0_19 = arith.constant 0 : index
    %c0_20 = arith.constant 0 : index
    %19 = vector.load %arg4[%c0_19, %c0_20] : memref<8x128xf32, #tpu.memory_space<vmem>>, vector<1x128xf32>
    %c1_21 = arith.constant 1 : index
    %c0_22 = arith.constant 0 : index
    %20 = vector.load %arg4[%c1_21, %c0_22] : memref<8x128xf32, #tpu.memory_space<vmem>>, vector<1x128xf32>
    %c2_23 = arith.constant 2 : index
    %c0_24 = arith.constant 0 : index
    %21 = vector.load %arg4[%c2_23, %c0_24] : memref<8x128xf32, #tpu.memory_space<vmem>>, vector<1x128xf32>
    %c3_25 = arith.constant 3 : index
    %c0_26 = arith.constant 0 : index
    %22 = vector.load %arg4[%c3_25, %c0_26] : memref<8x128xf32, #tpu.memory_space<vmem>>, vector<1x128xf32>
    %c4_27 = arith.constant 4 : index
    %c0_28 = arith.constant 0 : index
    %23 = vector.load %arg4[%c4_27, %c0_28] : memref<8x128xf32, #tpu.memory_space<vmem>>, vector<1x128xf32>
    %c5_29 = arith.constant 5 : index
    %c0_30 = arith.constant 0 : index
    %24 = vector.load %arg4[%c5_29, %c0_30] : memref<8x128xf32, #tpu.memory_space<vmem>>, vector<1x128xf32>
    %c6_31 = arith.constant 6 : index
    %c0_32 = arith.constant 0 : index
    %25 = vector.load %arg4[%c6_31, %c0_32] : memref<8x128xf32, #tpu.memory_space<vmem>>, vector<1x1xf32>
    %cst = arith.constant dense<0.000000e+00> : vector<128x128xf32>
    %26 = tpu.matmul %3, %6, %cst {dimension_numbers = #tpu.dot_dimension_numbers<[1], [0], [0], [1], [0, 0, 1, 1], [], []>} : vector<128x128xf32>, vector<128x128xf32>, vector<128x128xf32> -> vector<128x128xf32>
    %cst_33 = arith.constant dense<0.000000e+00> : vector<128x128xf32>
    %27 = tpu.matmul %26, %8, %cst_33 {dimension_numbers = #tpu.dot_dimension_numbers<[1], [0], [0], [1], [0, 0, 1, 1], [], []>} : vector<128x128xf32>, vector<128x128xf32>, vector<128x128xf32> -> vector<128x128xf32>
    %28 = vector.broadcast %19 : vector<1x128xf32> to vector<128x128xf32>
    %29 = arith.addf %27, %28 : vector<128x128xf32>
    %30 = math.tanh %29 : vector<128x128xf32>
    %cst_34 = arith.constant dense<0.000000e+00> : vector<128x128xf32>
    %31 = tpu.matmul %30, %10, %cst_34 {dimension_numbers = #tpu.dot_dimension_numbers<[1], [0], [0], [1], [0, 0, 1, 1], [], []>} : vector<128x128xf32>, vector<128x128xf32>, vector<128x128xf32> -> vector<128x128xf32>
    %32 = vector.broadcast %20 : vector<1x128xf32> to vector<128x128xf32>
    %33 = arith.addf %31, %32 : vector<128x128xf32>
    %cst_35 = arith.constant dense<0.000000e+00> : vector<128x128xf32>
    %34 = tpu.matmul %33, %12, %cst_35 {dimension_numbers = #tpu.dot_dimension_numbers<[1], [0], [0], [1], [0, 0, 1, 1], [], []>} : vector<128x128xf32>, vector<128x128xf32>, vector<128x128xf32> -> vector<128x128xf32>
    %35 = vector.broadcast %21 : vector<1x128xf32> to vector<128x128xf32>
    %36 = arith.addf %34, %35 : vector<128x128xf32>
    %37 = math.tanh %36 : vector<128x128xf32>
    %cst_36 = arith.constant dense<0.000000e+00> : vector<128x128xf32>
    %38 = tpu.matmul %37, %14, %cst_36 {dimension_numbers = #tpu.dot_dimension_numbers<[1], [0], [0], [1], [0, 0, 1, 1], [], []>} : vector<128x128xf32>, vector<128x128xf32>, vector<128x128xf32> -> vector<128x128xf32>
    %39 = vector.broadcast %22 : vector<1x128xf32> to vector<128x128xf32>
    %40 = arith.addf %38, %39 : vector<128x128xf32>
    %cst_37 = arith.constant dense<0.000000e+00> : vector<128x128xf32>
    %41 = tpu.matmul %40, %16, %cst_37 {dimension_numbers = #tpu.dot_dimension_numbers<[1], [0], [0], [1], [0, 0, 1, 1], [], []>} : vector<128x128xf32>, vector<128x128xf32>, vector<128x128xf32> -> vector<128x128xf32>
    %c0_38 = arith.constant 0 : index
    %c0_39 = arith.constant 0 : index
    %42 = vector.load %arg5[%c0_38, %c0_39] : memref<128x128xf32, #tpu.memory_space<vmem>>, vector<128x128xf32>
    tpu.vector_store %arg5[%c0_38, %c0_39], %41 {strides = array<i32>} : memref<128x128xf32, #tpu.memory_space<vmem>>, vector<128x128xf32>,
    %c0_40 = arith.constant 0 : index
    %c0_41 = arith.constant 0 : index
    %43 = vector.load %arg6[%c0_40, %c0_41] : memref<128x128xf32, #tpu.memory_space<vmem>>, vector<128x128xf32>
    tpu.vector_store %arg6[%c0_40, %c0_41], %33 {strides = array<i32>} : memref<128x128xf32, #tpu.memory_space<vmem>>, vector<128x128xf32>,
    %44 = arith.subf %3, %41 : vector<128x128xf32>
    %45 = arith.mulf %44, %44 : vector<128x128xf32>
    %46 = vector.shape_cast %45 : vector<128x128xf32> to vector<1x128x128xf32>
    %cst_42 = arith.constant dense<0.000000e+00> : vector<1xf32>
    %47 = vector.multi_reduction <add>, %46, %cst_42 [1, 2] : vector<1x128x128xf32> to vector<1xf32>
    %48 = vector.shape_cast %47 : vector<1xf32> to vector<1x1x1xf32>
    %49 = vector.extract %48[0, 0, 0] : f32 from vector<1x1x1xf32>
    %50 = tpu.concatenate %4, %33 in 0 : vector<128x128xf32>, vector<128x128xf32> -> vector<256x128xf32>
    %cst_43 = arith.constant dense<0.000000e+00> : vector<256x128xf32>
    %51 = tpu.matmul %50, %18, %cst_43 {dimension_numbers = #tpu.dot_dimension_numbers<[1], [0], [0], [1], [0, 0, 1, 1], [], []>} : vector<256x128xf32>, vector<128x128xf32>, vector<256x128xf32> -> vector<256x128xf32>
    %52 = vector.broadcast %23 : vector<1x128xf32> to vector<256x128xf32>
    %53 = arith.addf %51, %52 : vector<256x128xf32>
    %54 = math.tanh %53 : vector<256x128xf32>
    %55 = vector.broadcast %24 : vector<1x128xf32> to vector<256x128xf32>
    %56 = arith.mulf %54, %55 : vector<256x128xf32>
    %cst_44 = arith.constant dense<0.000000e+00> : vector<256xf32>
    %57 = vector.multi_reduction <add>, %56, %cst_44 [1] : vector<256x128xf32> to vector<256xf32>
    %58 = vector.shape_cast %57 : vector<256xf32> to vector<256x1xf32>
    %59 = vector.broadcast %25 : vector<1x1xf32> to vector<256x1xf32>
    %60 = arith.addf %58, %59 : vector<256x1xf32>
    %61 = vector.extract_strided_slice %60 {offsets = [0, 0], sizes = [128, 1], strides = [1, 1]} : vector<256x1xf32> to vector<128x1xf32>
    %62 = vector.extract_strided_slice %60 {offsets = [128, 0], sizes = [128, 1], strides = [1, 1]} : vector<256x1xf32> to vector<128x1xf32>
    %cst_45 = arith.constant 0.000000e+00 : f32
    %63 = vector.broadcast %cst_45 : f32 to vector<128x1xf32>
    %64 = arith.subf %63, %61 : vector<128x1xf32>
    %cst_46 = arith.constant 0.000000e+00 : f32
    %65 = vector.broadcast %cst_46 : f32 to vector<128x1xf32>
    %66 = arith.maximumf %64, %65 : vector<128x1xf32>
    %67 = vector.broadcast %cst_46 : f32 to vector<128x1xf32>
    %68 = arith.subf %64, %67 : vector<128x1xf32>
    %69 = arith.cmpf one, %68, %68 : vector<128x1xf32>
    %70 = vector.broadcast %cst_46 : f32 to vector<128x1xf32>
    %71 = arith.addf %64, %70 : vector<128x1xf32>
    %72 = math.absf %68 : vector<128x1xf32>
    %cst_47 = arith.constant 0.000000e+00 : f32
    %73 = vector.broadcast %cst_47 : f32 to vector<128x1xf32>
    %74 = arith.subf %73, %72 : vector<128x1xf32>
    %75 = math.exp %74 : vector<128x1xf32>
    %76 = math.log1p %75 : vector<128x1xf32>
    %77 = arith.addf %66, %76 : vector<128x1xf32>
    %78 = arith.select %69, %71, %77 : vector<128x1xi1>, vector<128x1xf32>
    %79 = vector.shape_cast %78 : vector<128x1xf32> to vector<1x128x1xf32>
    %cst_48 = arith.constant dense<0.000000e+00> : vector<1xf32>
    %80 = vector.multi_reduction <add>, %79, %cst_48 [1, 2] : vector<1x128x1xf32> to vector<1xf32>
    %81 = vector.shape_cast %80 : vector<1xf32> to vector<1x1x1xf32>
    %82 = vector.extract %81[0, 0, 0] : f32 from vector<1x1x1xf32>
    %cst_49 = arith.constant 0.000000e+00 : f32
    %83 = vector.broadcast %cst_49 : f32 to vector<128x1xf32>
    %84 = arith.maximumf %62, %83 : vector<128x1xf32>
    %85 = vector.broadcast %cst_49 : f32 to vector<128x1xf32>
    %86 = arith.subf %62, %85 : vector<128x1xf32>
    %87 = arith.cmpf one, %86, %86 : vector<128x1xf32>
    %88 = vector.broadcast %cst_49 : f32 to vector<128x1xf32>
    %89 = arith.addf %62, %88 : vector<128x1xf32>
    %90 = math.absf %86 : vector<128x1xf32>
    %cst_50 = arith.constant 0.000000e+00 : f32
    %91 = vector.broadcast %cst_50 : f32 to vector<128x1xf32>
    %92 = arith.subf %91, %90 : vector<128x1xf32>
    %93 = math.exp %92 : vector<128x1xf32>
    %94 = math.log1p %93 : vector<128x1xf32>
    %95 = arith.addf %84, %94 : vector<128x1xf32>
    %96 = arith.select %87, %89, %95 : vector<128x1xi1>, vector<128x1xf32>
    %97 = vector.shape_cast %96 : vector<128x1xf32> to vector<1x128x1xf32>
    %cst_51 = arith.constant dense<0.000000e+00> : vector<1xf32>
    %98 = vector.multi_reduction <add>, %97, %cst_51 [1, 2] : vector<1x128x1xf32> to vector<1xf32>
    %99 = vector.shape_cast %98 : vector<1xf32> to vector<1x1x1xf32>
    %100 = vector.extract %99[0, 0, 0] : f32 from vector<1x1x1xf32>
    %cst_52 = arith.constant 0.000000e+00 : f32
    %101 = vector.broadcast %cst_52 : f32 to vector<128x1xf32>
    %102 = arith.subf %101, %62 : vector<128x1xf32>
    %cst_53 = arith.constant 0.000000e+00 : f32
    %103 = vector.broadcast %cst_53 : f32 to vector<128x1xf32>
    %104 = arith.maximumf %102, %103 : vector<128x1xf32>
    %105 = vector.broadcast %cst_53 : f32 to vector<128x1xf32>
    %106 = arith.subf %102, %105 : vector<128x1xf32>
    %107 = arith.cmpf one, %106, %106 : vector<128x1xf32>
    %108 = vector.broadcast %cst_53 : f32 to vector<128x1xf32>
    %109 = arith.addf %102, %108 : vector<128x1xf32>
    %110 = math.absf %106 : vector<128x1xf32>
    %cst_54 = arith.constant 0.000000e+00 : f32
    %111 = vector.broadcast %cst_54 : f32 to vector<128x1xf32>
    %112 = arith.subf %111, %110 : vector<128x1xf32>
    %113 = math.exp %112 : vector<128x1xf32>
    %114 = math.log1p %113 : vector<128x1xf32>
    %115 = arith.addf %104, %114 : vector<128x1xf32>
    %116 = arith.select %107, %109, %115 : vector<128x1xi1>, vector<128x1xf32>
    %117 = vector.shape_cast %116 : vector<128x1xf32> to vector<1x128x1xf32>
    %cst_55 = arith.constant dense<0.000000e+00> : vector<1xf32>
    %118 = vector.multi_reduction <add>, %117, %cst_55 [1, 2] : vector<1x128x1xf32> to vector<1xf32>
    %119 = vector.shape_cast %118 : vector<1xf32> to vector<1x1x1xf32>
    %120 = vector.extract %119[0, 0, 0] : f32 from vector<1x1x1xf32>
    %c0_56 = arith.constant 0 : index
    %121 = memref.load %arg8[%c0_56] : memref<4xf32, #tpu.memory_space<smem>>
    %122 = arith.addf %121, %49 : f32
    %c0_57 = arith.constant 0 : index
    %123 = memref.load %arg8[%c0_57] : memref<4xf32, #tpu.memory_space<smem>>
    memref.store %122, %arg8[%c0_57] : memref<4xf32, #tpu.memory_space<smem>>
    %c1_58 = arith.constant 1 : index
    %124 = memref.load %arg8[%c1_58] : memref<4xf32, #tpu.memory_space<smem>>
    %125 = arith.addf %124, %82 : f32
    %c1_59 = arith.constant 1 : index
    %126 = memref.load %arg8[%c1_59] : memref<4xf32, #tpu.memory_space<smem>>
    memref.store %125, %arg8[%c1_59] : memref<4xf32, #tpu.memory_space<smem>>
    %c2_60 = arith.constant 2 : index
    %127 = memref.load %arg8[%c2_60] : memref<4xf32, #tpu.memory_space<smem>>
    %128 = arith.addf %127, %100 : f32
    %c2_61 = arith.constant 2 : index
    %129 = memref.load %arg8[%c2_61] : memref<4xf32, #tpu.memory_space<smem>>
    memref.store %128, %arg8[%c2_61] : memref<4xf32, #tpu.memory_space<smem>>
    %c3_62 = arith.constant 3 : index
    %130 = memref.load %arg8[%c3_62] : memref<4xf32, #tpu.memory_space<smem>>
    %131 = arith.addf %130, %120 : f32
    %c3_63 = arith.constant 3 : index
    %132 = memref.load %arg8[%c3_63] : memref<4xf32, #tpu.memory_space<smem>>
    memref.store %131, %arg8[%c3_63] : memref<4xf32, #tpu.memory_space<smem>>
    %c1_i32 = arith.constant 1 : i32
    %133 = arith.cmpi eq, %arg0, %c1_i32 : i32
    %134 = arith.extui %133 : i1 to i32
    %c0_i32_64 = arith.constant 0 : i32
    %135 = arith.cmpi ne, %134, %c0_i32_64 : i32
    scf.if %135 {
      %c0_65 = arith.constant 0 : index
      %136 = memref.load %arg8[%c0_65] : memref<4xf32, #tpu.memory_space<smem>>
      %cst_66 = arith.constant 1.22070313E-4 : f32
      %137 = arith.mulf %136, %cst_66 : f32
      %c1_67 = arith.constant 1 : index
      %138 = memref.load %arg8[%c1_67] : memref<4xf32, #tpu.memory_space<smem>>
      %cst_68 = arith.constant 3.906250e-03 : f32
      %139 = arith.mulf %138, %cst_68 : f32
      %c2_69 = arith.constant 2 : index
      %140 = memref.load %arg8[%c2_69] : memref<4xf32, #tpu.memory_space<smem>>
      %cst_70 = arith.constant 3.906250e-03 : f32
      %141 = arith.mulf %140, %cst_70 : f32
      %c3_71 = arith.constant 3 : index
      %142 = memref.load %arg8[%c3_71] : memref<4xf32, #tpu.memory_space<smem>>
      %cst_72 = arith.constant 3.906250e-03 : f32
      %143 = arith.mulf %142, %cst_72 : f32
      %cst_73 = arith.constant 9.900000e-01 : f32
      %144 = arith.mulf %cst_73, %137 : f32
      %cst_74 = arith.constant 0.00999999977 : f32
      %145 = arith.mulf %cst_74, %143 : f32
      %146 = arith.addf %144, %145 : f32
      %147 = arith.addf %139, %141 : f32
      %cst_75 = arith.constant 5.000000e-01 : f32
      %148 = arith.mulf %cst_75, %147 : f32
      %149 = tpu.iota {dimensions = array<i32: 1>} : vector<1x128xi32>
      %c0_i32_76 = arith.constant 0 : i32
      %150 = vector.broadcast %c0_i32_76 : i32 to vector<1x128xi32>
      %151 = arith.cmpi eq, %149, %150 : vector<1x128xi32>
      %c1_i32_77 = arith.constant 1 : i32
      %152 = vector.broadcast %c1_i32_77 : i32 to vector<1x128xi32>
      %153 = arith.cmpi eq, %149, %152 : vector<1x128xi32>
      %cst_78 = arith.constant 0.000000e+00 : f32
      %154 = vector.broadcast %148 : f32 to vector<1x128xf32>
      %155 = vector.broadcast %cst_78 : f32 to vector<1x128xf32>
      %156 = arith.select %153, %154, %155 : vector<1x128xi1>, vector<1x128xf32>
      %157 = vector.broadcast %146 : f32 to vector<1x128xf32>
      %158 = arith.select %151, %157, %156 : vector<1x128xi1>, vector<1x128xf32>
      %c0_79 = arith.constant 0 : index
      %c0_80 = arith.constant 0 : index
      %159 = vector.load %arg7[%c0_79, %c0_80] : memref<1x128xf32, #tpu.memory_space<vmem>>, vector<1x128xf32>
      tpu.vector_store %arg7[%c0_79, %c0_80], %158 {strides = array<i32>} : memref<1x128xf32, #tpu.memory_space<vmem>>, vector<1x128xf32>,
    } else {
    }
    return
  }
  func.func @transform_0(%arg0: i32) -> (i32, i32) {
    %c0_i32 = arith.constant 0 : i32
    %c0_i32_0 = arith.constant 0 : i32
    return %arg0, %c0_i32 : i32, i32
  }
  func.func @transform_1(%arg0: i32) -> (i32, i32) {
    %c0_i32 = arith.constant 0 : i32
    %c0_i32_0 = arith.constant 0 : i32
    return %arg0, %c0_i32 : i32, i32
  }
  func.func @transform_2(%arg0: i32) -> (i32, i32, i32) {
    %c0_i32 = arith.constant 0 : i32
    %c0_i32_0 = arith.constant 0 : i32
    %c0_i32_1 = arith.constant 0 : i32
    %c0_i32_2 = arith.constant 0 : i32
    return %c0_i32, %c0_i32_0, %c0_i32_1 : i32, i32, i32
  }
  func.func @transform_3(%arg0: i32) -> (i32, i32) {
    %c0_i32 = arith.constant 0 : i32
    %c0_i32_0 = arith.constant 0 : i32
    %c0_i32_1 = arith.constant 0 : i32
    return %c0_i32, %c0_i32_0 : i32, i32
  }
  func.func @transform_4(%arg0: i32) -> (i32, i32) {
    %c0_i32 = arith.constant 0 : i32
    %c0_i32_0 = arith.constant 0 : i32
    return %arg0, %c0_i32 : i32, i32
  }
  func.func @transform_5(%arg0: i32) -> (i32, i32) {
    %c0_i32 = arith.constant 0 : i32
    %c0_i32_0 = arith.constant 0 : i32
    return %arg0, %c0_i32 : i32, i32
  }
  func.func @transform_6(%arg0: i32) -> (i32, i32) {
    %c0_i32 = arith.constant 0 : i32
    %c0_i32_0 = arith.constant 0 : i32
    %c0_i32_1 = arith.constant 0 : i32
    return %c0_i32, %c0_i32_0 : i32, i32
  }
}

</mosaic_0001>

<llo_original>
// kernel: aae_step.1
$region0: #{aae_step.1}
  #allocation0 [shape = 'u32[]', space=smem, size = 0x4, offset = 0x4, fixed_abs, tag = 'smem constant byte address 0x4 - core index']
  #allocation1 [shape = 'u32[144,128]{1,0:T(1,128)}', space=vmem, size = 0x12000, scoped, tag = 'internal scratch']
  #allocation2 [shape = 'f32[4]{0:T(128)}', space=smem, size = 0x200, scoped, tag = 'scratch operand']
  %s0 = inlined_call_operand.vmem [shape: f32[256,128], index: 0, kind: input, shape index: {}]
  %s1 = inlined_call_operand.vmem [shape: f32[256,128], index: 1, kind: input, shape index: {}]
  %s2 = inlined_call_operand.vmem [shape: f32[7,128,128], index: 2, kind: input, shape index: {}]
  %s3 = inlined_call_operand.vmem [shape: f32[8,128], index: 3, kind: input, shape index: {}]
  %s4 = inlined_call_operand.vmem [shape: f32[256,128], index: 4, kind: output, shape index: {0}]
  %s5 = inlined_call_operand.vmem [shape: f32[256,128], index: 5, kind: output, shape index: {1}]
  %s6 = inlined_call_operand.vmem [shape: f32[1,128], index: 6, kind: output, shape index: {2}]
  %7 = xla_tuple %s4, %s5, %s6
  %s8 = sld [smem:[#allocation0]]
  $region73: #{aae_step.1} parent=0
    _
  %s10 = ssub.s32 1, %s8
  %s11 = scalar_select 0, %s10, %s8
  loop: start=0, step=1, limit=4
  $region2: #{aae_step.1} parent=0 // loop_pre_header
    _
  $region3: #{aae_step.1} parent=0 // loop_header
    %s13 = sphi 0, %s17
    %p14 = scmp.ge.s32.totalorder %s13, 4
    %s23 = sphi 0, %s25
    %s26 = sphi 0, %s23
    %s27 = sphi 0, %s26
    %s43 = sphi 0, %s27
    %s49 = sphi 0, %s51
    %s52 = sphi 0, %s49
    %s53 = sphi 0, %s52
    %s69 = sphi 0, %s53
    %s73 = sphi 0, %s73
    %s75 = sphi 0, %s73
    %s76 = sphi 0, %s75
    %s90 = sphi 0, %s76
    %s94 = sphi 0, %s94
    %s96 = sphi 0, %s94
    %s97 = sphi 0, %s96
    %s111 = sphi 0, %s97
    %s117 = sphi 0, %s119
    %s120 = sphi 0, %s117
    %s121 = sphi 0, %s120
    %s137 = sphi 0, %s121
    %s143 = sphi 0, %s145
    %s146 = sphi 0, %s143
    %s147 = sphi 0, %s146
    %s163 = sphi 0, %s147
    %s167 = sphi 0, %s167
    %s169 = sphi 0, %s167
    %s170 = sphi 0, %s169
    %s184 = sphi 0, %s170
  $region4: #{aae_step.1} parent=0 // loop_header_branch
    %16 = sbr.rel (%p14) target = $region8
  $region5: #{aae_step.1} parent=0 // loop_body
    %s18 = ssub.s32 %s13, 1
    %s19 = ssub.s32 %s13, 2
    %s20 = sadd.s32 %s13, 1
    %s21 = ssub.s32 %s13, %s20
    %p22 = scmp.eq.s32.totalorder %s21, 0
    %s24 = sadd.s32 %s23, 1
    %s25 = scalar_select %p22, %s23, %s24
    %p28 = pneg %p22
    %p29 = scmp.eq.s32.totalorder %s13, 1
    %p30 = por %p28, %p29
    %p31 = scmp.ne.s32.totalorder %s23, %s26
    %p32 = scmp.eq.s32.totalorder %s13, 0
    %p33 = por %p31, %p32
    %p34 = scmp.ne.s32.totalorder %s23, %s26
    %p35 = scmp.eq.s32.totalorder %s18, 1
    %p36 = por %p34, %p35
    %p37 = scmp.ne.s32.totalorder %s26, %s27
    %p38 = scmp.eq.s32.totalorder %s18, 0
    %p39 = por %p37, %p38
    %p40 = scmp.ne.s32.totalorder %s26, %s27
    %p41 = scmp.eq.s32.totalorder %s19, 1
    %p42 = por %p40, %p41
    %p44 = scmp.ne.s32.totalorder %s27, %s43
    %p45 = scmp.eq.s32.totalorder %s19, 0
    %p46 = por %p44, %p45
    %s47 = ssub.s32 %s13, %s20
    %p48 = scmp.eq.s32.totalorder %s47, 0
    %s50 = sadd.s32 %s49, 1
    %s51 = scalar_select %p48, %s49, %s50
    %p54 = pneg %p48
    %p55 = scmp.eq.s32.totalorder %s13, 1
    %p56 = por %p54, %p55
    %p57 = scmp.ne.s32.totalorder %s49, %s52
    %p58 = scmp.eq.s32.totalorder %s13, 0
    %p59 = por %p57, %p58
    %p60 = scmp.ne.s32.totalorder %s49, %s52
    %p61 = scmp.eq.s32.totalorder %s18, 1
    %p62 = por %p60, %p61
    %p63 = scmp.ne.s32.totalorder %s52, %s53
    %p64 = scmp.eq.s32.totalorder %s18, 0
    %p65 = por %p63, %p64
    %p66 = scmp.ne.s32.totalorder %s52, %s53
    %p67 = scmp.eq.s32.totalorder %s19, 1
    %p68 = por %p66, %p67
    %p70 = scmp.ne.s32.totalorder %s53, %s69
    %p71 = scmp.eq.s32.totalorder %s19, 0
    %p72 = por %p70, %p71
    %s74 = sadd.s32 %s73, 1
    %p77 = scmp.eq.s32.totalorder %s13, 1
    %p78 = scmp.ne.s32.totalorder %s73, %s75
    %p79 = scmp.eq.s32.totalorder %s13, 0
    %p80 = por %p78, %p79
    %p81 = scmp.ne.s32.totalorder %s73, %s75
    %p82 = scmp.eq.s32.totalorder %s18, 1
    %p83 = por %p81, %p82
    %p84 = scmp.ne.s32.totalorder %s75, %s76
    %p85 = scmp.eq.s32.totalorder %s18, 0
    %p86 = por %p84, %p85
    %p87 = scmp.ne.s32.totalorder %s75, %s76
    %p88 = scmp.eq.s32.totalorder %s19, 1
    %p89 = por %p87, %p88
    %p91 = scmp.ne.s32.totalorder %s76, %s90
    %p92 = scmp.eq.s32.totalorder %s19, 0
    %p93 = por %p91, %p92
    %s95 = sadd.s32 %s94, 1
    %p98 = scmp.eq.s32.totalorder %s13, 1
    %p99 = scmp.ne.s32.totalorder %s94, %s96
    %p100 = scmp.eq.s32.totalorder %s13, 0
    %p101 = por %p99, %p100
    %p102 = scmp.ne.s32.totalorder %s94, %s96
    %p103 = scmp.eq.s32.totalorder %s18, 1
    %p104 = por %p102, %p103
    %p105 = scmp.ne.s32.totalorder %s96, %s97
    %p106 = scmp.eq.s32.totalorder %s18, 0
    %p107 = por %p105, %p106
    %p108 = scmp.ne.s32.totalorder %s96, %s97
    %p109 = scmp.eq.s32.totalorder %s19, 1
    %p110 = por %p108, %p109
    %p112 = scmp.ne.s32.totalorder %s97, %s111
    %p113 = scmp.eq.s32.totalorder %s19, 0
    %p114 = por %p112, %p113
    %s115 = ssub.s32 %s13, %s20
    %p116 = scmp.eq.s32.totalorder %s115, 0
    %s118 = sadd.s32 %s117, 1
    %s119 = scalar_select %p116, %s117, %s118
    %p122 = pneg %p116
    %p123 = scmp.eq.s32.totalorder %s13, 1
    %p124 = por %p122, %p123
    %p125 = scmp.ne.s32.totalorder %s117, %s120
    %p126 = scmp.eq.s32.totalorder %s13, 0
    %p127 = por %p125, %p126
    %p128 = scmp.ne.s32.totalorder %s117, %s120
    %p129 = scmp.eq.s32.totalorder %s18, 1
    %p130 = por %p128, %p129
    %p131 = scmp.ne.s32.totalorder %s120, %s121
    %p132 = scmp.eq.s32.totalorder %s18, 0
    %p133 = por %p131, %p132
    %p134 = scmp.ne.s32.totalorder %s120, %s121
    %p135 = scmp.eq.s32.totalorder %s19, 1
    %p136 = por %p134, %p135
    %p138 = scmp.ne.s32.totalorder %s121, %s137
    %p139 = scmp.eq.s32.totalorder %s19, 0
    %p140 = por %p138, %p139
    %s141 = ssub.s32 %s13, %s20
    %p142 = scmp.eq.s32.totalorder %s141, 0
    %s144 = sadd.s32 %s143, 1
    %s145 = scalar_select %p142, %s143, %s144
    %p148 = pneg %p142
    %p149 = scmp.eq.s32.totalorder %s13, 1
    %p150 = por %p148, %p149
    %p151 = scmp.ne.s32.totalorder %s143, %s146
    %p152 = scmp.eq.s32.totalorder %s13, 0
    %p153 = por %p151, %p152
    %p154 = scmp.ne.s32.totalorder %s143, %s146
    %p155 = scmp.eq.s32.totalorder %s18, 1
    %p156 = por %p154, %p155
    %p157 = scmp.ne.s32.totalorder %s146, %s147
    %p158 = scmp.eq.s32.totalorder %s18, 0
    %p159 = por %p157, %p158
    %p160 = scmp.ne.s32.totalorder %s146, %s147
    %p161 = scmp.eq.s32.totalorder %s19, 1
    %p162 = por %p160, %p161
    %p164 = scmp.ne.s32.totalorder %s147, %s163
    %p165 = scmp.eq.s32.totalorder %s19, 0
    %p166 = por %p164, %p165
    %s168 = sadd.s32 %s167, 1
    %p171 = scmp.eq.s32.totalorder %s13, 1
    %p172 = scmp.ne.s32.totalorder %s167, %s169
    %p173 = scmp.eq.s32.totalorder %s13, 0
    %p174 = por %p172, %p173
    %p175 = scmp.ne.s32.totalorder %s167, %s169
    %p176 = scmp.eq.s32.totalorder %s18, 1
    %p177 = por %p175, %p176
    %p178 = scmp.ne.s32.totalorder %s169, %s170
    %p179 = scmp.eq.s32.totalorder %s18, 0
    %p180 = por %p178, %p179
    %p181 = scmp.ne.s32.totalorder %s169, %s170
    %p182 = scmp.eq.s32.totalorder %s19, 1
    %p183 = por %p181, %p182
    %p185 = scmp.ne.s32.totalorder %s170, %s184
    %p186 = scmp.eq.s32.totalorder %s19, 0
    %p187 = por %p185, %p186
    %p188 = scmp.le.s32.totalorder 1, %s13
    %p189 = scmp.lt.s32.totalorder %s13, 3
    %p190 = pnand %p188, %p189
    %p191 = pneg %p190
    // Predicated region
    $region9: #{aae_step.1} parent=5 // pred_check
      _
    $region10: #{aae_step.1} parent=5 // pred_check_branch
      %193 = sbr.rel (%p190) target = $region12
    $region11: #{aae_step.1} parent=5 // pred_region
      %s194 = ssub.s32 %s13, 1
      // Predicated region
      $region13: #{aae_step.1} parent=11 // pred_check
        %p195 = pneg %p86
      $region14: #{aae_step.1} parent=11 // pred_check_branch
        %197 = sbr.rel (%p195) target = $region16
      $region15: #{aae_step.1} parent=11 // pred_region
        _
      $region16: #{aae_step.1} parent=11 // pred_fallthru
        _
      // Predicated region
      $region17: #{aae_step.1} parent=11 // pred_check
        %p198 = pneg %p107
      $region18: #{aae_step.1} parent=11 // pred_check_branch
        %200 = sbr.rel (%p198) target = $region20
      $region19: #{aae_step.1} parent=11 // pred_region
        _
      $region20: #{aae_step.1} parent=11 // pred_fallthru
        _
    $region12: #{aae_step.1} parent=5 // pred_fallthru
      _
    %p201 = scmp.lt.s32.totalorder %s13, 2
    // Predicated region
    $region21: #{aae_step.1} parent=5 // pred_check
      %p202 = pneg %p201
    $region22: #{aae_step.1} parent=5 // pred_check_branch
      %204 = sbr.rel (%p202) target = $region24
    $region23: #{aae_step.1} parent=5 // pred_region
      // Predicated region
      $region25: #{aae_step.1} parent=23 // pred_check
        %p205 = pneg %p33
      $region26: #{aae_step.1} parent=23 // pred_check_branch
        %207 = sbr.rel (%p205) target = $region28
      $region27: #{aae_step.1} parent=23 // pred_region
        %s208 = smul.u32 16, %s13
        %p209 = scmp.lt.s32.totalorder %s208, 31
        %s210 = scalar_select %p209, %s208, 31
        %s211 = smul.addr %s210, 8
        %s212 = scalar_lea.vmem %s0, %s211
        %s213 = smul.u32 16, %s13
      $region28: #{aae_step.1} parent=23 // pred_fallthru
        _
      // Predicated region
      $region29: #{aae_step.1} parent=23 // pred_check
        %p214 = pneg %p59
      $region30: #{aae_step.1} parent=23 // pred_check_branch
        %216 = sbr.rel (%p214) target = $region32
      $region31: #{aae_step.1} parent=23 // pred_region
        %s217 = smul.u32 16, %s13
        %p218 = scmp.lt.s32.totalorder %s217, 31
        %s219 = scalar_select %p218, %s217, 31
        %s220 = smul.addr %s219, 8
        %s221 = scalar_lea.vmem %s1, %s220
        %s222 = smul.u32 16, %s13
      $region32: #{aae_step.1} parent=23 // pred_fallthru
        _
    $region24: #{aae_step.1} parent=5 // pred_fallthru
      _
    %p223 = scmp.le.s32.totalorder 1, %s13
    %p224 = scmp.lt.s32.totalorder %s13, 3
    %p225 = pnand %p223, %p224
    %p226 = pneg %p225
    // Predicated region
    $region33: #{aae_step.1} parent=5 // pred_check
      _
    $region34: #{aae_step.1} parent=5 // pred_check_branch
      %228 = sbr.rel (%p225) target = $region36
    $region35: #{aae_step.1} parent=5 // pred_region
      %s229 = ssub.s32 %s13, 1
      %s230 = smul.u32 16, %s18
      %p231 = scmp.lt.s32.totalorder %s230, 31
      %s232 = scalar_select %p231, %s230, 31
      %s233 = smul.addr %s232, 8
      %s234 = scalar_lea.vmem %s0, %s233
      %p235 = pneg %p39
      %p236 = pneg %p36
      %s237 = smul.u32 16, %s18
      %p238 = scmp.lt.s32.totalorder %s237, 31
      %s239 = scalar_select %p238, %s237, 31
      %s240 = smul.addr %s239, 8
      %s241 = scalar_lea.vmem %s1, %s240
      %p242 = pneg %p65
      %p243 = pneg %p62
      %p244 = pneg %p86
      %p245 = pneg %p83
      %p246 = pneg %p107
      %p247 = pneg %p104
      %p248 = pneg %p133
      %p249 = pneg %p130
      %s250 = smul.u32 16, %s18
      %p251 = scmp.lt.s32.totalorder %s250, 31
      %s252 = scalar_select %p251, %s250, 31
      %s253 = smul.addr %s252, 8
      %s254 = scalar_lea.vmem %s4, %s253
      %p255 = pneg %p159
      %p256 = pneg %p156
      %s257 = smul.u32 16, %s18
      %p258 = scmp.lt.s32.totalorder %s257, 31
      %s259 = scalar_select %p258, %s257, 31
      %s260 = smul.addr %s259, 8
      %s261 = scalar_lea.vmem %s5, %s260
      %p262 = pneg %p180
      %p263 = pneg %p177
      %s264 = smul.u32 16, %s18
      %p265 = scmp.lt.s32.totalorder %s264, 31
      %s266 = scalar_select %p265, %s264, 31
      %s267 = smul.addr %s266, 8
      %s268 = scalar_lea.vmem %s0, %s267
      %s269 = smul.u32 16, %s18
      %s270 = smul.u32 16, %s18
      %p271 = scmp.lt.s32.totalorder %s270, 31
      %s272 = scalar_select %p271, %s270, 31
      %s273 = smul.addr %s272, 8
      %s274 = scalar_lea.vmem %s1, %s273
      %s275 = smul.u32 16, %s18
      %s276 = smul.u32 16, %s18
      %p277 = scmp.lt.s32.totalorder %s276, 31
      %s278 = scalar_select %p277, %s276, 31
      %s279 = smul.addr %s278, 8
      %s280 = scalar_lea.vmem %s4, %s279
      %s281 = smul.u32 16, %s18
      %s282 = smul.u32 16, %s18
      %p283 = scmp.lt.s32.totalorder %s282, 31
      %s284 = scalar_select %p283, %s282, 31
      %s285 = smul.addr %s284, 8
      %s286 = scalar_lea.vmem %s5, %s285
      %s287 = smul.u32 16, %s18
      %p288 = scmp.eq.s32.totalorder %s18, 0
      // Predicated region
      $region37: #{aae_step.1} parent=35 // pred_check
        %p289 = pneg %p288
      $region38: #{aae_step.1} parent=35 // pred_check_branch
        %291 = sbr.rel (%p289) target = $region40
      $region39: #{aae_step.1} parent=35 // pred_region
        %s292 = scalar_lea.smem [#allocation2], 0
        %293 = sst [smem:[%s292]] 0.0
        %s294 = scalar_lea.smem [#allocation2], 1
        %295 = sst [smem:[%s294]] 0.0
        %s296 = scalar_lea.smem [#allocation2], 2
        %297 = sst [smem:[%s296]] 0.0
        %s298 = scalar_lea.smem [#allocation2], 3
        %299 = sst [smem:[%s298]] 0.0
      $region40: #{aae_step.1} parent=35 // pred_fallthru
        _
      %v300 = vld [vmem:[%s268] sm:$0xff]
      %v301 = vld [vmem:[%s268 + $0x8] sm:$0xff]
      %v302 = vld [vmem:[%s268 + $0x10] sm:$0xff]
      %v303 = vld [vmem:[%s268 + $0x18] sm:$0xff]
      %v304 = vld [vmem:[%s268 + $0x20] sm:$0xff]
      %v305 = vld [vmem:[%s268 + $0x28] sm:$0xff]
      %v306 = vld [vmem:[%s268 + $0x30] sm:$0xff]
      %v307 = vld [vmem:[%s268 + $0x38] sm:$0xff]
      %v308 = vld [vmem:[%s268 + $0x40] sm:$0xff]
      %v309 = vld [vmem:[%s268 + $0x48] sm:$0xff]
      %v310 = vld [vmem:[%s268 + $0x50] sm:$0xff]
      %v311 = vld [vmem:[%s268 + $0x58] sm:$0xff]
      %v312 = vld [vmem:[%s268 + $0x60] sm:$0xff]
      %v313 = vld [vmem:[%s268 + $0x68] sm:$0xff]
      %v314 = vld [vmem:[%s268 + $0x70] sm:$0xff]
      %v315 = vld [vmem:[%s268 + $0x78] sm:$0xff]
      %v316 = vld [vmem:[%s274] sm:$0xff]
      %v317 = vld [vmem:[%s274 + $0x8] sm:$0xff]
      %v318 = vld [vmem:[%s274 + $0x10] sm:$0xff]
      %v319 = vld [vmem:[%s274 + $0x18] sm:$0xff]
      %v320 = vld [vmem:[%s274 + $0x20] sm:$0xff]
      %v321 = vld [vmem:[%s274 + $0x28] sm:$0xff]
      %v322 = vld [vmem:[%s274 + $0x30] sm:$0xff]
      %v323 = vld [vmem:[%s274 + $0x38] sm:$0xff]
      %v324 = vld [vmem:[%s274 + $0x40] sm:$0xff]
      %v325 = vld [vmem:[%s274 + $0x48] sm:$0xff]
      %v326 = vld [vmem:[%s274 + $0x50] sm:$0xff]
      %v327 = vld [vmem:[%s274 + $0x58] sm:$0xff]
      %v328 = vld [vmem:[%s274 + $0x60] sm:$0xff]
      %v329 = vld [vmem:[%s274 + $0x68] sm:$0xff]
      %v330 = vld [vmem:[%s274 + $0x70] sm:$0xff]
      %v331 = vld [vmem:[%s274 + $0x78] sm:$0xff]
      %v332 = vld [vmem:[%s2] sm:$0xff]
      %v333 = vld [vmem:[%s2 + $0x8] sm:$0xff]
      %v334 = vld [vmem:[%s2 + $0x10] sm:$0xff]
      %v335 = vld [vmem:[%s2 + $0x18] sm:$0xff]
      %v336 = vld [vmem:[%s2 + $0x20] sm:$0xff]
      %v337 = vld [vmem:[%s2 + $0x28] sm:$0xff]
      %v338 = vld [vmem:[%s2 + $0x30] sm:$0xff]
      %v339 = vld [vmem:[%s2 + $0x38] sm:$0xff]
      %v340 = vld [vmem:[%s2 + $0x40] sm:$0xff]
      %v341 = vld [vmem:[%s2 + $0x48] sm:$0xff]
      %v342 = vld [vmem:[%s2 + $0x50] sm:$0xff]
      %v343 = vld [vmem:[%s2 + $0x58] sm:$0xff]
      %v344 = vld [vmem:[%s2 + $0x60] sm:$0xff]
      %v345 = vld [vmem:[%s2 + $0x68] sm:$0xff]
      %v346 = vld [vmem:[%s2 + $0x70] sm:$0xff]
      %v347 = vld [vmem:[%s2 + $0x78] sm:$0xff]
      %s348 = scalar_lea.vmem %s2, 128
      %v349 = vld [vmem:[%s348] sm:$0xff]
      %v350 = vld [vmem:[%s348 + $0x8] sm:$0xff]
      %v351 = vld [vmem:[%s348 + $0x10] sm:$0xff]
      %v352 = vld [vmem:[%s348 + $0x18] sm:$0xff]
      %v353 = vld [vmem:[%s348 + $0x20] sm:$0xff]
      %v354 = vld [vmem:[%s348 + $0x28] sm:$0xff]
      %v355 = vld [vmem:[%s348 + $0x30] sm:$0xff]
      %v356 = vld [vmem:[%s348 + $0x38] sm:$0xff]
      %v357 = vld [vmem:[%s348 + $0x40] sm:$0xff]
      %v358 = vld [vmem:[%s348 + $0x48] sm:$0xff]
      %v359 = vld [vmem:[%s348 + $0x50] sm:$0xff]
      %v360 = vld [vmem:[%s348 + $0x58] sm:$0xff]
      %v361 = vld [vmem:[%s348 + $0x60] sm:$0xff]
      %v362 = vld [vmem:[%s348 + $0x68] sm:$0xff]
      %v363 = vld [vmem:[%s348 + $0x70] sm:$0xff]
      %v364 = vld [vmem:[%s348 + $0x78] sm:$0xff]
      %s365 = scalar_lea.vmem %s2, 256
      %v366 = vld [vmem:[%s365] sm:$0xff]
      %v367 = vld [vmem:[%s365 + $0x8] sm:$0xff]
      %v368 = vld [vmem:[%s365 + $0x10] sm:$0xff]
      %v369 = vld [vmem:[%s365 + $0x18] sm:$0xff]
      %v370 = vld [vmem:[%s365 + $0x20] sm:$0xff]
      %v371 = vld [vmem:[%s365 + $0x28] sm:$0xff]
      %v372 = vld [vmem:[%s365 + $0x30] sm:$0xff]
      %v373 = vld [vmem:[%s365 + $0x38] sm:$0xff]
      %v374 = vld [vmem:[%s365 + $0x40] sm:$0xff]
      %v375 = vld [vmem:[%s365 + $0x48] sm:$0xff]
      %v376 = vld [vmem:[%s365 + $0x50] sm:$0xff]
      %v377 = vld [vmem:[%s365 + $0x58] sm:$0xff]
      %v378 = vld [vmem:[%s365 + $0x60] sm:$0xff]
      %v379 = vld [vmem:[%s365 + $0x68] sm:$0xff]
      %v380 = vld [vmem:[%s365 + $0x70] sm:$0xff]
      %v381 = vld [vmem:[%s365 + $0x78] sm:$0xff]
      %s382 = scalar_lea.vmem %s2, 384
      %v383 = vld [vmem:[%s382] sm:$0xff]
      %v384 = vld [vmem:[%s382 + $0x8] sm:$0xff]
      %v385 = vld [vmem:[%s382 + $0x10] sm:$0xff]
      %v386 = vld [vmem:[%s382 + $0x18] sm:$0xff]
      %v387 = vld [vmem:[%s382 + $0x20] sm:$0xff]
      %v388 = vld [vmem:[%s382 + $0x28] sm:$0xff]
      %v389 = vld [vmem:[%s382 + $0x30] sm:$0xff]
      %v390 = vld [vmem:[%s382 + $0x38] sm:$0xff]
      %v391 = vld [vmem:[%s382 + $0x40] sm:$0xff]
      %v392 = vld [vmem:[%s382 + $0x48] sm:$0xff]
      %v393 = vld [vmem:[%s382 + $0x50] sm:$0xff]
      %v394 = vld [vmem:[%s382 + $0x58] sm:$0xff]
      %v395 = vld [vmem:[%s382 + $0x60] sm:$0xff]
      %v396 = vld [vmem:[%s382 + $0x68] sm:$0xff]
      %v397 = vld [vmem:[%s382 + $0x70] sm:$0xff]
      %v398 = vld [vmem:[%s382 + $0x78] sm:$0xff]
      %s399 = scalar_lea.vmem %s2, 512
      %v400 = vld [vmem:[%s399] sm:$0xff]
      %v401 = vld [vmem:[%s399 + $0x8] sm:$0xff]
      %v402 = vld [vmem:[%s399 + $0x10] sm:$0xff]
      %v403 = vld [vmem:[%s399 + $0x18] sm:$0xff]
      %v404 = vld [vmem:[%s399 + $0x20] sm:$0xff]
      %v405 = vld [vmem:[%s399 + $0x28] sm:$0xff]
      %v406 = vld [vmem:[%s399 + $0x30] sm:$0xff]
      %v407 = vld [vmem:[%s399 + $0x38] sm:$0xff]
      %v408 = vld [vmem:[%s399 + $0x40] sm:$0xff]
      %v409 = vld [vmem:[%s399 + $0x48] sm:$0xff]
      %v410 = vld [vmem:[%s399 + $0x50] sm:$0xff]
      %v411 = vld [vmem:[%s399 + $0x58] sm:$0xff]
      %v412 = vld [vmem:[%s399 + $0x60] sm:$0xff]
      %v413 = vld [vmem:[%s399 + $0x68] sm:$0xff]
      %v414 = vld [vmem:[%s399 + $0x70] sm:$0xff]
      %v415 = vld [vmem:[%s399 + $0x78] sm:$0xff]
      %s416 = scalar_lea.vmem %s2, 640
      %v417 = vld [vmem:[%s416] sm:$0xff]
      %v418 = vld [vmem:[%s416 + $0x8] sm:$0xff]
      %v419 = vld [vmem:[%s416 + $0x10] sm:$0xff]
      %v420 = vld [vmem:[%s416 + $0x18] sm:$0xff]
      %v421 = vld [vmem:[%s416 + $0x20] sm:$0xff]
      %v422 = vld [vmem:[%s416 + $0x28] sm:$0xff]
      %v423 = vld [vmem:[%s416 + $0x30] sm:$0xff]
      %v424 = vld [vmem:[%s416 + $0x38] sm:$0xff]
      %v425 = vld [vmem:[%s416 + $0x40] sm:$0xff]
      %v426 = vld [vmem:[%s416 + $0x48] sm:$0xff]
      %v427 = vld [vmem:[%s416 + $0x50] sm:$0xff]
      %v428 = vld [vmem:[%s416 + $0x58] sm:$0xff]
      %v429 = vld [vmem:[%s416 + $0x60] sm:$0xff]
      %v430 = vld [vmem:[%s416 + $0x68] sm:$0xff]
      %v431 = vld [vmem:[%s416 + $0x70] sm:$0xff]
      %v432 = vld [vmem:[%s416 + $0x78] sm:$0xff]
      %s433 = scalar_lea.vmem %s2, 768
      %v434 = vld [vmem:[%s433] sm:$0xff]
      %v435 = vld [vmem:[%s433 + $0x8] sm:$0xff]
      %v436 = vld [vmem:[%s433 + $0x10] sm:$0xff]
      %v437 = vld [vmem:[%s433 + $0x18] sm:$0xff]
      %v438 = vld [vmem:[%s433 + $0x20] sm:$0xff]
      %v439 = vld [vmem:[%s433 + $0x28] sm:$0xff]
      %v440 = vld [vmem:[%s433 + $0x30] sm:$0xff]
      %v441 = vld [vmem:[%s433 + $0x38] sm:$0xff]
      %v442 = vld [vmem:[%s433 + $0x40] sm:$0xff]
      %v443 = vld [vmem:[%s433 + $0x48] sm:$0xff]
      %v444 = vld [vmem:[%s433 + $0x50] sm:$0xff]
      %v445 = vld [vmem:[%s433 + $0x58] sm:$0xff]
      %v446 = vld [vmem:[%s433 + $0x60] sm:$0xff]
      %v447 = vld [vmem:[%s433 + $0x68] sm:$0xff]
      %v448 = vld [vmem:[%s433 + $0x70] sm:$0xff]
      %v449 = vld [vmem:[%s433 + $0x78] sm:$0xff]
      %v450 = vld [vmem:[%s3] sm:$0x1]
      %v451 = vld [vmem:[%s3 + $0x1] sm:$0x1]
      %v452 = vld [vmem:[%s3 + $0x2] sm:$0x1]
      %v453 = vld [vmem:[%s3 + $0x3] sm:$0x1]
      %v454 = vld [vmem:[%s3 + $0x4] sm:$0x1]
      %v455 = vld [vmem:[%s3 + $0x5] sm:$0x1]
      %v456 = vld [vmem:[%s3 + $0x6] sm:$0x1]
      %457 = vmatprep.subr.mxu0 0.0
      %458 = vmatpush1.msra.mxu0 %v332
      %459 = vmatprep.subr.mxu0 0.0
      %460 = vmatpush1.msra.mxu0 %v333
      %461 = vmatprep.subr.mxu0 0.0
      %462 = vmatpush1.msra.mxu0 %v334
      %463 = vmatprep.subr.mxu0 0.0
      %464 = vmatpush1.msra.mxu0 %v335
      %465 = vmatprep.subr.mxu0 0.0
      %466 = vmatpush1.msra.mxu0 %v336
      %467 = vmatprep.subr.mxu0 0.0
      %468 = vmatpush1.msra.mxu0 %v337
      %469 = vmatprep.subr.mxu0 0.0
      %470 = vmatpush1.msra.mxu0 %v338
      %471 = vmatprep.subr.mxu0 0.0
      %472 = vmatpush1.msra.mxu0 %v339
      %473 = vmatprep.subr.mxu0 0.0
      %474 = vmatpush1.msra.mxu0 %v340
      %475 = vmatprep.subr.mxu0 0.0
      %476 = vmatpush1.msra.mxu0 %v341
      %477 = vmatprep.subr.mxu0 0.0
      %478 = vmatpush1.msra.mxu0 %v342
      %479 = vmatprep.subr.mxu0 0.0
      %480 = vmatpush1.msra.mxu0 %v343
      %481 = vmatprep.subr.mxu0 0.0
      %482 = vmatpush1.msra.mxu0 %v344
      %483 = vmatprep.subr.mxu0 0.0
      %484 = vmatpush1.msra.mxu0 %v345
      %485 = vmatprep.subr.mxu0 0.0
      %486 = vmatpush1.msra.mxu0 %v346
      %487 = vmatprep.subr.mxu0 0.0
      %488 = vmatpush1.msra.mxu0 %v347
      %489 = vmatprep.subr.mxu0 0.0
      %490 = vmatpush1.msra.mxu0 0.0
      %491 = vmatprep.subr.mxu0 0.0
      %492 = vmatpush1.msra.mxu0 0.0
      %493 = vmatprep.subr.mxu0 0.0
      %494 = vmatpush1.msra.mxu0 0.0
      %495 = vmatprep.subr.mxu0 0.0
      %496 = vmatpush1.msra.mxu0 0.0
      %497 = vmatprep.subr.mxu0 0.0
      %498 = vmatpush1.msra.mxu0 0.0
      %499 = vmatprep.subr.mxu0 0.0
      %500 = vmatpush1.msra.mxu0 0.0
      %501 = vmatprep.subr.mxu0 0.0
      %502 = vmatpush1.msra.mxu0 0.0
      %503 = vmatprep.subr.mxu0 0.0
      %504 = vmatpush1.msra.mxu0 0.0
      %505 = vmatprep.subr.mxu0 0.0
      %506 = vmatpush1.msra.mxu0 0.0
      %507 = vmatprep.subr.mxu0 0.0
      %508 = vmatpush1.msra.mxu0 0.0
      %509 = vmatprep.subr.mxu0 0.0
      %510 = vmatpush1.msra.mxu0 0.0
      %511 = vmatprep.subr.mxu0 0.0
      %512 = vmatpush1.msra.mxu0 0.0
      %513 = vmatprep.subr.mxu0 0.0
      %514 = vmatpush1.msra.mxu0 0.0
      %515 = vmatprep.subr.mxu0 0.0
      %516 = vmatpush1.msra.mxu0 0.0
      %517 = vmatprep.subr.mxu0 0.0
      %518 = vmatpush1.msra.mxu0 0.0
      %519 = vmatprep.subr.mxu0 0.0
      %520 = vmatpush1.msra.mxu0 0.0
      %521 = vmatprep.mubr.f32.mxu0 0.0
      %522 = vmatmul.mubr.f32.gmra.mrb[0].mxu0 %v300
      %v523 = vpop.f32.mrb[0].mxu0
      %v524 = vadd.f32 0.0, %v523
      %v525 = vpop.f32.mrb[0].mxu0
      %526 = vmatprep.mubr.f32.mxu0 0.0
      %527 = vmatmul.mubr.f32.gmra.mrb[0].mxu0 %v301
      %v528 = vpop.f32.mrb[0].mxu0
      %v529 = vadd.f32 0.0, %v528
      %v530 = vpop.f32.mrb[0].mxu0
      %531 = vmatprep.mubr.f32.mxu0 0.0
      %532 = vmatmul.mubr.f32.gmra.mrb[0].mxu0 %v302
      %v533 = vpop.f32.mrb[0].mxu0
      %v534 = vadd.f32 0.0, %v533
      %v535 = vpop.f32.mrb[0].mxu0
      %536 = vmatprep.mubr.f32.mxu0 0.0
      %537 = vmatmul.mubr.f32.gmra.mrb[0].mxu0 %v303
      %v538 = vpop.f32.mrb[0].mxu0
      %v539 = vadd.f32 0.0, %v538
      %v540 = vpop.f32.mrb[0].mxu0
      %541 = vmatprep.mubr.f32.mxu0 0.0
      %542 = vmatmul.mubr.f32.gmra.mrb[0].mxu0 %v304
      %v543 = vpop.f32.mrb[0].mxu0
      %v544 = vadd.f32 0.0, %v543
      %v545 = vpop.f32.mrb[0].mxu0
      %546 = vmatprep.mubr.f32.mxu0 0.0
      %547 = vmatmul.mubr.f32.gmra.mrb[0].mxu0 %v305
      %v548 = vpop.f32.mrb[0].mxu0
      %v549 = vadd.f32 0.0, %v548
      %v550 = vpop.f32.mrb[0].mxu0
      %551 = vmatprep.mubr.f32.mxu0 0.0
      %552 = vmatmul.mubr.f32.gmra.mrb[0].mxu0 %v306
      %v553 = vpop.f32.mrb[0].mxu0
      %v554 = vadd.f32 0.0, %v553
      %v555 = vpop.f32.mrb[0].mxu0
      %556 = vmatprep.mubr.f32.mxu0 0.0
      %557 = vmatmul.mubr.f32.gmra.mrb[0].mxu0 %v307
      %v558 = vpop.f32.mrb[0].mxu0
      %v559 = vadd.f32 0.0, %v558
      %v560 = vpop.f32.mrb[0].mxu0
      %561 = vmatprep.mubr.f32.mxu0 0.0
      %562 = vmatmul.mubr.f32.gmra.mrb[0].mxu0 %v308
      %v563 = vpop.f32.mrb[0].mxu0
      %v564 = vadd.f32 0.0, %v563
      %v565 = vpop.f32.mrb[0].mxu0
      %566 = vmatprep.mubr.f32.mxu0 0.0
      %567 = vmatmul.mubr.f32.gmra.mrb[0].mxu0 %v309
      %v568 = vpop.f32.mrb[0].mxu0
      %v569 = vadd.f32 0.0, %v568
      %v570 = vpop.f32.mrb[0].mxu0
      %571 = vmatprep.mubr.f32.mxu0 0.0
      %572 = vmatmul.mubr.f32.gmra.mrb[0].mxu0 %v310
      %v573 = vpop.f32.mrb[0].mxu0
      %v574 = vadd.f32 0.0, %v573
      %v575 = vpop.f32.mrb[0].mxu0
      %576 = vmatprep.mubr.f32.mxu0 0.0
      %577 = vmatmul.mubr.f32.gmra.mrb[0].mxu0 %v311
      %v578 = vpop.f32.mrb[0].mxu0
      %v579 = vadd.f32 0.0, %v578
      %v580 = vpop.f32.mrb[0].mxu0
      %581 = vmatprep.mubr.f32.mxu0 0.0
      %582 = vmatmul.mubr.f32.gmra.mrb[0].mxu0 %v312
      %v583 = vpop.f32.mrb[0].mxu0
      %v584 = vadd.f32 0.0, %v583
      %v585 = vpop.f32.mrb[0].mxu0
      %586 = vmatprep.mubr.f32.mxu0 0.0
      %587 = vmatmul.mubr.f32.gmra.mrb[0].mxu0 %v313
      %v588 = vpop.f32.mrb[0].mxu0
      %v589 = vadd.f32 0.0, %v588
      %v590 = vpop.f32.mrb[0].mxu0
      %591 = vmatprep.mubr.f32.mxu0 0.0
      %592 = vmatmul.mubr.f32.gmra.mrb[0].mxu0 %v314
      %v593 = vpop.f32.mrb[0].mxu0
      %v594 = vadd.f32 0.0, %v593
      %v595 = vpop.f32.mrb[0].mxu0
      %596 = vmatprep.mubr.f32.mxu0 0.0
      %597 = vmatmul.mubr.f32.gmra.mrb[0].mxu0 %v315
      %v598 = vpop.f32.mrb[0].mxu0
      %v599 = vadd.f32 0.0, %v598
      %v600 = vpop.f32.mrb[0].mxu0
      %601 = vdwg.mxu0
      %v602 = vlaneseq
      %v603 = vshrl.u32 %v602, 7
      %v604 = vsub.s32 0, %v603
      %v605 = vrot.slane %v450, %v604
      %606 = vmatprep.subr.mxu0 0.0
      %607 = vmatpush1.msra.mxu0 %v349
      %608 = vmatprep.subr.mxu0 0.0
      %609 = vmatpush1.msra.mxu0 %v350
      %610 = vmatprep.subr.mxu0 0.0
      %611 = vmatpush1.msra.mxu0 %v351
      %612 = vmatprep.subr.mxu0 0.0
      %613 = vmatpush1.msra.mxu0 %v352
      %614 = vmatprep.subr.mxu0 0.0
      %615 = vmatpush1.msra.mxu0 %v353
      %616 = vmatprep.subr.mxu0 0.0
      %617 = vmatpush1.msra.mxu0 %v354
      %618 = vmatprep.subr.mxu0 0.0
      %619 = vmatpush1.msra.mxu0 %v355
      %620 = vmatprep.subr.mxu0 0.0
      %621 = vmatpush1.msra.mxu0 %v356
      %622 = vmatprep.subr.mxu0 0.0
      %623 = vmatpush1.msra.mxu0 %v357
      %624 = vmatprep.subr.mxu0 0.0
      %625 = vmatpush1.msra.mxu0 %v358
      %626 = vmatprep.subr.mxu0 0.0
      %627 = vmatpush1.msra.mxu0 %v359
      %628 = vmatprep.subr.mxu0 0.0
      %629 = vmatpush1.msra.mxu0 %v360
      %630 = vmatprep.subr.mxu0 0.0
      %631 = vmatpush1.msra.mxu0 %v361
      %632 = vmatprep.subr.mxu0 0.0
      %633 = vmatpush1.msra.mxu0 %v362
      %634 = vmatprep.subr.mxu0 0.0
      %635 = vmatpush1.msra.mxu0 %v363
      %636 = vmatprep.subr.mxu0 0.0
      %637 = vmatpush1.msra.mxu0 %v364
      %638 = vmatprep.subr.mxu0 0.0
      %639 = vmatpush1.msra.mxu0 0.0
      %640 = vmatprep.subr.mxu0 0.0
      %641 = vmatpush1.msra.mxu0 0.0
      %642 = vmatprep.subr.mxu0 0.0
      %643 = vmatpush1.msra.mxu0 0.0
      %644 = vmatprep.subr.mxu0 0.0
      %645 = vmatpush1.msra.mxu0 0.0
      %646 = vmatprep.subr.mxu0 0.0
      %647 = vmatpush1.msra.mxu0 0.0
      %648 = vmatprep.subr.mxu0 0.0
      %649 = vmatpush1.msra.mxu0 0.0
      %650 = vmatprep.subr.mxu0 0.0
      %651 = vmatpush1.msra.mxu0 0.0
      %652 = vmatprep.subr.mxu0 0.0
      %653 = vmatpush1.msra.mxu0 0.0
      %654 = vmatprep.subr.mxu0 0.0
      %655 = vmatpush1.msra.mxu0 0.0
      %656 = vmatprep.subr.mxu0 0.0
      %657 = vmatpush1.msra.mxu0 0.0
      %658 = vmatprep.subr.mxu0 0.0
      %659 = vmatpush1.msra.mxu0 0.0
      %660 = vmatprep.subr.mxu0 0.0
      %661 = vmatpush1.msra.mxu0 0.0
      %662 = vmatprep.subr.mxu0 0.0
      %663 = vmatpush1.msra.mxu0 0.0
      %664 = vmatprep.subr.mxu0 0.0
      %665 = vmatpush1.msra.mxu0 0.0
      %666 = vmatprep.subr.mxu0 0.0
      %667 = vmatpush1.msra.mxu0 0.0
      %668 = vmatprep.subr.mxu0 0.0
      %669 = vmatpush1.msra.mxu0 0.0
      %670 = vmatprep.mubr.f32.mxu0 0.0
      %671 = vmatmul.mubr.f32.gmra.mrb[0].mxu0 %v524
      %v672 = vpop.f32.mrb[0].mxu0
      %v673 = vadd.f32 %v605, %v672
      %v674 = vpop.f32.mrb[0].mxu0
      %675 = vmatprep.mubr.f32.mxu0 0.0
      %676 = vmatmul.mubr.f32.gmra.mrb[0].mxu0 %v529
      %v677 = vpop.f32.mrb[0].mxu0
      %v678 = vadd.f32 %v605, %v677
      %v679 = vpop.f32.mrb[0].mxu0
      %680 = vmatprep.mubr.f32.mxu0 0.0
      %681 = vmatmul.mubr.f32.gmra.mrb[0].mxu0 %v534
      %v682 = vpop.f32.mrb[0].mxu0
      %v683 = vadd.f32 %v605, %v682
      %v684 = vpop.f32.mrb[0].mxu0
      %685 = vmatprep.mubr.f32.mxu0 0.0
      %686 = vmatmul.mubr.f32.gmra.mrb[0].mxu0 %v539
      %v687 = vpop.f32.mrb[0].mxu0
      %v688 = vadd.f32 %v605, %v687
      %v689 = vpop.f32.mrb[0].mxu0
      %690 = vmatprep.mubr.f32.mxu0 0.0
      %691 = vmatmul.mubr.f32.gmra.mrb[0].mxu0 %v544
      %v692 = vpop.f32.mrb[0].mxu0
      %v693 = vadd.f32 %v605, %v692
      %v694 = vpop.f32.mrb[0].mxu0
      %695 = vmatprep.mubr.f32.mxu0 0.0
      %696 = vmatmul.mubr.f32.gmra.mrb[0].mxu0 %v549
      %v697 = vpop.f32.mrb[0].mxu0
      %v698 = vadd.f32 %v605, %v697
      %v699 = vpop.f32.mrb[0].mxu0
      %700 = vmatprep.mubr.f32.mxu0 0.0
      %701 = vmatmul.mubr.f32.gmra.mrb[0].mxu0 %v554
      %v702 = vpop.f32.mrb[0].mxu0
      %v703 = vadd.f32 %v605, %v702
      %v704 = vpop.f32.mrb[0].mxu0
      %705 = vmatprep.mubr.f32.mxu0 0.0
      %706 = vmatmul.mubr.f32.gmra.mrb[0].mxu0 %v559
      %v707 = vpop.f32.mrb[0].mxu0
      %v708 = vadd.f32 %v605, %v707
      %v709 = vpop.f32.mrb[0].mxu0
      %710 = vmatprep.mubr.f32.mxu0 0.0
      %711 = vmatmul.mubr.f32.gmra.mrb[0].mxu0 %v564
      %v712 = vpop.f32.mrb[0].mxu0
      %v713 = vadd.f32 %v605, %v712
      %v714 = vpop.f32.mrb[0].mxu0
      %715 = vmatprep.mubr.f32.mxu0 0.0
      %716 = vmatmul.mubr.f32.gmra.mrb[0].mxu0 %v569
      %v717 = vpop.f32.mrb[0].mxu0
      %v718 = vadd.f32 %v605, %v717
      %v719 = vpop.f32.mrb[0].mxu0
      %720 = vmatprep.mubr.f32.mxu0 0.0
      %721 = vmatmul.mubr.f32.gmra.mrb[0].mxu0 %v574
      %v722 = vpop.f32.mrb[0].mxu0
      %v723 = vadd.f32 %v605, %v722
      %v724 = vpop.f32.mrb[0].mxu0
      %725 = vmatprep.mubr.f32.mxu0 0.0
      %726 = vmatmul.mubr.f32.gmra.mrb[0].mxu0 %v579
      %v727 = vpop.f32.mrb[0].mxu0
      %v728 = vadd.f32 %v605, %v727
      %v729 = vpop.f32.mrb[0].mxu0
      %730 = vmatprep.mubr.f32.mxu0 0.0
      %731 = vmatmul.mubr.f32.gmra.mrb[0].mxu0 %v584
      %v732 = vpop.f32.mrb[0].mxu0
      %v733 = vadd.f32 %v605, %v732
      %v734 = vpop.f32.mrb[0].mxu0
      %735 = vmatprep.mubr.f32.mxu0 0.0
      %736 = vmatmul.mubr.f32.gmra.mrb[0].mxu0 %v589
      %v737 = vpop.f32.mrb[0].mxu0
      %v738 = vadd.f32 %v605, %v737
      %v739 = vpop.f32.mrb[0].mxu0
      %740 = vmatprep.mubr.f32.mxu0 0.0
      %741 = vmatmul.mubr.f32.gmra.mrb[0].mxu0 %v594
      %v742 = vpop.f32.mrb[0].mxu0
      %v743 = vadd.f32 %v605, %v742
      %v744 = vpop.f32.mrb[0].mxu0
      %745 = vmatprep.mubr.f32.mxu0 0.0
      %746 = vmatmul.mubr.f32.gmra.mrb[0].mxu0 %v599
      %v747 = vpop.f32.mrb[0].mxu0
      %v748 = vadd.f32 %v605, %v747
      %v749 = vpop.f32.mrb[0].mxu0
      %750 = vdwg.mxu0
      %v751 = vtanh.pop %v673
      %v752 = vtanh.pop %v678
      %v753 = vtanh.pop %v683
      %v754 = vtanh.pop %v688
      %v755 = vtanh.pop %v693
      %v756 = vtanh.pop %v698
      %v757 = vtanh.pop %v703
      %v758 = vtanh.pop %v708
      %v759 = vtanh.pop %v713
      %v760 = vtanh.pop %v718
      %v761 = vtanh.pop %v723
      %v762 = vtanh.pop %v728
      %v763 = vtanh.pop %v733
      %v764 = vtanh.pop %v738
      %v765 = vtanh.pop %v743
      %v766 = vtanh.pop %v748
      %v767 = vlaneseq
      %v768 = vshrl.u32 %v767, 7
      %v769 = vsub.s32 0, %v768
      %v770 = vrot.slane %v451, %v769
      %771 = vmatprep.subr.mxu0 0.0
      %772 = vmatpush1.msra.mxu0 %v366
      %773 = vmatprep.subr.mxu0 0.0
      %774 = vmatpush1.msra.mxu0 %v367
      %775 = vmatprep.subr.mxu0 0.0
      %776 = vmatpush1.msra.mxu0 %v368
      %777 = vmatprep.subr.mxu0 0.0
      %778 = vmatpush1.msra.mxu0 %v369
      %779 = vmatprep.subr.mxu0 0.0
      %780 = vmatpush1.msra.mxu0 %v370
      %781 = vmatprep.subr.mxu0 0.0
      %782 = vmatpush1.msra.mxu0 %v371
      %783 = vmatprep.subr.mxu0 0.0
      %784 = vmatpush1.msra.mxu0 %v372
      %785 = vmatprep.subr.mxu0 0.0
      %786 = vmatpush1.msra.mxu0 %v373
      %787 = vmatprep.subr.mxu0 0.0
      %788 = vmatpush1.msra.mxu0 %v374
      %789 = vmatprep.subr.mxu0 0.0
      %790 = vmatpush1.msra.mxu0 %v375
      %791 = vmatprep.subr.mxu0 0.0
      %792 = vmatpush1.msra.mxu0 %v376
      %793 = vmatprep.subr.mxu0 0.0
      %794 = vmatpush1.msra.mxu0 %v377
      %795 = vmatprep.subr.mxu0 0.0
      %796 = vmatpush1.msra.mxu0 %v378
      %797 = vmatprep.subr.mxu0 0.0
      %798 = vmatpush1.msra.mxu0 %v379
      %799 = vmatprep.subr.mxu0 0.0
      %800 = vmatpush1.msra.mxu0 %v380
      %801 = vmatprep.subr.mxu0 0.0
      %802 = vmatpush1.msra.mxu0 %v381
      %803 = vmatprep.subr.mxu0 0.0
      %804 = vmatpush1.msra.mxu0 0.0
      %805 = vmatprep.subr.mxu0 0.0
      %806 = vmatpush1.msra.mxu0 0.0
      %807 = vmatprep.subr.mxu0 0.0
      %808 = vmatpush1.msra.mxu0 0.0
      %809 = vmatprep.subr.mxu0 0.0
      %810 = vmatpush1.msra.mxu0 0.0
      %811 = vmatprep.subr.mxu0 0.0
      %812 = vmatpush1.msra.mxu0 0.0
      %813 = vmatprep.subr.mxu0 0.0
      %814 = vmatpush1.msra.mxu0 0.0
      %815 = vmatprep.subr.mxu0 0.0
      %816 = vmatpush1.msra.mxu0 0.0
      %817 = vmatprep.subr.mxu0 0.0
      %818 = vmatpush1.msra.mxu0 0.0
      %819 = vmatprep.subr.mxu0 0.0
      %820 = vmatpush1.msra.mxu0 0.0
      %821 = vmatprep.subr.mxu0 0.0
      %822 = vmatpush1.msra.mxu0 0.0
      %823 = vmatprep.subr.mxu0 0.0
      %824 = vmatpush1.msra.mxu0 0.0
      %825 = vmatprep.subr.mxu0 0.0
      %826 = vmatpush1.msra.mxu0 0.0
      %827 = vmatprep.subr.mxu0 0.0
      %828 = vmatpush1.msra.mxu0 0.0
      %829 = vmatprep.subr.mxu0 0.0
      %830 = vmatpush1.msra.mxu0 0.0
      %831 = vmatprep.subr.mxu0 0.0
      %832 = vmatpush1.msra.mxu0 0.0
      %833 = vmatprep.subr.mxu0 0.0
      %834 = vmatpush1.msra.mxu0 0.0
      %835 = vmatprep.mubr.f32.mxu0 0.0
      %836 = vmatmul.mubr.f32.gmra.mrb[0].mxu0 %v751
      %v837 = vpop.f32.mrb[0].mxu0
      %v838 = vadd.f32 %v770, %v837
      %v839 = vpop.f32.mrb[0].mxu0
      %840 = vmatprep.mubr.f32.mxu0 0.0
      %841 = vmatmul.mubr.f32.gmra.mrb[0].mxu0 %v752
      %v842 = vpop.f32.mrb[0].mxu0
      %v843 = vadd.f32 %v770, %v842
      %v844 = vpop.f32.mrb[0].mxu0
      %845 = vmatprep.mubr.f32.mxu0 0.0
      %846 = vmatmul.mubr.f32.gmra.mrb[0].mxu0 %v753
      %v847 = vpop.f32.mrb[0].mxu0
      %v848 = vadd.f32 %v770, %v847
      %v849 = vpop.f32.mrb[0].mxu0
      %850 = vmatprep.mubr.f32.mxu0 0.0
      %851 = vmatmul.mubr.f32.gmra.mrb[0].mxu0 %v754
      %v852 = vpop.f32.mrb[0].mxu0
      %v853 = vadd.f32 %v770, %v852
      %v854 = vpop.f32.mrb[0].mxu0
      %855 = vmatprep.mubr.f32.mxu0 0.0
      %856 = vmatmul.mubr.f32.gmra.mrb[0].mxu0 %v755
      %v857 = vpop.f32.mrb[0].mxu0
      %v858 = vadd.f32 %v770, %v857
      %v859 = vpop.f32.mrb[0].mxu0
      %860 = vmatprep.mubr.f32.mxu0 0.0
      %861 = vmatmul.mubr.f32.gmra.mrb[0].mxu0 %v756
      %v862 = vpop.f32.mrb[0].mxu0
      %v863 = vadd.f32 %v770, %v862
      %v864 = vpop.f32.mrb[0].mxu0
      %865 = vmatprep.mubr.f32.mxu0 0.0
      %866 = vmatmul.mubr.f32.gmra.mrb[0].mxu0 %v757
      %v867 = vpop.f32.mrb[0].mxu0
      %v868 = vadd.f32 %v770, %v867
      %v869 = vpop.f32.mrb[0].mxu0
      %870 = vmatprep.mubr.f32.mxu0 0.0
      %871 = vmatmul.mubr.f32.gmra.mrb[0].mxu0 %v758
      %v872 = vpop.f32.mrb[0].mxu0
      %v873 = vadd.f32 %v770, %v872
      %v874 = vpop.f32.mrb[0].mxu0
      %875 = vmatprep.mubr.f32.mxu0 0.0
      %876 = vmatmul.mubr.f32.gmra.mrb[0].mxu0 %v759
      %v877 = vpop.f32.mrb[0].mxu0
      %v878 = vadd.f32 %v770, %v877
      %v879 = vpop.f32.mrb[0].mxu0
      %880 = vmatprep.mubr.f32.mxu0 0.0
      %881 = vmatmul.mubr.f32.gmra.mrb[0].mxu0 %v760
      %v882 = vpop.f32.mrb[0].mxu0
      %v883 = vadd.f32 %v770, %v882
      %v884 = vpop.f32.mrb[0].mxu0
      %885 = vmatprep.mubr.f32.mxu0 0.0
      %886 = vmatmul.mubr.f32.gmra.mrb[0].mxu0 %v761
      %v887 = vpop.f32.mrb[0].mxu0
      %v888 = vadd.f32 %v770, %v887
      %v889 = vpop.f32.mrb[0].mxu0
      %890 = vmatprep.mubr.f32.mxu0 0.0
      %891 = vmatmul.mubr.f32.gmra.mrb[0].mxu0 %v762
      %v892 = vpop.f32.mrb[0].mxu0
      %v893 = vadd.f32 %v770, %v892
      %v894 = vpop.f32.mrb[0].mxu0
      %895 = vmatprep.mubr.f32.mxu0 0.0
      %896 = vmatmul.mubr.f32.gmra.mrb[0].mxu0 %v763
      %v897 = vpop.f32.mrb[0].mxu0
      %v898 = vadd.f32 %v770, %v897
      %v899 = vpop.f32.mrb[0].mxu0
      %900 = vmatprep.mubr.f32.mxu0 0.0
      %901 = vmatmul.mubr.f32.gmra.mrb[0].mxu0 %v764
      %v902 = vpop.f32.mrb[0].mxu0
      %v903 = vadd.f32 %v770, %v902
      %v904 = vpop.f32.mrb[0].mxu0
      %905 = vmatprep.mubr.f32.mxu0 0.0
      %906 = vmatmul.mubr.f32.gmra.mrb[0].mxu0 %v765
      %v907 = vpop.f32.mrb[0].mxu0
      %v908 = vadd.f32 %v770, %v907
      %v909 = vpop.f32.mrb[0].mxu0
      %910 = vmatprep.mubr.f32.mxu0 0.0
      %911 = vmatmul.mubr.f32.gmra.mrb[0].mxu0 %v766
      %v912 = vpop.f32.mrb[0].mxu0
      %v913 = vadd.f32 %v770, %v912
      %v914 = vpop.f32.mrb[0].mxu0
      %915 = vdwg.mxu0
      %v916 = vlaneseq
      %v917 = vshrl.u32 %v916, 7
      %v918 = vsub.s32 0, %v917
      %v919 = vrot.slane %v452, %v918
      %920 = vmatprep.subr.mxu0 0.0
      %921 = vmatpush1.msra.mxu0 %v383
      %922 = vmatprep.subr.mxu0 0.0
      %923 = vmatpush1.msra.mxu0 %v384
      %924 = vmatprep.subr.mxu0 0.0
      %925 = vmatpush1.msra.mxu0 %v385
      %926 = vmatprep.subr.mxu0 0.0
      %927 = vmatpush1.msra.mxu0 %v386
      %928 = vmatprep.subr.mxu0 0.0
      %929 = vmatpush1.msra.mxu0 %v387
      %930 = vmatprep.subr.mxu0 0.0
      %931 = vmatpush1.msra.mxu0 %v388
      %932 = vmatprep.subr.mxu0 0.0
      %933 = vmatpush1.msra.mxu0 %v389
      %934 = vmatprep.subr.mxu0 0.0
      %935 = vmatpush1.msra.mxu0 %v390
      %936 = vmatprep.subr.mxu0 0.0
      %937 = vmatpush1.msra.mxu0 %v391
      %938 = vmatprep.subr.mxu0 0.0
      %939 = vmatpush1.msra.mxu0 %v392
      %940 = vmatprep.subr.mxu0 0.0
      %941 = vmatpush1.msra.mxu0 %v393
      %942 = vmatprep.subr.mxu0 0.0
      %943 = vmatpush1.msra.mxu0 %v394
      %944 = vmatprep.subr.mxu0 0.0
      %945 = vmatpush1.msra.mxu0 %v395
      %946 = vmatprep.subr.mxu0 0.0
      %947 = vmatpush1.msra.mxu0 %v396
      %948 = vmatprep.subr.mxu0 0.0
      %949 = vmatpush1.msra.mxu0 %v397
      %950 = vmatprep.subr.mxu0 0.0
      %951 = vmatpush1.msra.mxu0 %v398
      %952 = vmatprep.subr.mxu0 0.0
      %953 = vmatpush1.msra.mxu0 0.0
      %954 = vmatprep.subr.mxu0 0.0
      %955 = vmatpush1.msra.mxu0 0.0
      %956 = vmatprep.subr.mxu0 0.0
      %957 = vmatpush1.msra.mxu0 0.0
      %958 = vmatprep.subr.mxu0 0.0
      %959 = vmatpush1.msra.mxu0 0.0
      %960 = vmatprep.subr.mxu0 0.0
      %961 = vmatpush1.msra.mxu0 0.0
      %962 = vmatprep.subr.mxu0 0.0
      %963 = vmatpush1.msra.mxu0 0.0
      %964 = vmatprep.subr.mxu0 0.0
      %965 = vmatpush1.msra.mxu0 0.0
      %966 = vmatprep.subr.mxu0 0.0
      %967 = vmatpush1.msra.mxu0 0.0
      %968 = vmatprep.subr.mxu0 0.0
      %969 = vmatpush1.msra.mxu0 0.0
      %970 = vmatprep.subr.mxu0 0.0
      %971 = vmatpush1.msra.mxu0 0.0
      %972 = vmatprep.subr.mxu0 0.0
      %973 = vmatpush1.msra.mxu0 0.0
      %974 = vmatprep.subr.mxu0 0.0
      %975 = vmatpush1.msra.mxu0 0.0
      %976 = vmatprep.subr.mxu0 0.0
      %977 = vmatpush1.msra.mxu0 0.0
      %978 = vmatprep.subr.mxu0 0.0
      %979 = vmatpush1.msra.mxu0 0.0
      %980 = vmatprep.subr.mxu0 0.0
      %981 = vmatpush1.msra.mxu0 0.0
      %982 = vmatprep.subr.mxu0 0.0
      %983 = vmatpush1.msra.mxu0 0.0
      %984 = vmatprep.mubr.f32.mxu0 0.0
      %985 = vmatmul.mubr.f32.gmra.mrb[0].mxu0 %v838
      %v986 = vpop.f32.mrb[0].mxu0
      %v987 = vadd.f32 %v919, %v986
      %v988 = vpop.f32.mrb[0].mxu0
      %989 = vmatprep.mubr.f32.mxu0 0.0
      %990 = vmatmul.mubr.f32.gmra.mrb[0].mxu0 %v843
      %v991 = vpop.f32.mrb[0].mxu0
      %v992 = vadd.f32 %v919, %v991
      %v993 = vpop.f32.mrb[0].mxu0
      %994 = vmatprep.mubr.f32.mxu0 0.0
      %995 = vmatmul.mubr.f32.gmra.mrb[0].mxu0 %v848
      %v996 = vpop.f32.mrb[0].mxu0
      %v997 = vadd.f32 %v919, %v996
      %v998 = vpop.f32.mrb[0].mxu0
      %999 = vmatprep.mubr.f32.mxu0 0.0
      %1000 = vmatmul.mubr.f32.gmra.mrb[0].mxu0 %v853
      %v1001 = vpop.f32.mrb[0].mxu0
      %v1002 = vadd.f32 %v919, %v1001
      %v1003 = vpop.f32.mrb[0].mxu0
      %1004 = vmatprep.mubr.f32.mxu0 0.0
      %1005 = vmatmul.mubr.f32.gmra.mrb[0].mxu0 %v858
      %v1006 = vpop.f32.mrb[0].mxu0
      %v1007 = vadd.f32 %v919, %v1006
      %v1008 = vpop.f32.mrb[0].mxu0
      %1009 = vmatprep.mubr.f32.mxu0 0.0
      %1010 = vmatmul.mubr.f32.gmra.mrb[0].mxu0 %v863
      %v1011 = vpop.f32.mrb[0].mxu0
      %v1012 = vadd.f32 %v919, %v1011
      %v1013 = vpop.f32.mrb[0].mxu0
      %1014 = vmatprep.mubr.f32.mxu0 0.0
      %1015 = vmatmul.mubr.f32.gmra.mrb[0].mxu0 %v868
      %v1016 = vpop.f32.mrb[0].mxu0
      %v1017 = vadd.f32 %v919, %v1016
      %v1018 = vpop.f32.mrb[0].mxu0
      %1019 = vmatprep.mubr.f32.mxu0 0.0
      %1020 = vmatmul.mubr.f32.gmra.mrb[0].mxu0 %v873
      %v1021 = vpop.f32.mrb[0].mxu0
      %v1022 = vadd.f32 %v919, %v1021
      %v1023 = vpop.f32.mrb[0].mxu0
      %1024 = vmatprep.mubr.f32.mxu0 0.0
      %1025 = vmatmul.mubr.f32.gmra.mrb[0].mxu0 %v878
      %v1026 = vpop.f32.mrb[0].mxu0
      %v1027 = vadd.f32 %v919, %v1026
      %v1028 = vpop.f32.mrb[0].mxu0
      %1029 = vmatprep.mubr.f32.mxu0 0.0
      %1030 = vmatmul.mubr.f32.gmra.mrb[0].mxu0 %v883
      %v1031 = vpop.f32.mrb[0].mxu0
      %v1032 = vadd.f32 %v919, %v1031
      %v1033 = vpop.f32.mrb[0].mxu0
      %1034 = vmatprep.mubr.f32.mxu0 0.0
      %1035 = vmatmul.mubr.f32.gmra.mrb[0].mxu0 %v888
      %v1036 = vpop.f32.mrb[0].mxu0
      %v1037 = vadd.f32 %v919, %v1036
      %v1038 = vpop.f32.mrb[0].mxu0
      %1039 = vmatprep.mubr.f32.mxu0 0.0
      %1040 = vmatmul.mubr.f32.gmra.mrb[0].mxu0 %v893
      %v1041 = vpop.f32.mrb[0].mxu0
      %v1042 = vadd.f32 %v919, %v1041
      %v1043 = vpop.f32.mrb[0].mxu0
      %1044 = vmatprep.mubr.f32.mxu0 0.0
      %1045 = vmatmul.mubr.f32.gmra.mrb[0].mxu0 %v898
      %v1046 = vpop.f32.mrb[0].mxu0
      %v1047 = vadd.f32 %v919, %v1046
      %v1048 = vpop.f32.mrb[0].mxu0
      %1049 = vmatprep.mubr.f32.mxu0 0.0
      %1050 = vmatmul.mubr.f32.gmra.mrb[0].mxu0 %v903
      %v1051 = vpop.f32.mrb[0].mxu0
      %v1052 = vadd.f32 %v919, %v1051
      %v1053 = vpop.f32.mrb[0].mxu0
      %1054 = vmatprep.mubr.f32.mxu0 0.0
      %1055 = vmatmul.mubr.f32.gmra.mrb[0].mxu0 %v908
      %v1056 = vpop.f32.mrb[0].mxu0
      %v1057 = vadd.f32 %v919, %v1056
      %v1058 = vpop.f32.mrb[0].mxu0
      %1059 = vmatprep.mubr.f32.mxu0 0.0
      %1060 = vmatmul.mubr.f32.gmra.mrb[0].mxu0 %v913
      %v1061 = vpop.f32.mrb[0].mxu0
      %v1062 = vadd.f32 %v919, %v1061
      %v1063 = vpop.f32.mrb[0].mxu0
      %1064 = vdwg.mxu0
      %v1065 = vtanh.pop %v987
      %v1066 = vtanh.pop %v992
      %v1067 = vtanh.pop %v997
      %v1068 = vtanh.pop %v1002
      %v1069 = vtanh.pop %v1007
      %v1070 = vtanh.pop %v1012
      %v1071 = vtanh.pop %v1017
      %v1072 = vtanh.pop %v1022
      %v1073 = vtanh.pop %v1027
      %v1074 = vtanh.pop %v1032
      %v1075 = vtanh.pop %v1037
      %v1076 = vtanh.pop %v1042
      %v1077 = vtanh.pop %v1047
      %v1078 = vtanh.pop %v1052
      %v1079 = vtanh.pop %v1057
      %v1080 = vtanh.pop %v1062
      %v1081 = vlaneseq
      %v1082 = vshrl.u32 %v1081, 7
      %v1083 = vsub.s32 0, %v1082
      %v1084 = vrot.slane %v453, %v1083
      %1085 = vmatprep.subr.mxu0 0.0
      %1086 = vmatpush1.msra.mxu0 %v400
      %1087 = vmatprep.subr.mxu0 0.0
      %1088 = vmatpush1.msra.mxu0 %v401
      %1089 = vmatprep.subr.mxu0 0.0
      %1090 = vmatpush1.msra.mxu0 %v402
      %1091 = vmatprep.subr.mxu0 0.0
      %1092 = vmatpush1.msra.mxu0 %v403
      %1093 = vmatprep.subr.mxu0 0.0
      %1094 = vmatpush1.msra.mxu0 %v404
      %1095 = vmatprep.subr.mxu0 0.0
      %1096 = vmatpush1.msra.mxu0 %v405
      %1097 = vmatprep.subr.mxu0 0.0
      %1098 = vmatpush1.msra.mxu0 %v406
      %1099 = vmatprep.subr.mxu0 0.0
      %1100 = vmatpush1.msra.mxu0 %v407
      %1101 = vmatprep.subr.mxu0 0.0
      %1102 = vmatpush1.msra.mxu0 %v408
      %1103 = vmatprep.subr.mxu0 0.0
      %1104 = vmatpush1.msra.mxu0 %v409
      %1105 = vmatprep.subr.mxu0 0.0
      %1106 = vmatpush1.msra.mxu0 %v410
      %1107 = vmatprep.subr.mxu0 0.0
      %1108 = vmatpush1.msra.mxu0 %v411
      %1109 = vmatprep.subr.mxu0 0.0
      %1110 = vmatpush1.msra.mxu0 %v412
      %1111 = vmatprep.subr.mxu0 0.0
      %1112 = vmatpush1.msra.mxu0 %v413
      %1113 = vmatprep.subr.mxu0 0.0
      %1114 = vmatpush1.msra.mxu0 %v414
      %1115 = vmatprep.subr.mxu0 0.0
      %1116 = vmatpush1.msra.mxu0 %v415
      %1117 = vmatprep.subr.mxu0 0.0
      %1118 = vmatpush1.msra.mxu0 0.0
      %1119 = vmatprep.subr.mxu0 0.0
      %1120 = vmatpush1.msra.mxu0 0.0
      %1121 = vmatprep.subr.mxu0 0.0
      %1122 = vmatpush1.msra.mxu0 0.0
      %1123 = vmatprep.subr.mxu0 0.0
      %1124 = vmatpush1.msra.mxu0 0.0
      %1125 = vmatprep.subr.mxu0 0.0
      %1126 = vmatpush1.msra.mxu0 0.0
      %1127 = vmatprep.subr.mxu0 0.0
      %1128 = vmatpush1.msra.mxu0 0.0
      %1129 = vmatprep.subr.mxu0 0.0
      %1130 = vmatpush1.msra.mxu0 0.0
      %1131 = vmatprep.subr.mxu0 0.0
      %1132 = vmatpush1.msra.mxu0 0.0
      %1133 = vmatprep.subr.mxu0 0.0
      %1134 = vmatpush1.msra.mxu0 0.0
      %1135 = vmatprep.subr.mxu0 0.0
      %1136 = vmatpush1.msra.mxu0 0.0
      %1137 = vmatprep.subr.mxu0 0.0
      %1138 = vmatpush1.msra.mxu0 0.0
      %1139 = vmatprep.subr.mxu0 0.0
      %1140 = vmatpush1.msra.mxu0 0.0
      %1141 = vmatprep.subr.mxu0 0.0
      %1142 = vmatpush1.msra.mxu0 0.0
      %1143 = vmatprep.subr.mxu0 0.0
      %1144 = vmatpush1.msra.mxu0 0.0
      %1145 = vmatprep.subr.mxu0 0.0
      %1146 = vmatpush1.msra.mxu0 0.0
      %1147 = vmatprep.subr.mxu0 0.0
      %1148 = vmatpush1.msra.mxu0 0.0
      %1149 = vmatprep.mubr.f32.mxu0 0.0
      %1150 = vmatmul.mubr.f32.gmra.mrb[0].mxu0 %v1065
      %v1151 = vpop.f32.mrb[0].mxu0
      %v1152 = vadd.f32 %v1084, %v1151
      %v1153 = vpop.f32.mrb[0].mxu0
      %1154 = vmatprep.mubr.f32.mxu0 0.0
      %1155 = vmatmul.mubr.f32.gmra.mrb[0].mxu0 %v1066
      %v1156 = vpop.f32.mrb[0].mxu0
      %v1157 = vadd.f32 %v1084, %v1156
      %v1158 = vpop.f32.mrb[0].mxu0
      %1159 = vmatprep.mubr.f32.mxu0 0.0
      %1160 = vmatmul.mubr.f32.gmra.mrb[0].mxu0 %v1067
      %v1161 = vpop.f32.mrb[0].mxu0
      %v1162 = vadd.f32 %v1084, %v1161
      %v1163 = vpop.f32.mrb[0].mxu0
      %1164 = vmatprep.mubr.f32.mxu0 0.0
      %1165 = vmatmul.mubr.f32.gmra.mrb[0].mxu0 %v1068
      %v1166 = vpop.f32.mrb[0].mxu0
      %v1167 = vadd.f32 %v1084, %v1166
      %v1168 = vpop.f32.mrb[0].mxu0
      %1169 = vmatprep.mubr.f32.mxu0 0.0
      %1170 = vmatmul.mubr.f32.gmra.mrb[0].mxu0 %v1069
      %v1171 = vpop.f32.mrb[0].mxu0
      %v1172 = vadd.f32 %v1084, %v1171
      %v1173 = vpop.f32.mrb[0].mxu0
      %1174 = vmatprep.mubr.f32.mxu0 0.0
      %1175 = vmatmul.mubr.f32.gmra.mrb[0].mxu0 %v1070
      %v1176 = vpop.f32.mrb[0].mxu0
      %v1177 = vadd.f32 %v1084, %v1176
      %v1178 = vpop.f32.mrb[0].mxu0
      %1179 = vmatprep.mubr.f32.mxu0 0.0
      %1180 = vmatmul.mubr.f32.gmra.mrb[0].mxu0 %v1071
      %v1181 = vpop.f32.mrb[0].mxu0
      %v1182 = vadd.f32 %v1084, %v1181
      %v1183 = vpop.f32.mrb[0].mxu0
      %1184 = vmatprep.mubr.f32.mxu0 0.0
      %1185 = vmatmul.mubr.f32.gmra.mrb[0].mxu0 %v1072
      %v1186 = vpop.f32.mrb[0].mxu0
      %v1187 = vadd.f32 %v1084, %v1186
      %v1188 = vpop.f32.mrb[0].mxu0
      %1189 = vmatprep.mubr.f32.mxu0 0.0
      %1190 = vmatmul.mubr.f32.gmra.mrb[0].mxu0 %v1073
      %v1191 = vpop.f32.mrb[0].mxu0
      %v1192 = vadd.f32 %v1084, %v1191
      %v1193 = vpop.f32.mrb[0].mxu0
      %1194 = vmatprep.mubr.f32.mxu0 0.0
      %1195 = vmatmul.mubr.f32.gmra.mrb[0].mxu0 %v1074
      %v1196 = vpop.f32.mrb[0].mxu0
      %v1197 = vadd.f32 %v1084, %v1196
      %v1198 = vpop.f32.mrb[0].mxu0
      %1199 = vmatprep.mubr.f32.mxu0 0.0
      %1200 = vmatmul.mubr.f32.gmra.mrb[0].mxu0 %v1075
      %v1201 = vpop.f32.mrb[0].mxu0
      %v1202 = vadd.f32 %v1084, %v1201
      %v1203 = vpop.f32.mrb[0].mxu0
      %1204 = vmatprep.mubr.f32.mxu0 0.0
      %1205 = vmatmul.mubr.f32.gmra.mrb[0].mxu0 %v1076
      %v1206 = vpop.f32.mrb[0].mxu0
      %v1207 = vadd.f32 %v1084, %v1206
      %v1208 = vpop.f32.mrb[0].mxu0
      %1209 = vmatprep.mubr.f32.mxu0 0.0
      %1210 = vmatmul.mubr.f32.gmra.mrb[0].mxu0 %v1077
      %v1211 = vpop.f32.mrb[0].mxu0
      %v1212 = vadd.f32 %v1084, %v1211
      %v1213 = vpop.f32.mrb[0].mxu0
      %1214 = vmatprep.mubr.f32.mxu0 0.0
      %1215 = vmatmul.mubr.f32.gmra.mrb[0].mxu0 %v1078
      %v1216 = vpop.f32.mrb[0].mxu0
      %v1217 = vadd.f32 %v1084, %v1216
      %v1218 = vpop.f32.mrb[0].mxu0
      %1219 = vmatprep.mubr.f32.mxu0 0.0
      %1220 = vmatmul.mubr.f32.gmra.mrb[0].mxu0 %v1079
      %v1221 = vpop.f32.mrb[0].mxu0
      %v1222 = vadd.f32 %v1084, %v1221
      %v1223 = vpop.f32.mrb[0].mxu0
      %1224 = vmatprep.mubr.f32.mxu0 0.0
      %1225 = vmatmul.mubr.f32.gmra.mrb[0].mxu0 %v1080
      %v1226 = vpop.f32.mrb[0].mxu0
      %v1227 = vadd.f32 %v1084, %v1226
      %v1228 = vpop.f32.mrb[0].mxu0
      %1229 = vdwg.mxu0
      %1230 = vmatprep.subr.mxu0 0.0
      %1231 = vmatpush1.msra.mxu0 %v417
      %1232 = vmatprep.subr.mxu0 0.0
      %1233 = vmatpush1.msra.mxu0 %v418
      %1234 = vmatprep.subr.mxu0 0.0
      %1235 = vmatpush1.msra.mxu0 %v419
      %1236 = vmatprep.subr.mxu0 0.0
      %1237 = vmatpush1.msra.mxu0 %v420
      %1238 = vmatprep.subr.mxu0 0.0
      %1239 = vmatpush1.msra.mxu0 %v421
      %1240 = vmatprep.subr.mxu0 0.0
      %1241 = vmatpush1.msra.mxu0 %v422
      %1242 = vmatprep.subr.mxu0 0.0
      %1243 = vmatpush1.msra.mxu0 %v423
      %1244 = vmatprep.subr.mxu0 0.0
      %1245 = vmatpush1.msra.mxu0 %v424
      %1246 = vmatprep.subr.mxu0 0.0
      %1247 = vmatpush1.msra.mxu0 %v425
      %1248 = vmatprep.subr.mxu0 0.0
      %1249 = vmatpush1.msra.mxu0 %v426
      %1250 = vmatprep.subr.mxu0 0.0
      %1251 = vmatpush1.msra.mxu0 %v427
      %1252 = vmatprep.subr.mxu0 0.0
      %1253 = vmatpush1.msra.mxu0 %v428
      %1254 = vmatprep.subr.mxu0 0.0
      %1255 = vmatpush1.msra.mxu0 %v429
      %1256 = vmatprep.subr.mxu0 0.0
      %1257 = vmatpush1.msra.mxu0 %v430
      %1258 = vmatprep.subr.mxu0 0.0
      %1259 = vmatpush1.msra.mxu0 %v431
      %1260 = vmatprep.subr.mxu0 0.0
      %1261 = vmatpush1.msra.mxu0 %v432
      %1262 = vmatprep.subr.mxu0 0.0
      %1263 = vmatpush1.msra.mxu0 0.0
      %1264 = vmatprep.subr.mxu0 0.0
      %1265 = vmatpush1.msra.mxu0 0.0
      %1266 = vmatprep.subr.mxu0 0.0
      %1267 = vmatpush1.msra.mxu0 0.0
      %1268 = vmatprep.subr.mxu0 0.0
      %1269 = vmatpush1.msra.mxu0 0.0
      %1270 = vmatprep.subr.mxu0 0.0
      %1271 = vmatpush1.msra.mxu0 0.0
      %1272 = vmatprep.subr.mxu0 0.0
      %1273 = vmatpush1.msra.mxu0 0.0
      %1274 = vmatprep.subr.mxu0 0.0
      %1275 = vmatpush1.msra.mxu0 0.0
      %1276 = vmatprep.subr.mxu0 0.0
      %1277 = vmatpush1.msra.mxu0 0.0
      %1278 = vmatprep.subr.mxu0 0.0
      %1279 = vmatpush1.msra.mxu0 0.0
      %1280 = vmatprep.subr.mxu0 0.0
      %1281 = vmatpush1.msra.mxu0 0.0
      %1282 = vmatprep.subr.mxu0 0.0
      %1283 = vmatpush1.msra.mxu0 0.0
      %1284 = vmatprep.subr.mxu0 0.0
      %1285 = vmatpush1.msra.mxu0 0.0
      %1286 = vmatprep.subr.mxu0 0.0
      %1287 = vmatpush1.msra.mxu0 0.0
      %1288 = vmatprep.subr.mxu0 0.0
      %1289 = vmatpush1.msra.mxu0 0.0
      %1290 = vmatprep.subr.mxu0 0.0
      %1291 = vmatpush1.msra.mxu0 0.0
      %1292 = vmatprep.subr.mxu0 0.0
      %1293 = vmatpush1.msra.mxu0 0.0
      %1294 = vmatprep.mubr.f32.mxu0 0.0
      %1295 = vmatmul.mubr.f32.gmra.mrb[0].mxu0 %v1152
      %v1296 = vpop.f32.mrb[0].mxu0
      %v1297 = vadd.f32 0.0, %v1296
      %v1298 = vpop.f32.mrb[0].mxu0
      %1299 = vmatprep.mubr.f32.mxu0 0.0
      %1300 = vmatmul.mubr.f32.gmra.mrb[0].mxu0 %v1157
      %v1301 = vpop.f32.mrb[0].mxu0
      %v1302 = vadd.f32 0.0, %v1301
      %v1303 = vpop.f32.mrb[0].mxu0
      %1304 = vmatprep.mubr.f32.mxu0 0.0
      %1305 = vmatmul.mubr.f32.gmra.mrb[0].mxu0 %v1162
      %v1306 = vpop.f32.mrb[0].mxu0
      %v1307 = vadd.f32 0.0, %v1306
      %v1308 = vpop.f32.mrb[0].mxu0
      %1309 = vmatprep.mubr.f32.mxu0 0.0
      %1310 = vmatmul.mubr.f32.gmra.mrb[0].mxu0 %v1167
      %v1311 = vpop.f32.mrb[0].mxu0
      %v1312 = vadd.f32 0.0, %v1311
      %v1313 = vpop.f32.mrb[0].mxu0
      %1314 = vmatprep.mubr.f32.mxu0 0.0
      %1315 = vmatmul.mubr.f32.gmra.mrb[0].mxu0 %v1172
      %v1316 = vpop.f32.mrb[0].mxu0
      %v1317 = vadd.f32 0.0, %v1316
      %v1318 = vpop.f32.mrb[0].mxu0
      %1319 = vmatprep.mubr.f32.mxu0 0.0
      %1320 = vmatmul.mubr.f32.gmra.mrb[0].mxu0 %v1177
      %v1321 = vpop.f32.mrb[0].mxu0
      %v1322 = vadd.f32 0.0, %v1321
      %v1323 = vpop.f32.mrb[0].mxu0
      %1324 = vmatprep.mubr.f32.mxu0 0.0
      %1325 = vmatmul.mubr.f32.gmra.mrb[0].mxu0 %v1182
      %v1326 = vpop.f32.mrb[0].mxu0
      %v1327 = vadd.f32 0.0, %v1326
      %v1328 = vpop.f32.mrb[0].mxu0
      %1329 = vmatprep.mubr.f32.mxu0 0.0
      %1330 = vmatmul.mubr.f32.gmra.mrb[0].mxu0 %v1187
      %v1331 = vpop.f32.mrb[0].mxu0
      %v1332 = vadd.f32 0.0, %v1331
      %v1333 = vpop.f32.mrb[0].mxu0
      %1334 = vmatprep.mubr.f32.mxu0 0.0
      %1335 = vmatmul.mubr.f32.gmra.mrb[0].mxu0 %v1192
      %v1336 = vpop.f32.mrb[0].mxu0
      %v1337 = vadd.f32 0.0, %v1336
      %v1338 = vpop.f32.mrb[0].mxu0
      %1339 = vmatprep.mubr.f32.mxu0 0.0
      %1340 = vmatmul.mubr.f32.gmra.mrb[0].mxu0 %v1197
      %v1341 = vpop.f32.mrb[0].mxu0
      %v1342 = vadd.f32 0.0, %v1341
      %v1343 = vpop.f32.mrb[0].mxu0
      %1344 = vmatprep.mubr.f32.mxu0 0.0
      %1345 = vmatmul.mubr.f32.gmra.mrb[0].mxu0 %v1202
      %v1346 = vpop.f32.mrb[0].mxu0
      %v1347 = vadd.f32 0.0, %v1346
      %v1348 = vpop.f32.mrb[0].mxu0
      %1349 = vmatprep.mubr.f32.mxu0 0.0
      %1350 = vmatmul.mubr.f32.gmra.mrb[0].mxu0 %v1207
      %v1351 = vpop.f32.mrb[0].mxu0
      %v1352 = vadd.f32 0.0, %v1351
      %v1353 = vpop.f32.mrb[0].mxu0
      %1354 = vmatprep.mubr.f32.mxu0 0.0
      %1355 = vmatmul.mubr.f32.gmra.mrb[0].mxu0 %v1212
      %v1356 = vpop.f32.mrb[0].mxu0
      %v1357 = vadd.f32 0.0, %v1356
      %v1358 = vpop.f32.mrb[0].mxu0
      %1359 = vmatprep.mubr.f32.mxu0 0.0
      %1360 = vmatmul.mubr.f32.gmra.mrb[0].mxu0 %v1217
      %v1361 = vpop.f32.mrb[0].mxu0
      %v1362 = vadd.f32 0.0, %v1361
      %v1363 = vpop.f32.mrb[0].mxu0
      %1364 = vmatprep.mubr.f32.mxu0 0.0
      %1365 = vmatmul.mubr.f32.gmra.mrb[0].mxu0 %v1222
      %v1366 = vpop.f32.mrb[0].mxu0
      %v1367 = vadd.f32 0.0, %v1366
      %v1368 = vpop.f32.mrb[0].mxu0
      %1369 = vmatprep.mubr.f32.mxu0 0.0
      %1370 = vmatmul.mubr.f32.gmra.mrb[0].mxu0 %v1227
      %v1371 = vpop.f32.mrb[0].mxu0
      %v1372 = vadd.f32 0.0, %v1371
      %v1373 = vpop.f32.mrb[0].mxu0
      %1374 = vdwg.mxu0
      %1375 = vst [vmem:[%s280] sm:$0xff] %v1297
      %1376 = vst [vmem:[%s280 + $0x8] sm:$0xff] %v1302
      %1377 = vst [vmem:[%s280 + $0x10] sm:$0xff] %v1307
      %1378 = vst [vmem:[%s280 + $0x18] sm:$0xff] %v1312
      %1379 = vst [vmem:[%s280 + $0x20] sm:$0xff] %v1317
      %1380 = vst [vmem:[%s280 + $0x28] sm:$0xff] %v1322
      %1381 = vst [vmem:[%s280 + $0x30] sm:$0xff] %v1327
      %1382 = vst [vmem:[%s280 + $0x38] sm:$0xff] %v1332
      %1383 = vst [vmem:[%s280 + $0x40] sm:$0xff] %v1337
      %1384 = vst [vmem:[%s280 + $0x48] sm:$0xff] %v1342
      %1385 = vst [vmem:[%s280 + $0x50] sm:$0xff] %v1347
      %1386 = vst [vmem:[%s280 + $0x58] sm:$0xff] %v1352
      %1387 = vst [vmem:[%s280 + $0x60] sm:$0xff] %v1357
      %1388 = vst [vmem:[%s280 + $0x68] sm:$0xff] %v1362
      %1389 = vst [vmem:[%s280 + $0x70] sm:$0xff] %v1367
      %1390 = vst [vmem:[%s280 + $0x78] sm:$0xff] %v1372
      %1391 = vst [vmem:[%s286] sm:$0xff] %v838
      %1392 = vst [vmem:[%s286 + $0x8] sm:$0xff] %v843
      %1393 = vst [vmem:[%s286 + $0x10] sm:$0xff] %v848
      %1394 = vst [vmem:[%s286 + $0x18] sm:$0xff] %v853
      %1395 = vst [vmem:[%s286 + $0x20] sm:$0xff] %v858
      %1396 = vst [vmem:[%s286 + $0x28] sm:$0xff] %v863
      %1397 = vst [vmem:[%s286 + $0x30] sm:$0xff] %v868
      %1398 = vst [vmem:[%s286 + $0x38] sm:$0xff] %v873
      %1399 = vst [vmem:[%s286 + $0x40] sm:$0xff] %v878
      %1400 = vst [vmem:[%s286 + $0x48] sm:$0xff] %v883
      %1401 = vst [vmem:[%s286 + $0x50] sm:$0xff] %v888
      %1402 = vst [vmem:[%s286 + $0x58] sm:$0xff] %v893
      %1403 = vst [vmem:[%s286 + $0x60] sm:$0xff] %v898
      %1404 = vst [vmem:[%s286 + $0x68] sm:$0xff] %v903
      %1405 = vst [vmem:[%s286 + $0x70] sm:$0xff] %v908
      %1406 = vst [vmem:[%s286 + $0x78] sm:$0xff] %v913
      %v1407 = vsub.f32 %v300, %v1297
      %v1408 = vsub.f32 %v301, %v1302
      %v1409 = vsub.f32 %v302, %v1307
      %v1410 = vsub.f32 %v303, %v1312
      %v1411 = vsub.f32 %v304, %v1317
      %v1412 = vsub.f32 %v305, %v1322
      %v1413 = vsub.f32 %v306, %v1327
      %v1414 = vsub.f32 %v307, %v1332
      %v1415 = vsub.f32 %v308, %v1337
      %v1416 = vsub.f32 %v309, %v1342
      %v1417 = vsub.f32 %v310, %v1347
      %v1418 = vsub.f32 %v311, %v1352
      %v1419 = vsub.f32 %v312, %v1357
      %v1420 = vsub.f32 %v313, %v1362
      %v1421 = vsub.f32 %v314, %v1367
      %v1422 = vsub.f32 %v315, %v1372
      %v1423 = vmul.f32 %v1407, %v1407
      %v1424 = vmul.f32 %v1408, %v1408
      %v1425 = vmul.f32 %v1409, %v1409
      %v1426 = vmul.f32 %v1410, %v1410
      %v1427 = vmul.f32 %v1411, %v1411
      %v1428 = vmul.f32 %v1412, %v1412
      %v1429 = vmul.f32 %v1413, %v1413
      %v1430 = vmul.f32 %v1414, %v1414
      %v1431 = vmul.f32 %v1415, %v1415
      %v1432 = vmul.f32 %v1416, %v1416
      %v1433 = vmul.f32 %v1417, %v1417
      %v1434 = vmul.f32 %v1418, %v1418
      %v1435 = vmul.f32 %v1419, %v1419
      %v1436 = vmul.f32 %v1420, %v1420
      %v1437 = vmul.f32 %v1421, %v1421
      %v1438 = vmul.f32 %v1422, %v1422
      %v1439 = vadd.f32 %v1423, %v1424
      %v1440 = vadd.f32 %v1439, %v1425
      %v1441 = vadd.f32 %v1440, %v1426
      %v1442 = vadd.f32 %v1441, %v1427
      %v1443 = vadd.f32 %v1442, %v1428
      %v1444 = vadd.f32 %v1443, %v1429
      %v1445 = vadd.f32 %v1444, %v1430
      %v1446 = vadd.f32 %v1445, %v1431
      %v1447 = vadd.f32 %v1446, %v1432
      %v1448 = vadd.f32 %v1447, %v1433
      %v1449 = vadd.f32 %v1448, %v1434
      %v1450 = vadd.f32 %v1449, %v1435
      %v1451 = vadd.f32 %v1450, %v1436
      %v1452 = vadd.f32 %v1451, %v1437
      %v1453 = vadd.f32 %v1452, %v1438
      %1454 = vadd.xlane.f32.xlu0 %v1453
      %v1455 = vpop.xlane.xlu0 %1454
      %v1456 = vrot.slane %v1455, 4
      %v1457 = vadd.f32 %v1455, %v1456
      %v1458 = vrot.slane %v1457, 2
      %v1459 = vadd.f32 %v1457, %v1458
      %v1460 = vrot.slane %v1459, 1
      %v1461 = vadd.f32 %v1459, %v1460
      %s1462 = vtos %v1461
      %v1463 = vlaneseq
      %v1464 = vshrl.u32 %v1463, 7
      %v1465 = vsub.s32 0, %v1464
      %v1466 = vrot.slane %v454, %v1465
      %1467 = vmatprep.subr.mxu0 0.0
      %1468 = vmatpush1.msra.mxu0 %v434
      %1469 = vmatprep.subr.mxu0 0.0
      %1470 = vmatpush1.msra.mxu0 %v435
      %1471 = vmatprep.subr.mxu0 0.0
      %1472 = vmatpush1.msra.mxu0 %v436
      %1473 = vmatprep.subr.mxu0 0.0
      %1474 = vmatpush1.msra.mxu0 %v437
      %1475 = vmatprep.subr.mxu0 0.0
      %1476 = vmatpush1.msra.mxu0 %v438
      %1477 = vmatprep.subr.mxu0 0.0
      %1478 = vmatpush1.msra.mxu0 %v439
      %1479 = vmatprep.subr.mxu0 0.0
      %1480 = vmatpush1.msra.mxu0 %v440
      %1481 = vmatprep.subr.mxu0 0.0
      %1482 = vmatpush1.msra.mxu0 %v441
      %1483 = vmatprep.subr.mxu0 0.0
      %1484 = vmatpush1.msra.mxu0 %v442
      %1485 = vmatprep.subr.mxu0 0.0
      %1486 = vmatpush1.msra.mxu0 %v443
      %1487 = vmatprep.subr.mxu0 0.0
      %1488 = vmatpush1.msra.mxu0 %v444
      %1489 = vmatprep.subr.mxu0 0.0
      %1490 = vmatpush1.msra.mxu0 %v445
      %1491 = vmatprep.subr.mxu0 0.0
      %1492 = vmatpush1.msra.mxu0 %v446
      %1493 = vmatprep.subr.mxu0 0.0
      %1494 = vmatpush1.msra.mxu0 %v447
      %1495 = vmatprep.subr.mxu0 0.0
      %1496 = vmatpush1.msra.mxu0 %v448
      %1497 = vmatprep.subr.mxu0 0.0
      %1498 = vmatpush1.msra.mxu0 %v449
      %1499 = vmatprep.subr.mxu0 0.0
      %1500 = vmatpush1.msra.mxu0 0.0
      %1501 = vmatprep.subr.mxu0 0.0
      %1502 = vmatpush1.msra.mxu0 0.0
      %1503 = vmatprep.subr.mxu0 0.0
      %1504 = vmatpush1.msra.mxu0 0.0
      %1505 = vmatprep.subr.mxu0 0.0
      %1506 = vmatpush1.msra.mxu0 0.0
      %1507 = vmatprep.subr.mxu0 0.0
      %1508 = vmatpush1.msra.mxu0 0.0
      %1509 = vmatprep.subr.mxu0 0.0
      %1510 = vmatpush1.msra.mxu0 0.0
      %1511 = vmatprep.subr.mxu0 0.0
      %1512 = vmatpush1.msra.mxu0 0.0
      %1513 = vmatprep.subr.mxu0 0.0
      %1514 = vmatpush1.msra.mxu0 0.0
      %1515 = vmatprep.subr.mxu0 0.0
      %1516 = vmatpush1.msra.mxu0 0.0
      %1517 = vmatprep.subr.mxu0 0.0
      %1518 = vmatpush1.msra.mxu0 0.0
      %1519 = vmatprep.subr.mxu0 0.0
      %1520 = vmatpush1.msra.mxu0 0.0
      %1521 = vmatprep.subr.mxu0 0.0
      %1522 = vmatpush1.msra.mxu0 0.0
      %1523 = vmatprep.subr.mxu0 0.0
      %1524 = vmatpush1.msra.mxu0 0.0
      %1525 = vmatprep.subr.mxu0 0.0
      %1526 = vmatpush1.msra.mxu0 0.0
      %1527 = vmatprep.subr.mxu0 0.0
      %1528 = vmatpush1.msra.mxu0 0.0
      %1529 = vmatprep.subr.mxu0 0.0
      %1530 = vmatpush1.msra.mxu0 0.0
      %1531 = vmatprep.mubr.f32.mxu0 0.0
      %1532 = vmatmul.mubr.f32.gmra.mrb[0].mxu0 %v316
      %v1533 = vpop.f32.mrb[0].mxu0
      %v1534 = vadd.f32 %v1466, %v1533
      %v1535 = vpop.f32.mrb[0].mxu0
      %1536 = vmatprep.mubr.f32.mxu0 0.0
      %1537 = vmatmul.mubr.f32.gmra.mrb[0].mxu0 %v317
      %v1538 = vpop.f32.mrb[0].mxu0
      %v1539 = vadd.f32 %v1466, %v1538
      %v1540 = vpop.f32.mrb[0].mxu0
      %1541 = vmatprep.mubr.f32.mxu0 0.0
      %1542 = vmatmul.mubr.f32.gmra.mrb[0].mxu0 %v318
      %v1543 = vpop.f32.mrb[0].mxu0
      %v1544 = vadd.f32 %v1466, %v1543
      %v1545 = vpop.f32.mrb[0].mxu0
      %1546 = vmatprep.mubr.f32.mxu0 0.0
      %1547 = vmatmul.mubr.f32.gmra.mrb[0].mxu0 %v319
      %v1548 = vpop.f32.mrb[0].mxu0
      %v1549 = vadd.f32 %v1466, %v1548
      %v1550 = vpop.f32.mrb[0].mxu0
      %1551 = vmatprep.mubr.f32.mxu0 0.0
      %1552 = vmatmul.mubr.f32.gmra.mrb[0].mxu0 %v320
      %v1553 = vpop.f32.mrb[0].mxu0
      %v1554 = vadd.f32 %v1466, %v1553
      %v1555 = vpop.f32.mrb[0].mxu0
      %1556 = vmatprep.mubr.f32.mxu0 0.0
      %1557 = vmatmul.mubr.f32.gmra.mrb[0].mxu0 %v321
      %v1558 = vpop.f32.mrb[0].mxu0
      %v1559 = vadd.f32 %v1466, %v1558
      %v1560 = vpop.f32.mrb[0].mxu0
      %1561 = vmatprep.mubr.f32.mxu0 0.0
      %1562 = vmatmul.mubr.f32.gmra.mrb[0].mxu0 %v322
      %v1563 = vpop.f32.mrb[0].mxu0
      %v1564 = vadd.f32 %v1466, %v1563
      %v1565 = vpop.f32.mrb[0].mxu0
      %1566 = vmatprep.mubr.f32.mxu0 0.0
      %1567 = vmatmul.mubr.f32.gmra.mrb[0].mxu0 %v323
      %v1568 = vpop.f32.mrb[0].mxu0
      %v1569 = vadd.f32 %v1466, %v1568
      %v1570 = vpop.f32.mrb[0].mxu0
      %1571 = vmatprep.mubr.f32.mxu0 0.0
      %1572 = vmatmul.mubr.f32.gmra.mrb[0].mxu0 %v324
      %v1573 = vpop.f32.mrb[0].mxu0
      %v1574 = vadd.f32 %v1466, %v1573
      %v1575 = vpop.f32.mrb[0].mxu0
      %1576 = vmatprep.mubr.f32.mxu0 0.0
      %1577 = vmatmul.mubr.f32.gmra.mrb[0].mxu0 %v325
      %v1578 = vpop.f32.mrb[0].mxu0
      %v1579 = vadd.f32 %v1466, %v1578
      %v1580 = vpop.f32.mrb[0].mxu0
      %1581 = vmatprep.mubr.f32.mxu0 0.0
      %1582 = vmatmul.mubr.f32.gmra.mrb[0].mxu0 %v326
      %v1583 = vpop.f32.mrb[0].mxu0
      %v1584 = vadd.f32 %v1466, %v1583
      %v1585 = vpop.f32.mrb[0].mxu0
      %1586 = vmatprep.mubr.f32.mxu0 0.0
      %1587 = vmatmul.mubr.f32.gmra.mrb[0].mxu0 %v327
      %v1588 = vpop.f32.mrb[0].mxu0
      %v1589 = vadd.f32 %v1466, %v1588
      %v1590 = vpop.f32.mrb[0].mxu0
      %1591 = vmatprep.mubr.f32.mxu0 0.0
      %1592 = vmatmul.mubr.f32.gmra.mrb[0].mxu0 %v328
      %v1593 = vpop.f32.mrb[0].mxu0
      %v1594 = vadd.f32 %v1466, %v1593
      %v1595 = vpop.f32.mrb[0].mxu0
      %1596 = vmatprep.mubr.f32.mxu0 0.0
      %1597 = vmatmul.mubr.f32.gmra.mrb[0].mxu0 %v329
      %v1598 = vpop.f32.mrb[0].mxu0
      %v1599 = vadd.f32 %v1466, %v1598
      %v1600 = vpop.f32.mrb[0].mxu0
      %1601 = vmatprep.mubr.f32.mxu0 0.0
      %1602 = vmatmul.mubr.f32.gmra.mrb[0].mxu0 %v330
      %v1603 = vpop.f32.mrb[0].mxu0
      %v1604 = vadd.f32 %v1466, %v1603
      %v1605 = vpop.f32.mrb[0].mxu0
      %1606 = vmatprep.mubr.f32.mxu0 0.0
      %1607 = vmatmul.mubr.f32.gmra.mrb[0].mxu0 %v331
      %v1608 = vpop.f32.mrb[0].mxu0
      %v1609 = vadd.f32 %v1466, %v1608
      %v1610 = vpop.f32.mrb[0].mxu0
      %1611 = vmatprep.mubr.f32.mxu0 0.0
      %1612 = vmatmul.mubr.f32.gmra.mrb[0].mxu0 %v838
      %v1613 = vpop.f32.mrb[0].mxu0
      %v1614 = vadd.f32 %v1466, %v1613
      %v1615 = vpop.f32.mrb[0].mxu0
      %1616 = vmatprep.mubr.f32.mxu0 0.0
      %1617 = vmatmul.mubr.f32.gmra.mrb[0].mxu0 %v843
      %v1618 = vpop.f32.mrb[0].mxu0
      %v1619 = vadd.f32 %v1466, %v1618
      %v1620 = vpop.f32.mrb[0].mxu0
      %1621 = vmatprep.mubr.f32.mxu0 0.0
      %1622 = vmatmul.mubr.f32.gmra.mrb[0].mxu0 %v848
      %v1623 = vpop.f32.mrb[0].mxu0
      %v1624 = vadd.f32 %v1466, %v1623
      %v1625 = vpop.f32.mrb[0].mxu0
      %1626 = vmatprep.mubr.f32.mxu0 0.0
      %1627 = vmatmul.mubr.f32.gmra.mrb[0].mxu0 %v853
      %v1628 = vpop.f32.mrb[0].mxu0
      %v1629 = vadd.f32 %v1466, %v1628
      %v1630 = vpop.f32.mrb[0].mxu0
      %1631 = vmatprep.mubr.f32.mxu0 0.0
      %1632 = vmatmul.mubr.f32.gmra.mrb[0].mxu0 %v858
      %v1633 = vpop.f32.mrb[0].mxu0
      %v1634 = vadd.f32 %v1466, %v1633
      %v1635 = vpop.f32.mrb[0].mxu0
      %1636 = vmatprep.mubr.f32.mxu0 0.0
      %1637 = vmatmul.mubr.f32.gmra.mrb[0].mxu0 %v863
      %v1638 = vpop.f32.mrb[0].mxu0
      %v1639 = vadd.f32 %v1466, %v1638
      %v1640 = vpop.f32.mrb[0].mxu0
      %1641 = vmatprep.mubr.f32.mxu0 0.0
      %1642 = vmatmul.mubr.f32.gmra.mrb[0].mxu0 %v868
      %v1643 = vpop.f32.mrb[0].mxu0
      %v1644 = vadd.f32 %v1466, %v1643
      %v1645 = vpop.f32.mrb[0].mxu0
      %1646 = vmatprep.mubr.f32.mxu0 0.0
      %1647 = vmatmul.mubr.f32.gmra.mrb[0].mxu0 %v873
      %v1648 = vpop.f32.mrb[0].mxu0
      %v1649 = vadd.f32 %v1466, %v1648
      %v1650 = vpop.f32.mrb[0].mxu0
      %1651 = vmatprep.mubr.f32.mxu0 0.0
      %1652 = vmatmul.mubr.f32.gmra.mrb[0].mxu0 %v878
      %v1653 = vpop.f32.mrb[0].mxu0
      %v1654 = vadd.f32 %v1466, %v1653
      %v1655 = vpop.f32.mrb[0].mxu0
      %1656 = vmatprep.mubr.f32.mxu0 0.0
      %1657 = vmatmul.mubr.f32.gmra.mrb[0].mxu0 %v883
      %v1658 = vpop.f32.mrb[0].mxu0
      %v1659 = vadd.f32 %v1466, %v1658
      %v1660 = vpop.f32.mrb[0].mxu0
      %1661 = vmatprep.mubr.f32.mxu0 0.0
      %1662 = vmatmul.mubr.f32.gmra.mrb[0].mxu0 %v888
      %v1663 = vpop.f32.mrb[0].mxu0
      %v1664 = vadd.f32 %v1466, %v1663
      %v1665 = vpop.f32.mrb[0].mxu0
      %1666 = vmatprep.mubr.f32.mxu0 0.0
      %1667 = vmatmul.mubr.f32.gmra.mrb[0].mxu0 %v893
      %v1668 = vpop.f32.mrb[0].mxu0
      %v1669 = vadd.f32 %v1466, %v1668
      %v1670 = vpop.f32.mrb[0].mxu0
      %1671 = vmatprep.mubr.f32.mxu0 0.0
      %1672 = vmatmul.mubr.f32.gmra.mrb[0].mxu0 %v898
      %v1673 = vpop.f32.mrb[0].mxu0
      %v1674 = vadd.f32 %v1466, %v1673
      %v1675 = vpop.f32.mrb[0].mxu0
      %1676 = vmatprep.mubr.f32.mxu0 0.0
      %1677 = vmatmul.mubr.f32.gmra.mrb[0].mxu0 %v903
      %v1678 = vpop.f32.mrb[0].mxu0
      %v1679 = vadd.f32 %v1466, %v1678
      %v1680 = vpop.f32.mrb[0].mxu0
      %1681 = vmatprep.mubr.f32.mxu0 0.0
      %1682 = vmatmul.mubr.f32.gmra.mrb[0].mxu0 %v908
      %v1683 = vpop.f32.mrb[0].mxu0
      %v1684 = vadd.f32 %v1466, %v1683
      %v1685 = vpop.f32.mrb[0].mxu0
      %1686 = vmatprep.mubr.f32.mxu0 0.0
      %1687 = vmatmul.mubr.f32.gmra.mrb[0].mxu0 %v913
      %v1688 = vpop.f32.mrb[0].mxu0
      %v1689 = vadd.f32 %v1466, %v1688
      %v1690 = vpop.f32.mrb[0].mxu0
      %1691 = vdwg.mxu0
      %v1692 = vtanh.pop %v1534
      %v1693 = vtanh.pop %v1539
      %v1694 = vtanh.pop %v1544
      %v1695 = vtanh.pop %v1549
      %v1696 = vtanh.pop %v1554
      %v1697 = vtanh.pop %v1559
      %v1698 = vtanh.pop %v1564
      %v1699 = vtanh.pop %v1569
      %v1700 = vtanh.pop %v1574
      %v1701 = vtanh.pop %v1579
      %v1702 = vtanh.pop %v1584
      %v1703 = vtanh.pop %v1589
      %v1704 = vtanh.pop %v1594
      %v1705 = vtanh.pop %v1599
      %v1706 = vtanh.pop %v1604
      %v1707 = vtanh.pop %v1609
      %v1708 = vtanh.pop %v1614
      %v1709 = vtanh.pop %v1619
      %v1710 = vtanh.pop %v1624
      %v1711 = vtanh.pop %v1629
      %v1712 = vtanh.pop %v1634
      %v1713 = vtanh.pop %v1639
      %v1714 = vtanh.pop %v1644
      %v1715 = vtanh.pop %v1649
      %v1716 = vtanh.pop %v1654
      %v1717 = vtanh.pop %v1659
      %v1718 = vtanh.pop %v1664
      %v1719 = vtanh.pop %v1669
      %v1720 = vtanh.pop %v1674
      %v1721 = vtanh.pop %v1679
      %v1722 = vtanh.pop %v1684
      %v1723 = vtanh.pop %v1689
      %v1724 = vlaneseq
      %v1725 = vshrl.u32 %v1724, 7
      %v1726 = vsub.s32 0, %v1725
      %v1727 = vrot.slane %v455, %v1726
      %v1728 = vmul.f32 %v1692, %v1727
      %v1729 = vmul.f32 %v1693, %v1727
      %v1730 = vmul.f32 %v1694, %v1727
      %v1731 = vmul.f32 %v1695, %v1727
      %v1732 = vmul.f32 %v1696, %v1727
      %v1733 = vmul.f32 %v1697, %v1727
      %v1734 = vmul.f32 %v1698, %v1727
      %v1735 = vmul.f32 %v1699, %v1727
      %v1736 = vmul.f32 %v1700, %v1727
      %v1737 = vmul.f32 %v1701, %v1727
      %v1738 = vmul.f32 %v1702, %v1727
      %v1739 = vmul.f32 %v1703, %v1727
      %v1740 = vmul.f32 %v1704, %v1727
      %v1741 = vmul.f32 %v1705, %v1727
      %v1742 = vmul.f32 %v1706, %v1727
      %v1743 = vmul.f32 %v1707, %v1727
      %v1744 = vmul.f32 %v1708, %v1727
      %v1745 = vmul.f32 %v1709, %v1727
      %v1746 = vmul.f32 %v1710, %v1727
      %v1747 = vmul.f32 %v1711, %v1727
      %v1748 = vmul.f32 %v1712, %v1727
      %v1749 = vmul.f32 %v1713, %v1727
      %v1750 = vmul.f32 %v1714, %v1727
      %v1751 = vmul.f32 %v1715, %v1727
      %v1752 = vmul.f32 %v1716, %v1727
      %v1753 = vmul.f32 %v1717, %v1727
      %v1754 = vmul.f32 %v1718, %v1727
      %v1755 = vmul.f32 %v1719, %v1727
      %v1756 = vmul.f32 %v1720, %v1727
      %v1757 = vmul.f32 %v1721, %v1727
      %v1758 = vmul.f32 %v1722, %v1727
      %v1759 = vmul.f32 %v1723, %v1727
      %1760 = vadd.xlane.f32.xlu0 %v1728
      %v1761 = vpop.xlane.xlu0 %1760
      %1762 = vadd.xlane.f32.xlu0 %v1729
      %v1763 = vpop.xlane.xlu0 %1762
      %1764 = vadd.xlane.f32.xlu0 %v1730
      %v1765 = vpop.xlane.xlu0 %1764
      %1766 = vadd.xlane.f32.xlu0 %v1731
      %v1767 = vpop.xlane.xlu0 %1766
      %1768 = vadd.xlane.f32.xlu0 %v1732
      %v1769 = vpop.xlane.xlu0 %1768
      %1770 = vadd.xlane.f32.xlu0 %v1733
      %v1771 = vpop.xlane.xlu0 %1770
      %1772 = vadd.xlane.f32.xlu0 %v1734
      %v1773 = vpop.xlane.xlu0 %1772
      %1774 = vadd.xlane.f32.xlu0 %v1735
      %v1775 = vpop.xlane.xlu0 %1774
      %1776 = vadd.xlane.f32.xlu0 %v1736
      %v1777 = vpop.xlane.xlu0 %1776
      %1778 = vadd.xlane.f32.xlu0 %v1737
      %v1779 = vpop.xlane.xlu0 %1778
      %1780 = vadd.xlane.f32.xlu0 %v1738
      %v1781 = vpop.xlane.xlu0 %1780
      %1782 = vadd.xlane.f32.xlu0 %v1739
      %v1783 = vpop.xlane.xlu0 %1782
      %1784 = vadd.xlane.f32.xlu0 %v1740
      %v1785 = vpop.xlane.xlu0 %1784
      %1786 = vadd.xlane.f32.xlu0 %v1741
      %v1787 = vpop.xlane.xlu0 %1786
      %1788 = vadd.xlane.f32.xlu0 %v1742
      %v1789 = vpop.xlane.xlu0 %1788
      %1790 = vadd.xlane.f32.xlu0 %v1743
      %v1791 = vpop.xlane.xlu0 %1790
      %1792 = vadd.xlane.f32.xlu0 %v1744
      %v1793 = vpop.xlane.xlu0 %1792
      %1794 = vadd.xlane.f32.xlu0 %v1745
      %v1795 = vpop.xlane.xlu0 %1794
      %1796 = vadd.xlane.f32.xlu0 %v1746
      %v1797 = vpop.xlane.xlu0 %1796
      %1798 = vadd.xlane.f32.xlu0 %v1747
      %v1799 = vpop.xlane.xlu0 %1798
      %1800 = vadd.xlane.f32.xlu0 %v1748
      %v1801 = vpop.xlane.xlu0 %1800
      %1802 = vadd.xlane.f32.xlu0 %v1749
      %v1803 = vpop.xlane.xlu0 %1802
      %1804 = vadd.xlane.f32.xlu0 %v1750
      %v1805 = vpop.xlane.xlu0 %1804
      %1806 = vadd.xlane.f32.xlu0 %v1751
      %v1807 = vpop.xlane.xlu0 %1806
      %1808 = vadd.xlane.f32.xlu0 %v1752
      %v1809 = vpop.xlane.xlu0 %1808
      %1810 = vadd.xlane.f32.xlu0 %v1753
      %v1811 = vpop.xlane.xlu0 %1810
      %1812 = vadd.xlane.f32.xlu0 %v1754
      %v1813 = vpop.xlane.xlu0 %1812
      %1814 = vadd.xlane.f32.xlu0 %v1755
      %v1815 = vpop.xlane.xlu0 %1814
      %1816 = vadd.xlane.f32.xlu0 %v1756
      %v1817 = vpop.xlane.xlu0 %1816
      %1818 = vadd.xlane.f32.xlu0 %v1757
      %v1819 = vpop.xlane.xlu0 %1818
      %1820 = vadd.xlane.f32.xlu0 %v1758
      %v1821 = vpop.xlane.xlu0 %1820
      %1822 = vadd.xlane.f32.xlu0 %v1759
      %v1823 = vpop.xlane.xlu0 %1822
      %v1824 = vlaneseq
      %v1825 = vshrl.u32 %v1824, 7
      %v1826 = vsub.s32 0, %v1825
      %v1827 = vrot.slane %v456, %v1826
      %v1828 = vadd.f32 %v1761, %v1827
      %v1829 = vadd.f32 %v1763, %v1827
      %v1830 = vadd.f32 %v1765, %v1827
      %v1831 = vadd.f32 %v1767, %v1827
      %v1832 = vadd.f32 %v1769, %v1827
      %v1833 = vadd.f32 %v1771, %v1827
      %v1834 = vadd.f32 %v1773, %v1827
      %v1835 = vadd.f32 %v1775, %v1827
      %v1836 = vadd.f32 %v1777, %v1827
      %v1837 = vadd.f32 %v1779, %v1827
      %v1838 = vadd.f32 %v1781, %v1827
      %v1839 = vadd.f32 %v1783, %v1827
      %v1840 = vadd.f32 %v1785, %v1827
      %v1841 = vadd.f32 %v1787, %v1827
      %v1842 = vadd.f32 %v1789, %v1827
      %v1843 = vadd.f32 %v1791, %v1827
      %v1844 = vadd.f32 %v1793, %v1827
      %v1845 = vadd.f32 %v1795, %v1827
      %v1846 = vadd.f32 %v1797, %v1827
      %v1847 = vadd.f32 %v1799, %v1827
      %v1848 = vadd.f32 %v1801, %v1827
      %v1849 = vadd.f32 %v1803, %v1827
      %v1850 = vadd.f32 %v1805, %v1827
      %v1851 = vadd.f32 %v1807, %v1827
      %v1852 = vadd.f32 %v1809, %v1827
      %v1853 = vadd.f32 %v1811, %v1827
      %v1854 = vadd.f32 %v1813, %v1827
      %v1855 = vadd.f32 %v1815, %v1827
      %v1856 = vadd.f32 %v1817, %v1827
      %v1857 = vadd.f32 %v1819, %v1827
      %v1858 = vadd.f32 %v1821, %v1827
      %v1859 = vadd.f32 %v1823, %v1827
      %v1860 = vsub.f32 0.0, %v1828
      %v1861 = vsub.f32 0.0, %v1829
      %v1862 = vsub.f32 0.0, %v1830
      %v1863 = vsub.f32 0.0, %v1831
      %v1864 = vsub.f32 0.0, %v1832
      %v1865 = vsub.f32 0.0, %v1833
      %v1866 = vsub.f32 0.0, %v1834
      %v1867 = vsub.f32 0.0, %v1835
      %v1868 = vsub.f32 0.0, %v1836
      %v1869 = vsub.f32 0.0, %v1837
      %v1870 = vsub.f32 0.0, %v1838
      %v1871 = vsub.f32 0.0, %v1839
      %v1872 = vsub.f32 0.0, %v1840
      %v1873 = vsub.f32 0.0, %v1841
      %v1874 = vsub.f32 0.0, %v1842
      %v1875 = vsub.f32 0.0, %v1843
      %v1876 = vmax.f32 %v1860, 0.0
      %v1877 = vmax.f32 %v1861, 0.0
      %v1878 = vmax.f32 %v1862, 0.0
      %v1879 = vmax.f32 %v1863, 0.0
      %v1880 = vmax.f32 %v1864, 0.0
      %v1881 = vmax.f32 %v1865, 0.0
      %v1882 = vmax.f32 %v1866, 0.0
      %v1883 = vmax.f32 %v1867, 0.0
      %v1884 = vmax.f32 %v1868, 0.0
      %v1885 = vmax.f32 %v1869, 0.0
      %v1886 = vmax.f32 %v1870, 0.0
      %v1887 = vmax.f32 %v1871, 0.0
      %v1888 = vmax.f32 %v1872, 0.0
      %v1889 = vmax.f32 %v1873, 0.0
      %v1890 = vmax.f32 %v1874, 0.0
      %v1891 = vmax.f32 %v1875, 0.0
      %vm1892 = vcmp.ne.f32.partialorder %v1860, %v1860
      %vm1893 = vcmp.ne.f32.partialorder %v1861, %v1861
      %vm1894 = vcmp.ne.f32.partialorder %v1862, %v1862
      %vm1895 = vcmp.ne.f32.partialorder %v1863, %v1863
      %vm1896 = vcmp.ne.f32.partialorder %v1864, %v1864
      %vm1897 = vcmp.ne.f32.partialorder %v1865, %v1865
      %vm1898 = vcmp.ne.f32.partialorder %v1866, %v1866
      %vm1899 = vcmp.ne.f32.partialorder %v1867, %v1867
      %vm1900 = vcmp.ne.f32.partialorder %v1868, %v1868
      %vm1901 = vcmp.ne.f32.partialorder %v1869, %v1869
      %vm1902 = vcmp.ne.f32.partialorder %v1870, %v1870
      %vm1903 = vcmp.ne.f32.partialorder %v1871, %v1871
      %vm1904 = vcmp.ne.f32.partialorder %v1872, %v1872
      %vm1905 = vcmp.ne.f32.partialorder %v1873, %v1873
      %vm1906 = vcmp.ne.f32.partialorder %v1874, %v1874
      %vm1907 = vcmp.ne.f32.partialorder %v1875, %v1875
      %v1908 = vadd.f32 %v1860, 0.0
      %v1909 = vadd.f32 %v1861, 0.0
      %v1910 = vadd.f32 %v1862, 0.0
      %v1911 = vadd.f32 %v1863, 0.0
      %v1912 = vadd.f32 %v1864, 0.0
      %v1913 = vadd.f32 %v1865, 0.0
      %v1914 = vadd.f32 %v1866, 0.0
      %v1915 = vadd.f32 %v1867, 0.0
      %v1916 = vadd.f32 %v1868, 0.0
      %v1917 = vadd.f32 %v1869, 0.0
      %v1918 = vadd.f32 %v1870, 0.0
      %v1919 = vadd.f32 %v1871, 0.0
      %v1920 = vadd.f32 %v1872, 0.0
      %v1921 = vadd.f32 %v1873, 0.0
      %v1922 = vadd.f32 %v1874, 0.0
      %v1923 = vadd.f32 %v1875, 0.0
      %v1924 = vand.u32 2147483647, %v1860
      %v1925 = vand.u32 2147483647, %v1861
      %v1926 = vand.u32 2147483647, %v1862
      %v1927 = vand.u32 2147483647, %v1863
      %v1928 = vand.u32 2147483647, %v1864
      %v1929 = vand.u32 2147483647, %v1865
      %v1930 = vand.u32 2147483647, %v1866
      %v1931 = vand.u32 2147483647, %v1867
      %v1932 = vand.u32 2147483647, %v1868
      %v1933 = vand.u32 2147483647, %v1869
      %v1934 = vand.u32 2147483647, %v1870
      %v1935 = vand.u32 2147483647, %v1871
      %v1936 = vand.u32 2147483647, %v1872
      %v1937 = vand.u32 2147483647, %v1873
      %v1938 = vand.u32 2147483647, %v1874
      %v1939 = vand.u32 2147483647, %v1875
      %v1940 = vsub.f32 0.0, %v1924
      %v1941 = vsub.f32 0.0, %v1925
      %v1942 = vsub.f32 0.0, %v1926
      %v1943 = vsub.f32 0.0, %v1927
      %v1944 = vsub.f32 0.0, %v1928
      %v1945 = vsub.f32 0.0, %v1929
      %v1946 = vsub.f32 0.0, %v1930
      %v1947 = vsub.f32 0.0, %v1931
      %v1948 = vsub.f32 0.0, %v1932
      %v1949 = vsub.f32 0.0, %v1933
      %v1950 = vsub.f32 0.0, %v1934
      %v1951 = vsub.f32 0.0, %v1935
      %v1952 = vsub.f32 0.0, %v1936
      %v1953 = vsub.f32 0.0, %v1937
      %v1954 = vsub.f32 0.0, %v1938
      %v1955 = vsub.f32 0.0, %v1939
      %v1956 = vmul.f32 %v1940, 1.442695
      %v1957 = vpow.pop %v1956
      %v1958 = vmul.f32 %v1941, 1.442695
      %v1959 = vpow.pop %v1958
      %v1960 = vmul.f32 %v1942, 1.442695
      %v1961 = vpow.pop %v1960
      %v1962 = vmul.f32 %v1943, 1.442695
      %v1963 = vpow.pop %v1962
      %v1964 = vmul.f32 %v1944, 1.442695
      %v1965 = vpow.pop %v1964
      %v1966 = vmul.f32 %v1945, 1.442695
      %v1967 = vpow.pop %v1966
      %v1968 = vmul.f32 %v1946, 1.442695
      %v1969 = vpow.pop %v1968
      %v1970 = vmul.f32 %v1947, 1.442695
      %v1971 = vpow.pop %v1970
      %v1972 = vmul.f32 %v1948, 1.442695
      %v1973 = vpow.pop %v1972
      %v1974 = vmul.f32 %v1949, 1.442695
      %v1975 = vpow.pop %v1974
      %v1976 = vmul.f32 %v1950, 1.442695
      %v1977 = vpow.pop %v1976
      %v1978 = vmul.f32 %v1951, 1.442695
      %v1979 = vpow.pop %v1978
      %v1980 = vmul.f32 %v1952, 1.442695
      %v1981 = vpow.pop %v1980
      %v1982 = vmul.f32 %v1953, 1.442695
      %v1983 = vpow.pop %v1982
      %v1984 = vmul.f32 %v1954, 1.442695
      %v1985 = vpow.pop %v1984
      %v1986 = vmul.f32 %v1955, 1.442695
      %v1987 = vpow.pop %v1986
      %v1988 = vadd.f32 %v1957, 1.0
      %v1989 = vlog2.pop %v1988
      %v1990 = vmul.f32 %v1989, 0.6931472
      %v1991 = vmul.f32 -0.5, %v1957
      %v1992 = vadd.f32 %v1991, 1.0
      %v1993 = vmul.f32 %v1992, %v1957
      %v1994 = vand.u32 2147483647, %v1957
      %vm1995 = vcmp.lt.f32.partialorder %v1994, 0.0004427343
      %v1996 = vsel %vm1995, %v1993, %v1990
      %v1997 = vadd.f32 %v1959, 1.0
      %v1998 = vlog2.pop %v1997
      %v1999 = vmul.f32 %v1998, 0.6931472
      %v2000 = vmul.f32 -0.5, %v1959
      %v2001 = vadd.f32 %v2000, 1.0
      %v2002 = vmul.f32 %v2001, %v1959
      %v2003 = vand.u32 2147483647, %v1959
      %vm2004 = vcmp.lt.f32.partialorder %v2003, 0.0004427343
      %v2005 = vsel %vm2004, %v2002, %v1999
      %v2006 = vadd.f32 %v1961, 1.0
      %v2007 = vlog2.pop %v2006
      %v2008 = vmul.f32 %v2007, 0.6931472
      %v2009 = vmul.f32 -0.5, %v1961
      %v2010 = vadd.f32 %v2009, 1.0
      %v2011 = vmul.f32 %v2010, %v1961
      %v2012 = vand.u32 2147483647, %v1961
      %vm2013 = vcmp.lt.f32.partialorder %v2012, 0.0004427343
      %v2014 = vsel %vm2013, %v2011, %v2008
      %v2015 = vadd.f32 %v1963, 1.0
      %v2016 = vlog2.pop %v2015
      %v2017 = vmul.f32 %v2016, 0.6931472
      %v2018 = vmul.f32 -0.5, %v1963
      %v2019 = vadd.f32 %v2018, 1.0
      %v2020 = vmul.f32 %v2019, %v1963
      %v2021 = vand.u32 2147483647, %v1963
      %vm2022 = vcmp.lt.f32.partialorder %v2021, 0.0004427343
      %v2023 = vsel %vm2022, %v2020, %v2017
      %v2024 = vadd.f32 %v1965, 1.0
      %v2025 = vlog2.pop %v2024
      %v2026 = vmul.f32 %v2025, 0.6931472
      %v2027 = vmul.f32 -0.5, %v1965
      %v2028 = vadd.f32 %v2027, 1.0
      %v2029 = vmul.f32 %v2028, %v1965
      %v2030 = vand.u32 2147483647, %v1965
      %vm2031 = vcmp.lt.f32.partialorder %v2030, 0.0004427343
      %v2032 = vsel %vm2031, %v2029, %v2026
      %v2033 = vadd.f32 %v1967, 1.0
      %v2034 = vlog2.pop %v2033
      %v2035 = vmul.f32 %v2034, 0.6931472
      %v2036 = vmul.f32 -0.5, %v1967
      %v2037 = vadd.f32 %v2036, 1.0
      %v2038 = vmul.f32 %v2037, %v1967
      %v2039 = vand.u32 2147483647, %v1967
      %vm2040 = vcmp.lt.f32.partialorder %v2039, 0.0004427343
      %v2041 = vsel %vm2040, %v2038, %v2035
      %v2042 = vadd.f32 %v1969, 1.0
      %v2043 = vlog2.pop %v2042
      %v2044 = vmul.f32 %v2043, 0.6931472
      %v2045 = vmul.f32 -0.5, %v1969
      %v2046 = vadd.f32 %v2045, 1.0
      %v2047 = vmul.f32 %v2046, %v1969
      %v2048 = vand.u32 2147483647, %v1969
      %vm2049 = vcmp.lt.f32.partialorder %v2048, 0.0004427343
      %v2050 = vsel %vm2049, %v2047, %v2044
      %v2051 = vadd.f32 %v1971, 1.0
      %v2052 = vlog2.pop %v2051
      %v2053 = vmul.f32 %v2052, 0.6931472
      %v2054 = vmul.f32 -0.5, %v1971
      %v2055 = vadd.f32 %v2054, 1.0
      %v2056 = vmul.f32 %v2055, %v1971
      %v2057 = vand.u32 2147483647, %v1971
      %vm2058 = vcmp.lt.f32.partialorder %v2057, 0.0004427343
      %v2059 = vsel %vm2058, %v2056, %v2053
      %v2060 = vadd.f32 %v1973, 1.0
      %v2061 = vlog2.pop %v2060
      %v2062 = vmul.f32 %v2061, 0.6931472
      %v2063 = vmul.f32 -0.5, %v1973
      %v2064 = vadd.f32 %v2063, 1.0
      %v2065 = vmul.f32 %v2064, %v1973
      %v2066 = vand.u32 2147483647, %v1973
      %vm2067 = vcmp.lt.f32.partialorder %v2066, 0.0004427343
      %v2068 = vsel %vm2067, %v2065, %v2062
      %v2069 = vadd.f32 %v1975, 1.0
      %v2070 = vlog2.pop %v2069
      %v2071 = vmul.f32 %v2070, 0.6931472
      %v2072 = vmul.f32 -0.5, %v1975
      %v2073 = vadd.f32 %v2072, 1.0
      %v2074 = vmul.f32 %v2073, %v1975
      %v2075 = vand.u32 2147483647, %v1975
      %vm2076 = vcmp.lt.f32.partialorder %v2075, 0.0004427343
      %v2077 = vsel %vm2076, %v2074, %v2071
      %v2078 = vadd.f32 %v1977, 1.0
      %v2079 = vlog2.pop %v2078
      %v2080 = vmul.f32 %v2079, 0.6931472
      %v2081 = vmul.f32 -0.5, %v1977
      %v2082 = vadd.f32 %v2081, 1.0
      %v2083 = vmul.f32 %v2082, %v1977
      %v2084 = vand.u32 2147483647, %v1977
      %vm2085 = vcmp.lt.f32.partialorder %v2084, 0.0004427343
      %v2086 = vsel %vm2085, %v2083, %v2080
      %v2087 = vadd.f32 %v1979, 1.0
      %v2088 = vlog2.pop %v2087
      %v2089 = vmul.f32 %v2088, 0.6931472
      %v2090 = vmul.f32 -0.5, %v1979
      %v2091 = vadd.f32 %v2090, 1.0
      %v2092 = vmul.f32 %v2091, %v1979
      %v2093 = vand.u32 2147483647, %v1979
      %vm2094 = vcmp.lt.f32.partialorder %v2093, 0.0004427343
      %v2095 = vsel %vm2094, %v2092, %v2089
      %v2096 = vadd.f32 %v1981, 1.0
      %v2097 = vlog2.pop %v2096
      %v2098 = vmul.f32 %v2097, 0.6931472
      %v2099 = vmul.f32 -0.5, %v1981
      %v2100 = vadd.f32 %v2099, 1.0
      %v2101 = vmul.f32 %v2100, %v1981
      %v2102 = vand.u32 2147483647, %v1981
      %vm2103 = vcmp.lt.f32.partialorder %v2102, 0.0004427343
      %v2104 = vsel %vm2103, %v2101, %v2098
      %v2105 = vadd.f32 %v1983, 1.0
      %v2106 = vlog2.pop %v2105
      %v2107 = vmul.f32 %v2106, 0.6931472
      %v2108 = vmul.f32 -0.5, %v1983
      %v2109 = vadd.f32 %v2108, 1.0
      %v2110 = vmul.f32 %v2109, %v1983
      %v2111 = vand.u32 2147483647, %v1983
      %vm2112 = vcmp.lt.f32.partialorder %v2111, 0.0004427343
      %v2113 = vsel %vm2112, %v2110, %v2107
      %v2114 = vadd.f32 %v1985, 1.0
      %v2115 = vlog2.pop %v2114
      %v2116 = vmul.f32 %v2115, 0.6931472
      %v2117 = vmul.f32 -0.5, %v1985
      %v2118 = vadd.f32 %v2117, 1.0
      %v2119 = vmul.f32 %v2118, %v1985
      %v2120 = vand.u32 2147483647, %v1985
      %vm2121 = vcmp.lt.f32.partialorder %v2120, 0.0004427343
      %v2122 = vsel %vm2121, %v2119, %v2116
      %v2123 = vadd.f32 %v1987, 1.0
      %v2124 = vlog2.pop %v2123
      %v2125 = vmul.f32 %v2124, 0.6931472
      %v2126 = vmul.f32 -0.5, %v1987
      %v2127 = vadd.f32 %v2126, 1.0
      %v2128 = vmul.f32 %v2127, %v1987
      %v2129 = vand.u32 2147483647, %v1987
      %vm2130 = vcmp.lt.f32.partialorder %v2129, 0.0004427343
      %v2131 = vsel %vm2130, %v2128, %v2125
      %v2132 = vadd.f32 %v1876, %v1996
      %v2133 = vadd.f32 %v1877, %v2005
      %v2134 = vadd.f32 %v1878, %v2014
      %v2135 = vadd.f32 %v1879, %v2023
      %v2136 = vadd.f32 %v1880, %v2032
      %v2137 = vadd.f32 %v1881, %v2041
      %v2138 = vadd.f32 %v1882, %v2050
      %v2139 = vadd.f32 %v1883, %v2059
      %v2140 = vadd.f32 %v1884, %v2068
      %v2141 = vadd.f32 %v1885, %v2077
      %v2142 = vadd.f32 %v1886, %v2086
      %v2143 = vadd.f32 %v1887, %v2095
      %v2144 = vadd.f32 %v1888, %v2104
      %v2145 = vadd.f32 %v1889, %v2113
      %v2146 = vadd.f32 %v1890, %v2122
      %v2147 = vadd.f32 %v1891, %v2131
      %v2148 = vsel %vm1892, %v1908, %v2132
      %v2149 = vsel %vm1893, %v1909, %v2133
      %v2150 = vsel %vm1894, %v1910, %v2134
      %v2151 = vsel %vm1895, %v1911, %v2135
      %v2152 = vsel %vm1896, %v1912, %v2136
      %v2153 = vsel %vm1897, %v1913, %v2137
      %v2154 = vsel %vm1898, %v1914, %v2138
      %v2155 = vsel %vm1899, %v1915, %v2139
      %v2156 = vsel %vm1900, %v1916, %v2140
      %v2157 = vsel %vm1901, %v1917, %v2141
      %v2158 = vsel %vm1902, %v1918, %v2142
      %v2159 = vsel %vm1903, %v1919, %v2143
      %v2160 = vsel %vm1904, %v1920, %v2144
      %v2161 = vsel %vm1905, %v1921, %v2145
      %v2162 = vsel %vm1906, %v1922, %v2146
      %v2163 = vsel %vm1907, %v1923, %v2147
      %vm2164 = vcmask 7168
      %v2165 = vsel %vm2164, %v2148, 0.0
      %v2166 = vsel %vm2164, %v2149, 0.0
      %v2167 = vadd.f32 %v2165, %v2166
      %v2168 = vsel %vm2164, %v2150, 0.0
      %v2169 = vadd.f32 %v2167, %v2168
      %v2170 = vsel %vm2164, %v2151, 0.0
      %v2171 = vadd.f32 %v2169, %v2170
      %v2172 = vsel %vm2164, %v2152, 0.0
      %v2173 = vadd.f32 %v2171, %v2172
      %v2174 = vsel %vm2164, %v2153, 0.0
      %v2175 = vadd.f32 %v2173, %v2174
      %v2176 = vsel %vm2164, %v2154, 0.0
      %v2177 = vadd.f32 %v2175, %v2176
      %v2178 = vsel %vm2164, %v2155, 0.0
      %v2179 = vadd.f32 %v2177, %v2178
      %v2180 = vsel %vm2164, %v2156, 0.0
      %v2181 = vadd.f32 %v2179, %v2180
      %v2182 = vsel %vm2164, %v2157, 0.0
      %v2183 = vadd.f32 %v2181, %v2182
      %v2184 = vsel %vm2164, %v2158, 0.0
      %v2185 = vadd.f32 %v2183, %v2184
      %v2186 = vsel %vm2164, %v2159, 0.0
      %v2187 = vadd.f32 %v2185, %v2186
      %v2188 = vsel %vm2164, %v2160, 0.0
      %v2189 = vadd.f32 %v2187, %v2188
      %v2190 = vsel %vm2164, %v2161, 0.0
      %v2191 = vadd.f32 %v2189, %v2190
      %v2192 = vsel %vm2164, %v2162, 0.0
      %v2193 = vadd.f32 %v2191, %v2192
      %v2194 = vsel %vm2164, %v2163, 0.0
      %v2195 = vadd.f32 %v2193, %v2194
      %2196 = vadd.xlane.f32.xlu0 %v2195
      %v2197 = vpop.xlane.xlu0 %2196
      %v2198 = vrot.slane %v2197, 4
      %v2199 = vadd.f32 %v2197, %v2198
      %v2200 = vrot.slane %v2199, 2
      %v2201 = vadd.f32 %v2199, %v2200
      %v2202 = vrot.slane %v2201, 1
      %v2203 = vadd.f32 %v2201, %v2202
      %s2204 = vtos %v2203
      %v2205 = vmax.f32 %v1844, 0.0
      %v2206 = vmax.f32 %v1845, 0.0
      %v2207 = vmax.f32 %v1846, 0.0
      %v2208 = vmax.f32 %v1847, 0.0
      %v2209 = vmax.f32 %v1848, 0.0
      %v2210 = vmax.f32 %v1849, 0.0
      %v2211 = vmax.f32 %v1850, 0.0
      %v2212 = vmax.f32 %v1851, 0.0
      %v2213 = vmax.f32 %v1852, 0.0
      %v2214 = vmax.f32 %v1853, 0.0
      %v2215 = vmax.f32 %v1854, 0.0
      %v2216 = vmax.f32 %v1855, 0.0
      %v2217 = vmax.f32 %v1856, 0.0
      %v2218 = vmax.f32 %v1857, 0.0
      %v2219 = vmax.f32 %v1858, 0.0
      %v2220 = vmax.f32 %v1859, 0.0
      %vm2221 = vcmp.ne.f32.partialorder %v1844, %v1844
      %vm2222 = vcmp.ne.f32.partialorder %v1845, %v1845
      %vm2223 = vcmp.ne.f32.partialorder %v1846, %v1846
      %vm2224 = vcmp.ne.f32.partialorder %v1847, %v1847
      %vm2225 = vcmp.ne.f32.partialorder %v1848, %v1848
      %vm2226 = vcmp.ne.f32.partialorder %v1849, %v1849
      %vm2227 = vcmp.ne.f32.partialorder %v1850, %v1850
      %vm2228 = vcmp.ne.f32.partialorder %v1851, %v1851
      %vm2229 = vcmp.ne.f32.partialorder %v1852, %v1852
      %vm2230 = vcmp.ne.f32.partialorder %v1853, %v1853
      %vm2231 = vcmp.ne.f32.partialorder %v1854, %v1854
      %vm2232 = vcmp.ne.f32.partialorder %v1855, %v1855
      %vm2233 = vcmp.ne.f32.partialorder %v1856, %v1856
      %vm2234 = vcmp.ne.f32.partialorder %v1857, %v1857
      %vm2235 = vcmp.ne.f32.partialorder %v1858, %v1858
      %vm2236 = vcmp.ne.f32.partialorder %v1859, %v1859
      %v2237 = vadd.f32 %v1844, 0.0
      %v2238 = vadd.f32 %v1845, 0.0
      %v2239 = vadd.f32 %v1846, 0.0
      %v2240 = vadd.f32 %v1847, 0.0
      %v2241 = vadd.f32 %v1848, 0.0
      %v2242 = vadd.f32 %v1849, 0.0
      %v2243 = vadd.f32 %v1850, 0.0
      %v2244 = vadd.f32 %v1851, 0.0
      %v2245 = vadd.f32 %v1852, 0.0
      %v2246 = vadd.f32 %v1853, 0.0
      %v2247 = vadd.f32 %v1854, 0.0
      %v2248 = vadd.f32 %v1855, 0.0
      %v2249 = vadd.f32 %v1856, 0.0
      %v2250 = vadd.f32 %v1857, 0.0
      %v2251 = vadd.f32 %v1858, 0.0
      %v2252 = vadd.f32 %v1859, 0.0
      %v2253 = vand.u32 2147483647, %v1844
      %v2254 = vand.u32 2147483647, %v1845
      %v2255 = vand.u32 2147483647, %v1846
      %v2256 = vand.u32 2147483647, %v1847
      %v2257 = vand.u32 2147483647, %v1848
      %v2258 = vand.u32 2147483647, %v1849
      %v2259 = vand.u32 2147483647, %v1850
      %v2260 = vand.u32 2147483647, %v1851
      %v2261 = vand.u32 2147483647, %v1852
      %v2262 = vand.u32 2147483647, %v1853
      %v2263 = vand.u32 2147483647, %v1854
      %v2264 = vand.u32 2147483647, %v1855
      %v2265 = vand.u32 2147483647, %v1856
      %v2266 = vand.u32 2147483647, %v1857
      %v2267 = vand.u32 2147483647, %v1858
      %v2268 = vand.u32 2147483647, %v1859
      %v2269 = vsub.f32 0.0, %v2253
      %v2270 = vsub.f32 0.0, %v2254
      %v2271 = vsub.f32 0.0, %v2255
      %v2272 = vsub.f32 0.0, %v2256
      %v2273 = vsub.f32 0.0, %v2257
      %v2274 = vsub.f32 0.0, %v2258
      %v2275 = vsub.f32 0.0, %v2259
      %v2276 = vsub.f32 0.0, %v2260
      %v2277 = vsub.f32 0.0, %v2261
      %v2278 = vsub.f32 0.0, %v2262
      %v2279 = vsub.f32 0.0, %v2263
      %v2280 = vsub.f32 0.0, %v2264
      %v2281 = vsub.f32 0.0, %v2265
      %v2282 = vsub.f32 0.0, %v2266
      %v2283 = vsub.f32 0.0, %v2267
      %v2284 = vsub.f32 0.0, %v2268
      %v2285 = vmul.f32 %v2269, 1.442695
      %v2286 = vpow.pop %v2285
      %v2287 = vmul.f32 %v2270, 1.442695
      %v2288 = vpow.pop %v2287
      %v2289 = vmul.f32 %v2271, 1.442695
      %v2290 = vpow.pop %v2289
      %v2291 = vmul.f32 %v2272, 1.442695
      %v2292 = vpow.pop %v2291
      %v2293 = vmul.f32 %v2273, 1.442695
      %v2294 = vpow.pop %v2293
      %v2295 = vmul.f32 %v2274, 1.442695
      %v2296 = vpow.pop %v2295
      %v2297 = vmul.f32 %v2275, 1.442695
      %v2298 = vpow.pop %v2297
      %v2299 = vmul.f32 %v2276, 1.442695
      %v2300 = vpow.pop %v2299
      %v2301 = vmul.f32 %v2277, 1.442695
      %v2302 = vpow.pop %v2301
      %v2303 = vmul.f32 %v2278, 1.442695
      %v2304 = vpow.pop %v2303
      %v2305 = vmul.f32 %v2279, 1.442695
      %v2306 = vpow.pop %v2305
      %v2307 = vmul.f32 %v2280, 1.442695
      %v2308 = vpow.pop %v2307
      %v2309 = vmul.f32 %v2281, 1.442695
      %v2310 = vpow.pop %v2309
      %v2311 = vmul.f32 %v2282, 1.442695
      %v2312 = vpow.pop %v2311
      %v2313 = vmul.f32 %v2283, 1.442695
      %v2314 = vpow.pop %v2313
      %v2315 = vmul.f32 %v2284, 1.442695
      %v2316 = vpow.pop %v2315
      %v2317 = vadd.f32 %v2286, 1.0
      %v2318 = vlog2.pop %v2317
      %v2319 = vmul.f32 %v2318, 0.6931472
      %v2320 = vmul.f32 -0.5, %v2286
      %v2321 = vadd.f32 %v2320, 1.0
      %v2322 = vmul.f32 %v2321, %v2286
      %v2323 = vand.u32 2147483647, %v2286
      %vm2324 = vcmp.lt.f32.partialorder %v2323, 0.0004427343
      %v2325 = vsel %vm2324, %v2322, %v2319
      %v2326 = vadd.f32 %v2288, 1.0
      %v2327 = vlog2.pop %v2326
      %v2328 = vmul.f32 %v2327, 0.6931472
      %v2329 = vmul.f32 -0.5, %v2288
      %v2330 = vadd.f32 %v2329, 1.0
      %v2331 = vmul.f32 %v2330, %v2288
      %v2332 = vand.u32 2147483647, %v2288
      %vm2333 = vcmp.lt.f32.partialorder %v2332, 0.0004427343
      %v2334 = vsel %vm2333, %v2331, %v2328
      %v2335 = vadd.f32 %v2290, 1.0
      %v2336 = vlog2.pop %v2335
      %v2337 = vmul.f32 %v2336, 0.6931472
      %v2338 = vmul.f32 -0.5, %v2290
      %v2339 = vadd.f32 %v2338, 1.0
      %v2340 = vmul.f32 %v2339, %v2290
      %v2341 = vand.u32 2147483647, %v2290
      %vm2342 = vcmp.lt.f32.partialorder %v2341, 0.0004427343
      %v2343 = vsel %vm2342, %v2340, %v2337
      %v2344 = vadd.f32 %v2292, 1.0
      %v2345 = vlog2.pop %v2344
      %v2346 = vmul.f32 %v2345, 0.6931472
      %v2347 = vmul.f32 -0.5, %v2292
      %v2348 = vadd.f32 %v2347, 1.0
      %v2349 = vmul.f32 %v2348, %v2292
      %v2350 = vand.u32 2147483647, %v2292
      %vm2351 = vcmp.lt.f32.partialorder %v2350, 0.0004427343
      %v2352 = vsel %vm2351, %v2349, %v2346
      %v2353 = vadd.f32 %v2294, 1.0
      %v2354 = vlog2.pop %v2353
      %v2355 = vmul.f32 %v2354, 0.6931472
      %v2356 = vmul.f32 -0.5, %v2294
      %v2357 = vadd.f32 %v2356, 1.0
      %v2358 = vmul.f32 %v2357, %v2294
      %v2359 = vand.u32 2147483647, %v2294
      %vm2360 = vcmp.lt.f32.partialorder %v2359, 0.0004427343
      %v2361 = vsel %vm2360, %v2358, %v2355
      %v2362 = vadd.f32 %v2296, 1.0
      %v2363 = vlog2.pop %v2362
      %v2364 = vmul.f32 %v2363, 0.6931472
      %v2365 = vmul.f32 -0.5, %v2296
      %v2366 = vadd.f32 %v2365, 1.0
      %v2367 = vmul.f32 %v2366, %v2296
      %v2368 = vand.u32 2147483647, %v2296
      %vm2369 = vcmp.lt.f32.partialorder %v2368, 0.0004427343
      %v2370 = vsel %vm2369, %v2367, %v2364
      %v2371 = vadd.f32 %v2298, 1.0
      %v2372 = vlog2.pop %v2371
      %v2373 = vmul.f32 %v2372, 0.6931472
      %v2374 = vmul.f32 -0.5, %v2298
      %v2375 = vadd.f32 %v2374, 1.0
      %v2376 = vmul.f32 %v2375, %v2298
      %v2377 = vand.u32 2147483647, %v2298
      %vm2378 = vcmp.lt.f32.partialorder %v2377, 0.0004427343
      %v2379 = vsel %vm2378, %v2376, %v2373
      %v2380 = vadd.f32 %v2300, 1.0
      %v2381 = vlog2.pop %v2380
      %v2382 = vmul.f32 %v2381, 0.6931472
      %v2383 = vmul.f32 -0.5, %v2300
      %v2384 = vadd.f32 %v2383, 1.0
      %v2385 = vmul.f32 %v2384, %v2300
      %v2386 = vand.u32 2147483647, %v2300
      %vm2387 = vcmp.lt.f32.partialorder %v2386, 0.0004427343
      %v2388 = vsel %vm2387, %v2385, %v2382
      %v2389 = vadd.f32 %v2302, 1.0
      %v2390 = vlog2.pop %v2389
      %v2391 = vmul.f32 %v2390, 0.6931472
      %v2392 = vmul.f32 -0.5, %v2302
      %v2393 = vadd.f32 %v2392, 1.0
      %v2394 = vmul.f32 %v2393, %v2302
      %v2395 = vand.u32 2147483647, %v2302
      %vm2396 = vcmp.lt.f32.partialorder %v2395, 0.0004427343
      %v2397 = vsel %vm2396, %v2394, %v2391
      %v2398 = vadd.f32 %v2304, 1.0
      %v2399 = vlog2.pop %v2398
      %v2400 = vmul.f32 %v2399, 0.6931472
      %v2401 = vmul.f32 -0.5, %v2304
      %v2402 = vadd.f32 %v2401, 1.0
      %v2403 = vmul.f32 %v2402, %v2304
      %v2404 = vand.u32 2147483647, %v2304
      %vm2405 = vcmp.lt.f32.partialorder %v2404, 0.0004427343
      %v2406 = vsel %vm2405, %v2403, %v2400
      %v2407 = vadd.f32 %v2306, 1.0
      %v2408 = vlog2.pop %v2407
      %v2409 = vmul.f32 %v2408, 0.6931472
      %v2410 = vmul.f32 -0.5, %v2306
      %v2411 = vadd.f32 %v2410, 1.0
      %v2412 = vmul.f32 %v2411, %v2306
      %v2413 = vand.u32 2147483647, %v2306
      %vm2414 = vcmp.lt.f32.partialorder %v2413, 0.0004427343
      %v2415 = vsel %vm2414, %v2412, %v2409
      %v2416 = vadd.f32 %v2308, 1.0
      %v2417 = vlog2.pop %v2416
      %v2418 = vmul.f32 %v2417, 0.6931472
      %v2419 = vmul.f32 -0.5, %v2308
      %v2420 = vadd.f32 %v2419, 1.0
      %v2421 = vmul.f32 %v2420, %v2308
      %v2422 = vand.u32 2147483647, %v2308
      %vm2423 = vcmp.lt.f32.partialorder %v2422, 0.0004427343
      %v2424 = vsel %vm2423, %v2421, %v2418
      %v2425 = vadd.f32 %v2310, 1.0
      %v2426 = vlog2.pop %v2425
      %v2427 = vmul.f32 %v2426, 0.6931472
      %v2428 = vmul.f32 -0.5, %v2310
      %v2429 = vadd.f32 %v2428, 1.0
      %v2430 = vmul.f32 %v2429, %v2310
      %v2431 = vand.u32 2147483647, %v2310
      %vm2432 = vcmp.lt.f32.partialorder %v2431, 0.0004427343
      %v2433 = vsel %vm2432, %v2430, %v2427
      %v2434 = vadd.f32 %v2312, 1.0
      %v2435 = vlog2.pop %v2434
      %v2436 = vmul.f32 %v2435, 0.6931472
      %v2437 = vmul.f32 -0.5, %v2312
      %v2438 = vadd.f32 %v2437, 1.0
      %v2439 = vmul.f32 %v2438, %v2312
      %v2440 = vand.u32 2147483647, %v2312
      %vm2441 = vcmp.lt.f32.partialorder %v2440, 0.0004427343
      %v2442 = vsel %vm2441, %v2439, %v2436
      %v2443 = vadd.f32 %v2314, 1.0
      %v2444 = vlog2.pop %v2443
      %v2445 = vmul.f32 %v2444, 0.6931472
      %v2446 = vmul.f32 -0.5, %v2314
      %v2447 = vadd.f32 %v2446, 1.0
      %v2448 = vmul.f32 %v2447, %v2314
      %v2449 = vand.u32 2147483647, %v2314
      %vm2450 = vcmp.lt.f32.partialorder %v2449, 0.0004427343
      %v2451 = vsel %vm2450, %v2448, %v2445
      %v2452 = vadd.f32 %v2316, 1.0
      %v2453 = vlog2.pop %v2452
      %v2454 = vmul.f32 %v2453, 0.6931472
      %v2455 = vmul.f32 -0.5, %v2316
      %v2456 = vadd.f32 %v2455, 1.0
      %v2457 = vmul.f32 %v2456, %v2316
      %v2458 = vand.u32 2147483647, %v2316
      %vm2459 = vcmp.lt.f32.partialorder %v2458, 0.0004427343
      %v2460 = vsel %vm2459, %v2457, %v2454
      %v2461 = vadd.f32 %v2205, %v2325
      %v2462 = vadd.f32 %v2206, %v2334
      %v2463 = vadd.f32 %v2207, %v2343
      %v2464 = vadd.f32 %v2208, %v2352
      %v2465 = vadd.f32 %v2209, %v2361
      %v2466 = vadd.f32 %v2210, %v2370
      %v2467 = vadd.f32 %v2211, %v2379
      %v2468 = vadd.f32 %v2212, %v2388
      %v2469 = vadd.f32 %v2213, %v2397
      %v2470 = vadd.f32 %v2214, %v2406
      %v2471 = vadd.f32 %v2215, %v2415
      %v2472 = vadd.f32 %v2216, %v2424
      %v2473 = vadd.f32 %v2217, %v2433
      %v2474 = vadd.f32 %v2218, %v2442
      %v2475 = vadd.f32 %v2219, %v2451
      %v2476 = vadd.f32 %v2220, %v2460
      %v2477 = vsel %vm2221, %v2237, %v2461
      %v2478 = vsel %vm2222, %v2238, %v2462
      %v2479 = vsel %vm2223, %v2239, %v2463
      %v2480 = vsel %vm2224, %v2240, %v2464
      %v2481 = vsel %vm2225, %v2241, %v2465
      %v2482 = vsel %vm2226, %v2242, %v2466
      %v2483 = vsel %vm2227, %v2243, %v2467
      %v2484 = vsel %vm2228, %v2244, %v2468
      %v2485 = vsel %vm2229, %v2245, %v2469
      %v2486 = vsel %vm2230, %v2246, %v2470
      %v2487 = vsel %vm2231, %v2247, %v2471
      %v2488 = vsel %vm2232, %v2248, %v2472
      %v2489 = vsel %vm2233, %v2249, %v2473
      %v2490 = vsel %vm2234, %v2250, %v2474
      %v2491 = vsel %vm2235, %v2251, %v2475
      %v2492 = vsel %vm2236, %v2252, %v2476
      %v2493 = vsel %vm2164, %v2477, 0.0
      %v2494 = vsel %vm2164, %v2478, 0.0
      %v2495 = vadd.f32 %v2493, %v2494
      %v2496 = vsel %vm2164, %v2479, 0.0
      %v2497 = vadd.f32 %v2495, %v2496
      %v2498 = vsel %vm2164, %v2480, 0.0
      %v2499 = vadd.f32 %v2497, %v2498
      %v2500 = vsel %vm2164, %v2481, 0.0
      %v2501 = vadd.f32 %v2499, %v2500
      %v2502 = vsel %vm2164, %v2482, 0.0
      %v2503 = vadd.f32 %v2501, %v2502
      %v2504 = vsel %vm2164, %v2483, 0.0
      %v2505 = vadd.f32 %v2503, %v2504
      %v2506 = vsel %vm2164, %v2484, 0.0
      %v2507 = vadd.f32 %v2505, %v2506
      %v2508 = vsel %vm2164, %v2485, 0.0
      %v2509 = vadd.f32 %v2507, %v2508
      %v2510 = vsel %vm2164, %v2486, 0.0
      %v2511 = vadd.f32 %v2509, %v2510
      %v2512 = vsel %vm2164, %v2487, 0.0
      %v2513 = vadd.f32 %v2511, %v2512
      %v2514 = vsel %vm2164, %v2488, 0.0
      %v2515 = vadd.f32 %v2513, %v2514
      %v2516 = vsel %vm2164, %v2489, 0.0
      %v2517 = vadd.f32 %v2515, %v2516
      %v2518 = vsel %vm2164, %v2490, 0.0
      %v2519 = vadd.f32 %v2517, %v2518
      %v2520 = vsel %vm2164, %v2491, 0.0
      %v2521 = vadd.f32 %v2519, %v2520
      %v2522 = vsel %vm2164, %v2492, 0.0
      %v2523 = vadd.f32 %v2521, %v2522
      %2524 = vadd.xlane.f32.xlu0 %v2523
      %v2525 = vpop.xlane.xlu0 %2524
      %v2526 = vrot.slane %v2525, 4
      %v2527 = vadd.f32 %v2525, %v2526
      %v2528 = vrot.slane %v2527, 2
      %v2529 = vadd.f32 %v2527, %v2528
      %v2530 = vrot.slane %v2529, 1
      %v2531 = vadd.f32 %v2529, %v2530
      %s2532 = vtos %v2531
      %v2533 = vsub.f32 0.0, %v1844
      %v2534 = vsub.f32 0.0, %v1845
      %v2535 = vsub.f32 0.0, %v1846
      %v2536 = vsub.f32 0.0, %v1847
      %v2537 = vsub.f32 0.0, %v1848
      %v2538 = vsub.f32 0.0, %v1849
      %v2539 = vsub.f32 0.0, %v1850
      %v2540 = vsub.f32 0.0, %v1851
      %v2541 = vsub.f32 0.0, %v1852
      %v2542 = vsub.f32 0.0, %v1853
      %v2543 = vsub.f32 0.0, %v1854
      %v2544 = vsub.f32 0.0, %v1855
      %v2545 = vsub.f32 0.0, %v1856
      %v2546 = vsub.f32 0.0, %v1857
      %v2547 = vsub.f32 0.0, %v1858
      %v2548 = vsub.f32 0.0, %v1859
      %v2549 = vmax.f32 %v2533, 0.0
      %v2550 = vmax.f32 %v2534, 0.0
      %v2551 = vmax.f32 %v2535, 0.0
      %v2552 = vmax.f32 %v2536, 0.0
      %v2553 = vmax.f32 %v2537, 0.0
      %v2554 = vmax.f32 %v2538, 0.0
      %v2555 = vmax.f32 %v2539, 0.0
      %v2556 = vmax.f32 %v2540, 0.0
      %v2557 = vmax.f32 %v2541, 0.0
      %v2558 = vmax.f32 %v2542, 0.0
      %v2559 = vmax.f32 %v2543, 0.0
      %v2560 = vmax.f32 %v2544, 0.0
      %v2561 = vmax.f32 %v2545, 0.0
      %v2562 = vmax.f32 %v2546, 0.0
      %v2563 = vmax.f32 %v2547, 0.0
      %v2564 = vmax.f32 %v2548, 0.0
      %vm2565 = vcmp.ne.f32.partialorder %v2533, %v2533
      %vm2566 = vcmp.ne.f32.partialorder %v2534, %v2534
      %vm2567 = vcmp.ne.f32.partialorder %v2535, %v2535
      %vm2568 = vcmp.ne.f32.partialorder %v2536, %v2536
      %vm2569 = vcmp.ne.f32.partialorder %v2537, %v2537
      %vm2570 = vcmp.ne.f32.partialorder %v2538, %v2538
      %vm2571 = vcmp.ne.f32.partialorder %v2539, %v2539
      %vm2572 = vcmp.ne.f32.partialorder %v2540, %v2540
      %vm2573 = vcmp.ne.f32.partialorder %v2541, %v2541
      %vm2574 = vcmp.ne.f32.partialorder %v2542, %v2542
      %vm2575 = vcmp.ne.f32.partialorder %v2543, %v2543
      %vm2576 = vcmp.ne.f32.partialorder %v2544, %v2544
      %vm2577 = vcmp.ne.f32.partialorder %v2545, %v2545
      %vm2578 = vcmp.ne.f32.partialorder %v2546, %v2546
      %vm2579 = vcmp.ne.f32.partialorder %v2547, %v2547
      %vm2580 = vcmp.ne.f32.partialorder %v2548, %v2548
      %v2581 = vadd.f32 %v2533, 0.0
      %v2582 = vadd.f32 %v2534, 0.0
      %v2583 = vadd.f32 %v2535, 0.0
      %v2584 = vadd.f32 %v2536, 0.0
      %v2585 = vadd.f32 %v2537, 0.0
      %v2586 = vadd.f32 %v2538, 0.0
      %v2587 = vadd.f32 %v2539, 0.0
      %v2588 = vadd.f32 %v2540, 0.0
      %v2589 = vadd.f32 %v2541, 0.0
      %v2590 = vadd.f32 %v2542, 0.0
      %v2591 = vadd.f32 %v2543, 0.0
      %v2592 = vadd.f32 %v2544, 0.0
      %v2593 = vadd.f32 %v2545, 0.0
      %v2594 = vadd.f32 %v2546, 0.0
      %v2595 = vadd.f32 %v2547, 0.0
      %v2596 = vadd.f32 %v2548, 0.0
      %v2597 = vand.u32 2147483647, %v2533
      %v2598 = vand.u32 2147483647, %v2534
      %v2599 = vand.u32 2147483647, %v2535
      %v2600 = vand.u32 2147483647, %v2536
      %v2601 = vand.u32 2147483647, %v2537
      %v2602 = vand.u32 2147483647, %v2538
      %v2603 = vand.u32 2147483647, %v2539
      %v2604 = vand.u32 2147483647, %v2540
      %v2605 = vand.u32 2147483647, %v2541
      %v2606 = vand.u32 2147483647, %v2542
      %v2607 = vand.u32 2147483647, %v2543
      %v2608 = vand.u32 2147483647, %v2544
      %v2609 = vand.u32 2147483647, %v2545
      %v2610 = vand.u32 2147483647, %v2546
      %v2611 = vand.u32 2147483647, %v2547
      %v2612 = vand.u32 2147483647, %v2548
      %v2613 = vsub.f32 0.0, %v2597
      %v2614 = vsub.f32 0.0, %v2598
      %v2615 = vsub.f32 0.0, %v2599
      %v2616 = vsub.f32 0.0, %v2600
      %v2617 = vsub.f32 0.0, %v2601
      %v2618 = vsub.f32 0.0, %v2602
      %v2619 = vsub.f32 0.0, %v2603
      %v2620 = vsub.f32 0.0, %v2604
      %v2621 = vsub.f32 0.0, %v2605
      %v2622 = vsub.f32 0.0, %v2606
      %v2623 = vsub.f32 0.0, %v2607
      %v2624 = vsub.f32 0.0, %v2608
      %v2625 = vsub.f32 0.0, %v2609
      %v2626 = vsub.f32 0.0, %v2610
      %v2627 = vsub.f32 0.0, %v2611
      %v2628 = vsub.f32 0.0, %v2612
      %v2629 = vmul.f32 %v2613, 1.442695
      %v2630 = vpow.pop %v2629
      %v2631 = vmul.f32 %v2614, 1.442695
      %v2632 = vpow.pop %v2631
      %v2633 = vmul.f32 %v2615, 1.442695
      %v2634 = vpow.pop %v2633
      %v2635 = vmul.f32 %v2616, 1.442695
      %v2636 = vpow.pop %v2635
      %v2637 = vmul.f32 %v2617, 1.442695
      %v2638 = vpow.pop %v2637
      %v2639 = vmul.f32 %v2618, 1.442695
      %v2640 = vpow.pop %v2639
      %v2641 = vmul.f32 %v2619, 1.442695
      %v2642 = vpow.pop %v2641
      %v2643 = vmul.f32 %v2620, 1.442695
      %v2644 = vpow.pop %v2643
      %v2645 = vmul.f32 %v2621, 1.442695
      %v2646 = vpow.pop %v2645
      %v2647 = vmul.f32 %v2622, 1.442695
      %v2648 = vpow.pop %v2647
      %v2649 = vmul.f32 %v2623, 1.442695
      %v2650 = vpow.pop %v2649
      %v2651 = vmul.f32 %v2624, 1.442695
      %v2652 = vpow.pop %v2651
      %v2653 = vmul.f32 %v2625, 1.442695
      %v2654 = vpow.pop %v2653
      %v2655 = vmul.f32 %v2626, 1.442695
      %v2656 = vpow.pop %v2655
      %v2657 = vmul.f32 %v2627, 1.442695
      %v2658 = vpow.pop %v2657
      %v2659 = vmul.f32 %v2628, 1.442695
      %v2660 = vpow.pop %v2659
      %v2661 = vadd.f32 %v2630, 1.0
      %v2662 = vlog2.pop %v2661
      %v2663 = vmul.f32 %v2662, 0.6931472
      %v2664 = vmul.f32 -0.5, %v2630
      %v2665 = vadd.f32 %v2664, 1.0
      %v2666 = vmul.f32 %v2665, %v2630
      %v2667 = vand.u32 2147483647, %v2630
      %vm2668 = vcmp.lt.f32.partialorder %v2667, 0.0004427343
      %v2669 = vsel %vm2668, %v2666, %v2663
      %v2670 = vadd.f32 %v2632, 1.0
      %v2671 = vlog2.pop %v2670
      %v2672 = vmul.f32 %v2671, 0.6931472
      %v2673 = vmul.f32 -0.5, %v2632
      %v2674 = vadd.f32 %v2673, 1.0
      %v2675 = vmul.f32 %v2674, %v2632
      %v2676 = vand.u32 2147483647, %v2632
      %vm2677 = vcmp.lt.f32.partialorder %v2676, 0.0004427343
      %v2678 = vsel %vm2677, %v2675, %v2672
      %v2679 = vadd.f32 %v2634, 1.0
      %v2680 = vlog2.pop %v2679
      %v2681 = vmul.f32 %v2680, 0.6931472
      %v2682 = vmul.f32 -0.5, %v2634
      %v2683 = vadd.f32 %v2682, 1.0
      %v2684 = vmul.f32 %v2683, %v2634
      %v2685 = vand.u32 2147483647, %v2634
      %vm2686 = vcmp.lt.f32.partialorder %v2685, 0.0004427343
      %v2687 = vsel %vm2686, %v2684, %v2681
      %v2688 = vadd.f32 %v2636, 1.0
      %v2689 = vlog2.pop %v2688
      %v2690 = vmul.f32 %v2689, 0.6931472
      %v2691 = vmul.f32 -0.5, %v2636
      %v2692 = vadd.f32 %v2691, 1.0
      %v2693 = vmul.f32 %v2692, %v2636
      %v2694 = vand.u32 2147483647, %v2636
      %vm2695 = vcmp.lt.f32.partialorder %v2694, 0.0004427343
      %v2696 = vsel %vm2695, %v2693, %v2690
      %v2697 = vadd.f32 %v2638, 1.0
      %v2698 = vlog2.pop %v2697
      %v2699 = vmul.f32 %v2698, 0.6931472
      %v2700 = vmul.f32 -0.5, %v2638
      %v2701 = vadd.f32 %v2700, 1.0
      %v2702 = vmul.f32 %v2701, %v2638
      %v2703 = vand.u32 2147483647, %v2638
      %vm2704 = vcmp.lt.f32.partialorder %v2703, 0.0004427343
      %v2705 = vsel %vm2704, %v2702, %v2699
      %v2706 = vadd.f32 %v2640, 1.0
      %v2707 = vlog2.pop %v2706
      %v2708 = vmul.f32 %v2707, 0.6931472
      %v2709 = vmul.f32 -0.5, %v2640
      %v2710 = vadd.f32 %v2709, 1.0
      %v2711 = vmul.f32 %v2710, %v2640
      %v2712 = vand.u32 2147483647, %v2640
      %vm2713 = vcmp.lt.f32.partialorder %v2712, 0.0004427343
      %v2714 = vsel %vm2713, %v2711, %v2708
      %v2715 = vadd.f32 %v2642, 1.0
      %v2716 = vlog2.pop %v2715
      %v2717 = vmul.f32 %v2716, 0.6931472
      %v2718 = vmul.f32 -0.5, %v2642
      %v2719 = vadd.f32 %v2718, 1.0
      %v2720 = vmul.f32 %v2719, %v2642
      %v2721 = vand.u32 2147483647, %v2642
      %vm2722 = vcmp.lt.f32.partialorder %v2721, 0.0004427343
      %v2723 = vsel %vm2722, %v2720, %v2717
      %v2724 = vadd.f32 %v2644, 1.0
      %v2725 = vlog2.pop %v2724
      %v2726 = vmul.f32 %v2725, 0.6931472
      %v2727 = vmul.f32 -0.5, %v2644
      %v2728 = vadd.f32 %v2727, 1.0
      %v2729 = vmul.f32 %v2728, %v2644
      %v2730 = vand.u32 2147483647, %v2644
      %vm2731 = vcmp.lt.f32.partialorder %v2730, 0.0004427343
      %v2732 = vsel %vm2731, %v2729, %v2726
      %v2733 = vadd.f32 %v2646, 1.0
      %v2734 = vlog2.pop %v2733
      %v2735 = vmul.f32 %v2734, 0.6931472
      %v2736 = vmul.f32 -0.5, %v2646
      %v2737 = vadd.f32 %v2736, 1.0
      %v2738 = vmul.f32 %v2737, %v2646
      %v2739 = vand.u32 2147483647, %v2646
      %vm2740 = vcmp.lt.f32.partialorder %v2739, 0.0004427343
      %v2741 = vsel %vm2740, %v2738, %v2735
      %v2742 = vadd.f32 %v2648, 1.0
      %v2743 = vlog2.pop %v2742
      %v2744 = vmul.f32 %v2743, 0.6931472
      %v2745 = vmul.f32 -0.5, %v2648
      %v2746 = vadd.f32 %v2745, 1.0
      %v2747 = vmul.f32 %v2746, %v2648
      %v2748 = vand.u32 2147483647, %v2648
      %vm2749 = vcmp.lt.f32.partialorder %v2748, 0.0004427343
      %v2750 = vsel %vm2749, %v2747, %v2744
      %v2751 = vadd.f32 %v2650, 1.0
      %v2752 = vlog2.pop %v2751
      %v2753 = vmul.f32 %v2752, 0.6931472
      %v2754 = vmul.f32 -0.5, %v2650
      %v2755 = vadd.f32 %v2754, 1.0
      %v2756 = vmul.f32 %v2755, %v2650
      %v2757 = vand.u32 2147483647, %v2650
      %vm2758 = vcmp.lt.f32.partialorder %v2757, 0.0004427343
      %v2759 = vsel %vm2758, %v2756, %v2753
      %v2760 = vadd.f32 %v2652, 1.0
      %v2761 = vlog2.pop %v2760
      %v2762 = vmul.f32 %v2761, 0.6931472
      %v2763 = vmul.f32 -0.5, %v2652
      %v2764 = vadd.f32 %v2763, 1.0
      %v2765 = vmul.f32 %v2764, %v2652
      %v2766 = vand.u32 2147483647, %v2652
      %vm2767 = vcmp.lt.f32.partialorder %v2766, 0.0004427343
      %v2768 = vsel %vm2767, %v2765, %v2762
      %v2769 = vadd.f32 %v2654, 1.0
      %v2770 = vlog2.pop %v2769
      %v2771 = vmul.f32 %v2770, 0.6931472
      %v2772 = vmul.f32 -0.5, %v2654
      %v2773 = vadd.f32 %v2772, 1.0
      %v2774 = vmul.f32 %v2773, %v2654
      %v2775 = vand.u32 2147483647, %v2654
      %vm2776 = vcmp.lt.f32.partialorder %v2775, 0.0004427343
      %v2777 = vsel %vm2776, %v2774, %v2771
      %v2778 = vadd.f32 %v2656, 1.0
      %v2779 = vlog2.pop %v2778
      %v2780 = vmul.f32 %v2779, 0.6931472
      %v2781 = vmul.f32 -0.5, %v2656
      %v2782 = vadd.f32 %v2781, 1.0
      %v2783 = vmul.f32 %v2782, %v2656
      %v2784 = vand.u32 2147483647, %v2656
      %vm2785 = vcmp.lt.f32.partialorder %v2784, 0.0004427343
      %v2786 = vsel %vm2785, %v2783, %v2780
      %v2787 = vadd.f32 %v2658, 1.0
      %v2788 = vlog2.pop %v2787
      %v2789 = vmul.f32 %v2788, 0.6931472
      %v2790 = vmul.f32 -0.5, %v2658
      %v2791 = vadd.f32 %v2790, 1.0
      %v2792 = vmul.f32 %v2791, %v2658
      %v2793 = vand.u32 2147483647, %v2658
      %vm2794 = vcmp.lt.f32.partialorder %v2793, 0.0004427343
      %v2795 = vsel %vm2794, %v2792, %v2789
      %v2796 = vadd.f32 %v2660, 1.0
      %v2797 = vlog2.pop %v2796
      %v2798 = vmul.f32 %v2797, 0.6931472
      %v2799 = vmul.f32 -0.5, %v2660
      %v2800 = vadd.f32 %v2799, 1.0
      %v2801 = vmul.f32 %v2800, %v2660
      %v2802 = vand.u32 2147483647, %v2660
      %vm2803 = vcmp.lt.f32.partialorder %v2802, 0.0004427343
      %v2804 = vsel %vm2803, %v2801, %v2798
      %v2805 = vadd.f32 %v2549, %v2669
      %v2806 = vadd.f32 %v2550, %v2678
      %v2807 = vadd.f32 %v2551, %v2687
      %v2808 = vadd.f32 %v2552, %v2696
      %v2809 = vadd.f32 %v2553, %v2705
      %v2810 = vadd.f32 %v2554, %v2714
      %v2811 = vadd.f32 %v2555, %v2723
      %v2812 = vadd.f32 %v2556, %v2732
      %v2813 = vadd.f32 %v2557, %v2741
      %v2814 = vadd.f32 %v2558, %v2750
      %v2815 = vadd.f32 %v2559, %v2759
      %v2816 = vadd.f32 %v2560, %v2768
      %v2817 = vadd.f32 %v2561, %v2777
      %v2818 = vadd.f32 %v2562, %v2786
      %v2819 = vadd.f32 %v2563, %v2795
      %v2820 = vadd.f32 %v2564, %v2804
      %v2821 = vsel %vm2565, %v2581, %v2805
      %v2822 = vsel %vm2566, %v2582, %v2806
      %v2823 = vsel %vm2567, %v2583, %v2807
      %v2824 = vsel %vm2568, %v2584, %v2808
      %v2825 = vsel %vm2569, %v2585, %v2809
      %v2826 = vsel %vm2570, %v2586, %v2810
      %v2827 = vsel %vm2571, %v2587, %v2811
      %v2828 = vsel %vm2572, %v2588, %v2812
      %v2829 = vsel %vm2573, %v2589, %v2813
      %v2830 = vsel %vm2574, %v2590, %v2814
      %v2831 = vsel %vm2575, %v2591, %v2815
      %v2832 = vsel %vm2576, %v2592, %v2816
      %v2833 = vsel %vm2577, %v2593, %v2817
      %v2834 = vsel %vm2578, %v2594, %v2818
      %v2835 = vsel %vm2579, %v2595, %v2819
      %v2836 = vsel %vm2580, %v2596, %v2820
      %v2837 = vsel %vm2164, %v2821, 0.0
      %v2838 = vsel %vm2164, %v2822, 0.0
      %v2839 = vadd.f32 %v2837, %v2838
      %v2840 = vsel %vm2164, %v2823, 0.0
      %v2841 = vadd.f32 %v2839, %v2840
      %v2842 = vsel %vm2164, %v2824, 0.0
      %v2843 = vadd.f32 %v2841, %v2842
      %v2844 = vsel %vm2164, %v2825, 0.0
      %v2845 = vadd.f32 %v2843, %v2844
      %v2846 = vsel %vm2164, %v2826, 0.0
      %v2847 = vadd.f32 %v2845, %v2846
      %v2848 = vsel %vm2164, %v2827, 0.0
      %v2849 = vadd.f32 %v2847, %v2848
      %v2850 = vsel %vm2164, %v2828, 0.0
      %v2851 = vadd.f32 %v2849, %v2850
      %v2852 = vsel %vm2164, %v2829, 0.0
      %v2853 = vadd.f32 %v2851, %v2852
      %v2854 = vsel %vm2164, %v2830, 0.0
      %v2855 = vadd.f32 %v2853, %v2854
      %v2856 = vsel %vm2164, %v2831, 0.0
      %v2857 = vadd.f32 %v2855, %v2856
      %v2858 = vsel %vm2164, %v2832, 0.0
      %v2859 = vadd.f32 %v2857, %v2858
      %v2860 = vsel %vm2164, %v2833, 0.0
      %v2861 = vadd.f32 %v2859, %v2860
      %v2862 = vsel %vm2164, %v2834, 0.0
      %v2863 = vadd.f32 %v2861, %v2862
      %v2864 = vsel %vm2164, %v2835, 0.0
      %v2865 = vadd.f32 %v2863, %v2864
      %v2866 = vsel %vm2164, %v2836, 0.0
      %v2867 = vadd.f32 %v2865, %v2866
      %2868 = vadd.xlane.f32.xlu0 %v2867
      %v2869 = vpop.xlane.xlu0 %2868
      %v2870 = vrot.slane %v2869, 4
      %v2871 = vadd.f32 %v2869, %v2870
      %v2872 = vrot.slane %v2871, 2
      %v2873 = vadd.f32 %v2871, %v2872
      %v2874 = vrot.slane %v2873, 1
      %v2875 = vadd.f32 %v2873, %v2874
      %s2876 = vtos %v2875
      %s2877 = sld [smem:[#allocation2]]
      %s2878 = sadd.f32 %s2877, %s1462
      %s2879 = scalar_lea.smem [#allocation2], 0
      %2880 = sst [smem:[%s2879]] %s2878
      %s2881 = sld [smem:[#allocation2 + $0x1]]
      %s2882 = sadd.f32 %s2881, %s2204
      %s2883 = scalar_lea.smem [#allocation2], 1
      %2884 = sst [smem:[%s2883]] %s2882
      %s2885 = sld [smem:[#allocation2 + $0x2]]
      %s2886 = sadd.f32 %s2885, %s2532
      %s2887 = scalar_lea.smem [#allocation2], 2
      %2888 = sst [smem:[%s2887]] %s2886
      %s2889 = sld [smem:[#allocation2 + $0x3]]
      %s2890 = sadd.f32 %s2889, %s2876
      %s2891 = scalar_lea.smem [#allocation2], 3
      %2892 = sst [smem:[%s2891]] %s2890
      %p2893 = scmp.eq.s32.totalorder %s18, 1
      // Predicated region
      $region41: #{aae_step.1} parent=35 // pred_check
        %p2894 = pneg %p2893
      $region42: #{aae_step.1} parent=35 // pred_check_branch
        %2896 = sbr.rel (%p2894) target = $region44
      $region43: #{aae_step.1} parent=35 // pred_region
        %s2897 = sld [smem:[#allocation2]]
        %s2898 = smul.f32 %s2897, 0.00012207031
        %s2899 = sld [smem:[#allocation2 + $0x1]]
        %s2900 = smul.f32 %s2899, 0.00390625
        %s2901 = sld [smem:[#allocation2 + $0x2]]
        %s2902 = smul.f32 %s2901, 0.00390625
        %s2903 = sld [smem:[#allocation2 + $0x3]]
        %s2904 = smul.f32 %s2903, 0.00390625
        %s2905 = smul.f32 %s2898, 0.99
        %s2906 = smul.f32 %s2904, 0.01
        %s2907 = sadd.f32 %s2905, %s2906
        %s2908 = sadd.f32 %s2900, %s2902
        %s2909 = smul.f32 %s2908, 0.5
        %v2910 = vlaneseq
        %v2911 = vand.u32 %v2910, 127
        %vm2912 = vcmp.eq.s32.totalorder %v2911, 0
        %vm2913 = vcmp.eq.s32.totalorder %v2911, 1
        %v2914 = vstv %s2909
        %v2915 = vsel %vm2913, %v2914, 0.0
        %v2916 = vstv %s2907
        %v2917 = vsel %vm2912, %v2916, %v2915
        %2918 = vst [vmem:[%s6] sm:$0x1] %v2917
      $region44: #{aae_step.1} parent=35 // pred_fallthru
        _
      %s2919 = smul.u32 16, %s18
      %p2920 = scmp.lt.s32.totalorder %s2919, 31
      %s2921 = scalar_select %p2920, %s2919, 31
      %s2922 = smul.addr %s2921, 8
      %s2923 = scalar_lea.vmem %s4, %s2922
      %s2924 = smul.u32 16, %s18
      %p2925 = scmp.lt.s32.totalorder %s2924, 31
      %s2926 = scalar_select %p2925, %s2924, 31
      %s2927 = smul.addr %s2926, 8
      %s2928 = scalar_lea.vmem %s5, %s2927
      // Predicated region
      $region45: #{aae_step.1} parent=35 // pred_check
        %p2929 = pneg %p130
      $region46: #{aae_step.1} parent=35 // pred_check_branch
        %2931 = sbr.rel (%p2929) target = $region48
      $region47: #{aae_step.1} parent=35 // pred_region
        %s2932 = smul.u32 16, %s18
      $region48: #{aae_step.1} parent=35 // pred_fallthru
        _
      // Predicated region
      $region49: #{aae_step.1} parent=35 // pred_check
        %p2933 = pneg %p156
      $region50: #{aae_step.1} parent=35 // pred_check_branch
        %2935 = sbr.rel (%p2933) target = $region52
      $region51: #{aae_step.1} parent=35 // pred_region
        %s2936 = smul.u32 16, %s18
      $region52: #{aae_step.1} parent=35 // pred_fallthru
        _
      // Predicated region
      $region53: #{aae_step.1} parent=35 // pred_check
        %p2937 = pneg %p177
      $region54: #{aae_step.1} parent=35 // pred_check_branch
        %2939 = sbr.rel (%p2937) target = $region56
      $region55: #{aae_step.1} parent=35 // pred_region
        _
      $region56: #{aae_step.1} parent=35 // pred_fallthru
        _
      // Predicated region
      $region57: #{aae_step.1} parent=35 // pred_check
        %p2940 = pneg %p177
      $region58: #{aae_step.1} parent=35 // pred_check_branch
        %2942 = sbr.rel (%p2940) target = $region60
      $region59: #{aae_step.1} parent=35 // pred_region
        _
      $region60: #{aae_step.1} parent=35 // pred_fallthru
        _
    $region36: #{aae_step.1} parent=5 // pred_fallthru
      _
    %p2943 = scmp.le.s32.totalorder 2, %s13
    // Predicated region
    $region61: #{aae_step.1} parent=5 // pred_check
      %p2944 = pneg %p2943
    $region62: #{aae_step.1} parent=5 // pred_check_branch
      %2946 = sbr.rel (%p2944) target = $region64
    $region63: #{aae_step.1} parent=5 // pred_region
      %s2947 = ssub.s32 %s13, 2
      // Predicated region
      $region65: #{aae_step.1} parent=63 // pred_check
        %p2948 = pneg %p136
      $region66: #{aae_step.1} parent=63 // pred_check_branch
        %2950 = sbr.rel (%p2948) target = $region68
      $region67: #{aae_step.1} parent=63 // pred_region
        %s2951 = smul.u32 16, %s19
        %p2952 = scmp.lt.s32.totalorder %s2951, 31
        %s2953 = scalar_select %p2952, %s2951, 31
        %s2954 = smul.addr %s2953, 8
        %s2955 = scalar_lea.vmem %s4, %s2954
      $region68: #{aae_step.1} parent=63 // pred_fallthru
        _
      // Predicated region
      $region69: #{aae_step.1} parent=63 // pred_check
        %p2956 = pneg %p162
      $region70: #{aae_step.1} parent=63 // pred_check_branch
        %2958 = sbr.rel (%p2956) target = $region72
      $region71: #{aae_step.1} parent=63 // pred_region
        %s2959 = smul.u32 16, %s19
        %p2960 = scmp.lt.s32.totalorder %s2959, 31
        %s2961 = scalar_select %p2960, %s2959, 31
        %s2962 = smul.addr %s2961, 8
        %s2963 = scalar_lea.vmem %s5, %s2962
      $region72: #{aae_step.1} parent=63 // pred_fallthru
        _
    $region64: #{aae_step.1} parent=5 // pred_fallthru
      _
  $region6: #{aae_step.1} parent=0 // loop_footer
    %s17 = sadd.s32 1, %s13
  $region7: #{aae_step.1} parent=0 // loop_footer_branch
    %12 = sbr.rel target = $region3
  $region8: #{aae_step.1} parent=0 // loop_exit
    _

</llo_original>
